<compile_context>
chip_gen: v7x
topology: tpu7x:2x2x1
jax: 0.10.0
libtpu: 0.0.40
codegen_flags: <defaults>
</compile_context>

<pallas_src>
import functools

import jax
import jax.numpy as jnp
from jax import lax
from jax.experimental import pallas as pl
from jax.experimental.pallas import tpu as pltpu


# --------------------------------------------------------------------------- #
# Kernel
# --------------------------------------------------------------------------- #
def _ibasic_kernel(x_ref, xt_ref, xb_ref, w0_ref, b0_ref, w1_ref, b1_ref,
                   alpha_ref, w2_ref, b2_ref, out_ref, *, w_valid, pack_k):
    """Fused (bn0|conv1x1|bn1) -> (conv3x3|bn2) -> PReLU -> (conv1x1|bn3) -> +x
    on one (batch, row-tile) block.  W may be padded; w_valid is the real width."""
    i = pl.program_id(1)
    last = pl.num_programs(1) - 1
    _, TH, W, Cin = x_ref.shape            # W = padded width (multiple of 8)
    mid = w0_ref.shape[1]
    Cout = w2_ref.shape[-1]

    # (TH+2)-row window: one halo row above/below (border rows are clamped by the
    # index_map and re-zeroed below so they act as SAME zero padding for conv1).
    x_win = jnp.concatenate([xt_ref[0], x_ref[0], xb_ref[0]], axis=0)

    # conv0 (1x1, bn0/bn1 folded) over the whole window: single MXU matmul.
    z = jnp.dot(x_win.reshape((TH + 2) * W, Cin).astype(jnp.bfloat16), w0_ref[...],
                preferred_element_type=jnp.float32)
    y = (z + b0_ref[...]).reshape(TH + 2, W, mid)

    # Zero rows outside the image and any padded columns (they must contribute
    # SAME zero padding to the 3x3 conv).  Small iota masks, one vmul over y.
    row = lax.broadcasted_iota(jnp.int32, (TH + 2, 1, 1), 0)
    col = lax.broadcasted_iota(jnp.int32, (1, W, 1), 1)
    keep = ((i > 0) | (row != 0)) & ((i < last) | (row != TH + 1)) & (col < w_valid)
    y = y * keep.astype(jnp.float32)

    # Column taps (dw = 0/1/2) via XLU rolls + tiny border masks.
    y_l = pltpu.roll(y, shift=1, axis=1) * (col != 0).astype(jnp.float32)
    y_r = pltpu.roll(y, shift=W - 1, axis=1) * (col != w_valid - 1).astype(jnp.float32)

    # conv1 (3x3, bn2 scale folded), f32 accumulation on the MXU.
    if pack_k:
        # dw taps packed along K: 3 matmuls with K = 3*mid (better MXU fill,
        # only 2 VPU accumulates).  w1_ref is (3, 3*mid, mid).
        t3 = jnp.concatenate([y_l.astype(jnp.bfloat16),
                              y.astype(jnp.bfloat16),
                              y_r.astype(jnp.bfloat16)], axis=-1)   # (TH+2, W, 3*mid)
        K3 = 3 * mid
        acc = jnp.dot(t3[0:TH].reshape(TH * W, K3), w1_ref[0],
                      preferred_element_type=jnp.float32)
        acc = acc + jnp.dot(t3[1:TH + 1].reshape(TH * W, K3), w1_ref[1],
                            preferred_element_type=jnp.float32)
        acc = acc + jnp.dot(t3[2:TH + 2].reshape(TH * W, K3), w1_ref[2],
                            preferred_element_type=jnp.float32)
    else:
        # Fallback: 9 shifted K=mid matmuls.  w1_ref is (3, 3, mid, mid).
        taps = (y_l.astype(jnp.bfloat16), y.astype(jnp.bfloat16),
                y_r.astype(jnp.bfloat16))
        acc = jnp.zeros((TH * W, mid), jnp.float32)
        for dh in range(3):
            for dw in range(3):
                t = taps[dw][dh:dh + TH].reshape(TH * W, mid)
                acc = acc + jnp.dot(t, w1_ref[dh, dw],
                                    preferred_element_type=jnp.float32)

    h = acc + b1_ref[...]                            # bn2 shift (scale folded into w1)
    h = jnp.where(h > 0, h, alpha_ref[...] * h)      # PReLU (per-channel alpha)
    h = jnp.dot(h.astype(jnp.bfloat16), w2_ref[...],
                preferred_element_type=jnp.float32)  # conv2 (bn3 scale folded)
    h = h + b2_ref[...]                              # bn3 shift
    out = h.reshape(TH, W, Cout) + x_ref[0].astype(jnp.float32)   # residual in f32
    out_ref[0] = out.astype(out_ref.dtype)


# --------------------------------------------------------------------------- #
# Wrapper helpers
# --------------------------------------------------------------------------- #
def _fold_bn(gamma, beta, mean, var, eps):
    scale = gamma / jnp.sqrt(var + eps)
    return scale, beta - mean * scale


def _vmem_budget_bytes():
    """Physical VMEM minus headroom (v7x has 64 MiB/TC vs 128 MiB on v5e/v6e)."""
    try:
        info = pltpu.get_tpu_info()
        cap = int(getattr(info, "vmem_capacity_bytes", 0)) or (64 * 2 ** 20)
    except Exception:
        cap = 64 * 2 ** 20
    return max(16 * 2 ** 20, cap - 16 * 2 ** 20)


def _pick_row_tile(H, W, Cin, Cout, mid, n_batch, budget):
    """Largest divisor of H whose estimated working set stays in ~1/3 of VMEM."""
    per_row = W * (8 * Cin + 10 * Cout + 26 * mid) + 64
    cap = max(1, (budget // 3) // per_row)
    if n_batch < 2:                     # keep >=2 grid steps for v7x's two TCs
        cap = min(cap, max(1, H // 2))
    th = 1
    for d in range(1, H + 1):
        if H % d == 0 and d <= cap:
            th = d
    return th


# --------------------------------------------------------------------------- #
# Public entry points
# --------------------------------------------------------------------------- #
@functools.partial(jax.jit, static_argnames=("row_tile", "pack_k"))
def ibasic_block_first(x_nhwc, params, row_tile=None, pack_k=True):
    """Fused IBasicBlock_first forward, NHWC in / NHWC out (dtype preserved).

    The block is HBM-bandwidth bound, so the kernel keeps its HBM-facing I/O in
    the caller's layout/dtype (NHWC, bf16 recommended); all matmuls accumulate
    in f32 on the MXU and the residual add is done in f32.
    """
    eps = 2e-5
    N, H, W, Cin = x_nhwc.shape

    sc0, sh0 = _fold_bn(params["bn0_g"], params["bn0_b"], params["bn0_m"], params["bn0_v"], eps)
    sc1, sh1 = _fold_bn(params["bn1_g"], params["bn1_b"], params["bn1_m"], params["bn1_v"], eps)
    sc2, sh2 = _fold_bn(params["bn2_g"], params["bn2_b"], params["bn2_m"], params["bn2_v"], eps)
    sc3, sh3 = _fold_bn(params["bn3_g"], params["bn3_b"], params["bn3_m"], params["bn3_v"], eps)

    # Conv weights (PyTorch OIHW) -> channels-last matmul layouts, BN folded in.
    w0 = params["conv0_w"][:, :, 0, 0].T                           # (Cin, mid)
    w1 = jnp.transpose(params["conv1_w"], (2, 3, 1, 0))            # (3, 3, mid, mid) HWIO
    w2 = params["conv2_w"][:, :, 0, 0].T                           # (mid, Cout)
    mid = w0.shape[1]
    Cout = w2.shape[1]
    assert Cin == Cout, "downsample=None requires inplanes == planes (stride=1)"

    w0f = (sc0[:, None] * w0 * sc1[None, :]).astype(jnp.bfloat16)          # bn0|conv0|bn1
    b0f = ((sh0 @ w0) * sc1 + sh1).reshape(1, mid).astype(jnp.float32)
    w1f = w1 * sc2[None, None, None, :]                                    # conv1|bn2 scale
    w1a = (w1f.reshape(3, 3 * mid, mid) if pack_k else w1f).astype(jnp.bfloat16)
    b1f = sh2.reshape(1, mid).astype(jnp.float32)                          # bn2 shift
    w2f = (w2 * sc3[None, :]).astype(jnp.bfloat16)                         # conv2|bn3 scale
    b2f = sh3.reshape(1, Cout).astype(jnp.float32)                         # bn3 shift
    alpha = params["prelu_a"].reshape(1, mid).astype(jnp.float32)

    # Pad W to a multiple of 8 (only if needed) so in-kernel reshapes are no-ops;
    # the kernel masks the padded columns so they behave like SAME zero padding.
    Wp = ((W + 7) // 8) * 8
    x = x_nhwc if Wp == W else jnp.pad(x_nhwc, ((0, 0), (0, 0), (0, Wp - W), (0, 0)))

    budget = _vmem_budget_bytes()
    TH = _pick_row_tile(H, Wp, Cin, Cout, mid, N, budget) if row_tile is None else int(row_tile)
    assert H % TH == 0, "row_tile must divide H"
    grid = (N, H // TH)

    def _const_spec(arr):
        nd = arr.ndim
        return pl.BlockSpec(arr.shape, lambda n, i, _nd=nd: (0,) * _nd)

    in_specs = [
        pl.BlockSpec((1, TH, Wp, Cin), lambda n, i: (n, i, 0, 0)),
        # 1-row halos (block size 1 along H -> block index == row index),
        # clamped at the image border and zero-masked inside the kernel.
        pl.BlockSpec((1, 1, Wp, Cin),
                     lambda n, i: (n, jnp.maximum(i * TH - 1, 0), 0, 0)),
        pl.BlockSpec((1, 1, Wp, Cin),
                     lambda n, i: (n, jnp.minimum((i + 1) * TH, H - 1), 0, 0)),
        _const_spec(w0f), _const_spec(b0f),
        _const_spec(w1a), _const_spec(b1f),
        _const_spec(alpha),
        _const_spec(w2f), _const_spec(b2f),
    ]
    out_specs = pl.BlockSpec((1, TH, Wp, Cout), lambda n, i: (n, i, 0, 0))

    # VMEM estimate: double-buffered I/O tiles + f32/bf16 working set + weights,
    # clamped to the physical budget (keeps v7x's 64 MiB safe).
    xbytes = jnp.dtype(x.dtype).itemsize
    tile_bytes = 2 * (TH * Wp * (Cin + Cout) + 2 * Wp * Cin) * xbytes
    work_bytes = (TH + 2) * Wp * mid * 18 + TH * Wp * (mid + Cout) * 8
    wgt_bytes = 2 * ((Cin * mid + 9 * mid * mid + mid * Cout) * 2 + (4 * mid + Cout) * 4)
    vmem_limit = int(min(budget, max(32 * 2 ** 20,
                                     tile_bytes + work_bytes + wgt_bytes + (4 << 20))))

    kernel = functools.partial(_ibasic_kernel, w_valid=W, pack_k=pack_k)
    out = pl.pallas_call(
        kernel,
        out_shape=jax.ShapeDtypeStruct((N, H, Wp, Cout), x.dtype),
        grid=grid,
        in_specs=in_specs,
        out_specs=out_specs,
        compiler_params=pltpu.CompilerParams(
            dimension_semantics=("parallel", "parallel"),
            vmem_limit_bytes=vmem_limit),
    )(x, x, x, w0f, b0f, w1a, b1f, alpha, w2f, b2f)

    return out if Wp == W else out[:, :, :W, :]


def ibasic_block_first_nchw(x_nchw, params, **kw):
    """PyTorch-layout (NCHW) convenience wrapper."""
    # TODO(synk): full-network integration should stay NHWC end-to-end so these
    # two extra HBM transpose passes (which dominate this memory-bound block)
    # disappear; the primary entry point above is already transpose-free.
    y = ibasic_block_first(jnp.transpose(x_nchw, (0, 2, 3, 1)), params, **kw)
    return jnp.transpose(y, (0, 3, 1, 2))


# --------------------------------------------------------------------------- #
# Reference + test harness
# --------------------------------------------------------------------------- #
def _reference_nhwc(x, params):
    """Pure-JAX f32 NHWC reference (same inference-mode BN semantics)."""
    eps = 2e-5
    sc0, sh0 = _fold_bn(params["bn0_g"], params["bn0_b"], params["bn0_m"], params["bn0_v"], eps)
    sc1, sh1 = _fold_bn(params["bn1_g"], params["bn1_b"], params["bn1_m"], params["bn1_v"], eps)
    sc2, sh2 = _fold_bn(params["bn2_g"], params["bn2_b"], params["bn2_m"], params["bn2_v"], eps)
    sc3, sh3 = _fold_bn(params["bn3_g"], params["bn3_b"], params["bn3_m"], params["bn3_v"], eps)
    dn = ("NHWC", "HWIO", "NHWC")
    w0 = jnp.transpose(params["conv0_w"], (2, 3, 1, 0))
    w1 = jnp.transpose(params["conv1_w"], (2, 3, 1, 0))
    w2 = jnp.transpose(params["conv2_w"], (2, 3, 1, 0))
    y = x * sc0 + sh0
    y = lax.conv_general_dilated(y, w0, (1, 1), "VALID", dimension_numbers=dn)
    y = y * sc1 + sh1
    y = lax.conv_general_dilated(y, w1, (1, 1), "SAME", dimension_numbers=dn)
    y = y * sc2 + sh2
    y = jnp.where(y > 0, y, params["prelu_a"] * y)
    y = lax.conv_general_dilated(y, w2, (1, 1), "VALID", dimension_numbers=dn)
    y = y * sc3 + sh3
    return y + x


def _make_params(key, inplanes, planes):
    mid = int(planes * 0.25)
    ks = jax.random.split(key, 12)
    u = lambda k, shape, lo=-0.5, hi=0.5: jax.random.uniform(k, shape, jnp.float32, lo, hi)
    return {
        "bn0_g": u(ks[0], (inplanes,), 0.5, 1.5), "bn0_b": u(ks[1], (inplanes,)),
        "bn0_m": u(ks[2], (inplanes,)), "bn0_v": u(ks[3], (inplanes,), 0.5, 1.5),
        "bn1_g": jnp.ones((mid,)), "bn1_b": jnp.zeros((mid,)),
        "bn1_m": u(ks[4], (mid,)), "bn1_v": u(ks[5], (mid,), 0.5, 1.5),
        "bn2_g": u(ks[6], (mid,), 0.5, 1.5), "bn2_b": jnp.zeros((mid,)),
        "bn2_m": jnp.zeros((mid,)), "bn2_v": jnp.ones((mid,)),
        "bn3_g": u(ks[7], (planes,), 0.5, 1.5), "bn3_b": u(ks[8], (planes,)),
        "bn3_m": jnp.zeros((planes,)), "bn3_v": jnp.ones((planes,)),
        "conv0_w": u(ks[9], (mid, inplanes, 1, 1)),
        "conv1_w": u(ks[10], (mid, mid, 3, 3)),
        "conv2_w": u(ks[11], (planes, mid, 1, 1)),
        "prelu_a": jnp.full((mid,), 0.25, jnp.float32),
    }


def _run_block(x, params, **kw):
    """Run the fused block; fall back to the unpacked conv1 path on Mosaic
    versions that cannot lower the lane-dim K-packing concatenate."""
    try:
        return jax.block_until_ready(ibasic_block_first(x, params, **kw))
    except Exception:
        return jax.block_until_ready(ibasic_block_first(x, params, pack_k=False, **kw))


if __name__ == "__main__":
    # Small shapes consistent with the module: stride=1, downsample=None =>
    # inplanes == planes; mid = planes * 0.25.
    N, C, H, W = 2, 16, 16, 16
    key = jax.random.PRNGKey(0)
    kx, kp = jax.random.split(key)
    x_nchw = jax.random.normal(kx, (N, C, H, W), jnp.float32)      # PyTorch layout
    params = _make_params(kp, inplanes=C, planes=C)

    # The kernel runs natively in NHWC/bf16 (its HBM-facing I/O); this one-time
    # layout change stands in for an NHWC-end-to-end pipeline (no per-call
    # transpose or cast passes around the kernel itself).
    x_nhwc = jnp.transpose(x_nchw, (0, 2, 3, 1)).astype(jnp.bfloat16)

    out_halo = _run_block(x_nhwc, params, row_tile=8)   # 2 row tiles: exercises the halo path
    out_auto = _run_block(x_nhwc, params)               # auto tile (whole H per step here)

    ref = _reference_nhwc(x_nhwc.astype(jnp.float32), params)
    for out in (out_halo, out_auto):
        assert out.shape == ref.shape
        err = float(jnp.max(jnp.abs(out.astype(jnp.float32) - ref)))
        # bf16 operands / bf16 output with f32 accumulation -> bf16-appropriate tolerances.
        # TODO(synk): re-validate tolerances at production channel counts (Cin up to 512).
        assert jnp.allclose(out.astype(jnp.float32), ref, atol=0.2, rtol=0.05), err
    print("KERNEL_OK")
</pallas_src>

<mosaic_0001>
module attributes {stable_mosaic.version = 11 : i64} {
  func.func @_ibasic_kernel(%arg0: i32, %arg1: i32, %arg2: memref<1x8x16x16xbf16, #tpu.memory_space<vmem>>, %arg3: memref<1x1x16x16xbf16, #tpu.memory_space<vmem>>, %arg4: memref<1x1x16x16xbf16, #tpu.memory_space<vmem>>, %arg5: memref<16x4xbf16, #tpu.memory_space<vmem>>, %arg6: memref<1x4xf32, #tpu.memory_space<vmem>>, %arg7: memref<3x12x4xbf16, #tpu.memory_space<vmem>>, %arg8: memref<1x4xf32, #tpu.memory_space<vmem>>, %arg9: memref<1x4xf32, #tpu.memory_space<vmem>>, %arg10: memref<4x16xbf16, #tpu.memory_space<vmem>>, %arg11: memref<1x16xf32, #tpu.memory_space<vmem>>, %arg12: memref<1x8x16x16xbf16, #tpu.memory_space<vmem>>) attributes {dimension_semantics = [#tpu.dimension_semantics<parallel>, #tpu.dimension_semantics<parallel>], iteration_bounds = array<i64: 2, 2>, scalar_prefetch = 0 : i64, scratch_operands = 0 : i64, tpu.core_type = #tpu.core_type<tc>, window_params = [{transform_indices = @transform_0, window_bounds = array<i64: 1, 8, 16, 16>}, {transform_indices = @transform_1, window_bounds = array<i64: 1, 1, 16, 16>}, {transform_indices = @transform_2, window_bounds = array<i64: 1, 1, 16, 16>}, {pipeline_mode = #tpu.pipeline_mode<synchronous>, transform_indices = @transform_3, window_bounds = array<i64: 16, 4>}, {pipeline_mode = #tpu.pipeline_mode<synchronous>, transform_indices = @transform_4, window_bounds = array<i64: 1, 4>}, {pipeline_mode = #tpu.pipeline_mode<synchronous>, transform_indices = @transform_5, window_bounds = array<i64: 3, 12, 4>}, {pipeline_mode = #tpu.pipeline_mode<synchronous>, transform_indices = @transform_6, window_bounds = array<i64: 1, 4>}, {pipeline_mode = #tpu.pipeline_mode<synchronous>, transform_indices = @transform_7, window_bounds = array<i64: 1, 4>}, {pipeline_mode = #tpu.pipeline_mode<synchronous>, transform_indices = @transform_8, window_bounds = array<i64: 4, 16>}, {pipeline_mode = #tpu.pipeline_mode<synchronous>, transform_indices = @transform_9, window_bounds = array<i64: 1, 16>}, {transform_indices = @transform_10, window_bounds = array<i64: 1, 8, 16, 16>}]} {
    %c0 = arith.constant 0 : index
    %c0_0 = arith.constant 0 : index
    %c0_1 = arith.constant 0 : index
    %c0_2 = arith.constant 0 : index
    %0 = vector.load %arg3[%c0, %c0_0, %c0_1, %c0_2] : memref<1x1x16x16xbf16, #tpu.memory_space<vmem>>, vector<1x1x16x16xbf16>
    %1 = vector.shape_cast %0 : vector<1x1x16x16xbf16> to vector<1x16x16xbf16>
    %c0_3 = arith.constant 0 : index
    %c0_4 = arith.constant 0 : index
    %c0_5 = arith.constant 0 : index
    %c0_6 = arith.constant 0 : index
    %2 = vector.load %arg2[%c0_3, %c0_4, %c0_5, %c0_6] : memref<1x8x16x16xbf16, #tpu.memory_space<vmem>>, vector<1x8x16x16xbf16>
    %3 = vector.shape_cast %2 : vector<1x8x16x16xbf16> to vector<8x16x16xbf16>
    %c0_7 = arith.constant 0 : index
    %c0_8 = arith.constant 0 : index
    %c0_9 = arith.constant 0 : index
    %c0_10 = arith.constant 0 : index
    %4 = vector.load %arg4[%c0_7, %c0_8, %c0_9, %c0_10] : memref<1x1x16x16xbf16, #tpu.memory_space<vmem>>, vector<1x1x16x16xbf16>
    %5 = vector.shape_cast %4 : vector<1x1x16x16xbf16> to vector<1x16x16xbf16>
    %6 = tpu.concatenate %1, %3, %5 in 0 : vector<1x16x16xbf16>, vector<8x16x16xbf16>, vector<1x16x16xbf16> -> vector<10x16x16xbf16>
    %7 = vector.shape_cast %6 : vector<10x16x16xbf16> to vector<160x16xbf16>
    %c0_11 = arith.constant 0 : index
    %c0_12 = arith.constant 0 : index
    %8 = vector.load %arg5[%c0_11, %c0_12] : memref<16x4xbf16, #tpu.memory_space<vmem>>, vector<16x4xbf16>
    %cst = arith.constant dense<0.000000e+00> : vector<160x4xf32>
    %9 = tpu.matmul %7, %8, %cst {dimension_numbers = #tpu.dot_dimension_numbers<[1], [0], [0], [1], [0, 0, 1, 1], [], []>} : vector<160x16xbf16>, vector<16x4xbf16>, vector<160x4xf32> -> vector<160x4xf32>
    %c0_13 = arith.constant 0 : index
    %c0_14 = arith.constant 0 : index
    %10 = vector.load %arg6[%c0_13, %c0_14] : memref<1x4xf32, #tpu.memory_space<vmem>>, vector<1x4xf32>
    %11 = vector.broadcast %10 : vector<1x4xf32> to vector<160x4xf32>
    %12 = arith.addf %9, %11 : vector<160x4xf32>
    %13 = vector.shape_cast %12 : vector<160x4xf32> to vector<10x16x4xf32>
    %14 = tpu.iota {dimensions = array<i32: 0>} : vector<10x1x1xi32>
    %15 = tpu.iota {dimensions = array<i32: 1>} : vector<1x16x1xi32>
    %c0_i32 = arith.constant 0 : i32
    %16 = arith.cmpi sgt, %arg1, %c0_i32 : i32
    %c0_i32_15 = arith.constant 0 : i32
    %17 = vector.broadcast %c0_i32_15 : i32 to vector<10x1x1xi32>
    %18 = arith.cmpi ne, %14, %17 : vector<10x1x1xi32>
    %19 = vector.broadcast %16 : i1 to vector<10x1x1xi1>
    %20 = arith.ori %19, %18 : vector<10x1x1xi1>
    %c1_i32 = arith.constant 1 : i32
    %21 = arith.cmpi slt, %arg1, %c1_i32 : i32
    %c9_i32 = arith.constant 9 : i32
    %22 = vector.broadcast %c9_i32 : i32 to vector<10x1x1xi32>
    %23 = arith.cmpi ne, %14, %22 : vector<10x1x1xi32>
    %24 = vector.broadcast %21 : i1 to vector<10x1x1xi1>
    %25 = arith.ori %24, %23 : vector<10x1x1xi1>
    %26 = arith.andi %20, %25 : vector<10x1x1xi1>
    %c16_i32 = arith.constant 16 : i32
    %27 = vector.broadcast %c16_i32 : i32 to vector<1x16x1xi32>
    %28 = arith.cmpi slt, %15, %27 : vector<1x16x1xi32>
    %29 = vector.broadcast %26 : vector<10x1x1xi1> to vector<10x16x1xi1>
    %30 = vector.broadcast %28 : vector<1x16x1xi1> to vector<10x16x1xi1>
    %31 = arith.andi %29, %30 : vector<10x16x1xi1>
    %32 = arith.extui %31 : vector<10x16x1xi1> to vector<10x16x1xi32>
    %33 = arith.sitofp %32 : vector<10x16x1xi32> to vector<10x16x1xf32>
    %34 = vector.broadcast %33 : vector<10x16x1xf32> to vector<10x16x4xf32>
    %35 = arith.mulf %13, %34 : vector<10x16x4xf32>
    %c1_i32_16 = arith.constant 1 : i32
    %36 = tpu.dynamic_rotate %35 by %c1_i32_16 dim 1 : vector<10x16x4xf32>, i32 -> vector<10x16x4xf32>
    %c0_i32_17 = arith.constant 0 : i32
    %37 = vector.broadcast %c0_i32_17 : i32 to vector<1x16x1xi32>
    %38 = arith.cmpi ne, %15, %37 : vector<1x16x1xi32>
    %39 = arith.extui %38 : vector<1x16x1xi1> to vector<1x16x1xi32>
    %40 = arith.sitofp %39 : vector<1x16x1xi32> to vector<1x16x1xf32>
    %41 = vector.broadcast %40 : vector<1x16x1xf32> to vector<10x16x4xf32>
    %42 = arith.mulf %36, %41 : vector<10x16x4xf32>
    %c15_i32 = arith.constant 15 : i32
    %43 = tpu.dynamic_rotate %35 by %c15_i32 dim 1 : vector<10x16x4xf32>, i32 -> vector<10x16x4xf32>
    %c15_i32_18 = arith.constant 15 : i32
    %44 = vector.broadcast %c15_i32_18 : i32 to vector<1x16x1xi32>
    %45 = arith.cmpi ne, %15, %44 : vector<1x16x1xi32>
    %46 = arith.extui %45 : vector<1x16x1xi1> to vector<1x16x1xi32>
    %47 = arith.sitofp %46 : vector<1x16x1xi32> to vector<1x16x1xf32>
    %48 = vector.broadcast %47 : vector<1x16x1xf32> to vector<10x16x4xf32>
    %49 = arith.mulf %43, %48 : vector<10x16x4xf32>
    %50 = arith.truncf %42 : vector<10x16x4xf32> to vector<10x16x4xbf16>
    %51 = arith.truncf %35 : vector<10x16x4xf32> to vector<10x16x4xbf16>
    %52 = arith.truncf %49 : vector<10x16x4xf32> to vector<10x16x4xbf16>
    %53 = tpu.concatenate %50, %51, %52 in 2 : vector<10x16x4xbf16>, vector<10x16x4xbf16>, vector<10x16x4xbf16> -> vector<10x16x12xbf16>
    %54 = vector.extract_strided_slice %53 {offsets = [0, 0, 0], sizes = [8, 16, 12], strides = [1, 1, 1]} : vector<10x16x12xbf16> to vector<8x16x12xbf16>
    %55 = vector.shape_cast %54 : vector<8x16x12xbf16> to vector<128x12xbf16>
    %c0_19 = arith.constant 0 : index
    %c0_20 = arith.constant 0 : index
    %c0_21 = arith.constant 0 : index
    %56 = vector.load %arg7[%c0_19, %c0_20, %c0_21] : memref<3x12x4xbf16, #tpu.memory_space<vmem>>, vector<1x12x4xbf16>
    %57 = vector.shape_cast %56 : vector<1x12x4xbf16> to vector<12x4xbf16>
    %cst_22 = arith.constant dense<0.000000e+00> : vector<128x4xf32>
    %58 = tpu.matmul %55, %57, %cst_22 {dimension_numbers = #tpu.dot_dimension_numbers<[1], [0], [0], [1], [0, 0, 1, 1], [], []>} : vector<128x12xbf16>, vector<12x4xbf16>, vector<128x4xf32> -> vector<128x4xf32>
    %59 = vector.extract_strided_slice %53 {offsets = [1, 0, 0], sizes = [8, 16, 12], strides = [1, 1, 1]} : vector<10x16x12xbf16> to vector<8x16x12xbf16>
    %60 = vector.shape_cast %59 : vector<8x16x12xbf16> to vector<128x12xbf16>
    %c1 = arith.constant 1 : index
    %c0_23 = arith.constant 0 : index
    %c0_24 = arith.constant 0 : index
    %61 = vector.load %arg7[%c1, %c0_23, %c0_24] : memref<3x12x4xbf16, #tpu.memory_space<vmem>>, vector<1x12x4xbf16>
    %62 = vector.shape_cast %61 : vector<1x12x4xbf16> to vector<12x4xbf16>
    %cst_25 = arith.constant dense<0.000000e+00> : vector<128x4xf32>
    %63 = tpu.matmul %60, %62, %cst_25 {dimension_numbers = #tpu.dot_dimension_numbers<[1], [0], [0], [1], [0, 0, 1, 1], [], []>} : vector<128x12xbf16>, vector<12x4xbf16>, vector<128x4xf32> -> vector<128x4xf32>
    %64 = arith.addf %58, %63 : vector<128x4xf32>
    %65 = vector.extract_strided_slice %53 {offsets = [2, 0, 0], sizes = [8, 16, 12], strides = [1, 1, 1]} : vector<10x16x12xbf16> to vector<8x16x12xbf16>
    %66 = vector.shape_cast %65 : vector<8x16x12xbf16> to vector<128x12xbf16>
    %c2 = arith.constant 2 : index
    %c0_26 = arith.constant 0 : index
    %c0_27 = arith.constant 0 : index
    %67 = vector.load %arg7[%c2, %c0_26, %c0_27] : memref<3x12x4xbf16, #tpu.memory_space<vmem>>, vector<1x12x4xbf16>
    %68 = vector.shape_cast %67 : vector<1x12x4xbf16> to vector<12x4xbf16>
    %cst_28 = arith.constant dense<0.000000e+00> : vector<128x4xf32>
    %69 = tpu.matmul %66, %68, %cst_28 {dimension_numbers = #tpu.dot_dimension_numbers<[1], [0], [0], [1], [0, 0, 1, 1], [], []>} : vector<128x12xbf16>, vector<12x4xbf16>, vector<128x4xf32> -> vector<128x4xf32>
    %70 = arith.addf %64, %69 : vector<128x4xf32>
    %c0_29 = arith.constant 0 : index
    %c0_30 = arith.constant 0 : index
    %71 = vector.load %arg8[%c0_29, %c0_30] : memref<1x4xf32, #tpu.memory_space<vmem>>, vector<1x4xf32>
    %72 = vector.broadcast %71 : vector<1x4xf32> to vector<128x4xf32>
    %73 = arith.addf %70, %72 : vector<128x4xf32>
    %cst_31 = arith.constant 0.000000e+00 : f32
    %74 = vector.broadcast %cst_31 : f32 to vector<128x4xf32>
    %75 = arith.cmpf ogt, %73, %74 : vector<128x4xf32>
    %c0_32 = arith.constant 0 : index
    %c0_33 = arith.constant 0 : index
    %76 = vector.load %arg9[%c0_32, %c0_33] : memref<1x4xf32, #tpu.memory_space<vmem>>, vector<1x4xf32>
    %77 = vector.broadcast %76 : vector<1x4xf32> to vector<128x4xf32>
    %78 = arith.mulf %77, %73 : vector<128x4xf32>
    %79 = arith.select %75, %73, %78 : vector<128x4xi1>, vector<128x4xf32>
    %80 = arith.truncf %79 : vector<128x4xf32> to vector<128x4xbf16>
    %c0_34 = arith.constant 0 : index
    %c0_35 = arith.constant 0 : index
    %81 = vector.load %arg10[%c0_34, %c0_35] : memref<4x16xbf16, #tpu.memory_space<vmem>>, vector<4x16xbf16>
    %cst_36 = arith.constant dense<0.000000e+00> : vector<128x16xf32>
    %82 = tpu.matmul %80, %81, %cst_36 {dimension_numbers = #tpu.dot_dimension_numbers<[1], [0], [0], [1], [0, 0, 1, 1], [], []>} : vector<128x4xbf16>, vector<4x16xbf16>, vector<128x16xf32> -> vector<128x16xf32>
    %c0_37 = arith.constant 0 : index
    %c0_38 = arith.constant 0 : index
    %83 = vector.load %arg11[%c0_37, %c0_38] : memref<1x16xf32, #tpu.memory_space<vmem>>, vector<1x16xf32>
    %84 = vector.broadcast %83 : vector<1x16xf32> to vector<128x16xf32>
    %85 = arith.addf %82, %84 : vector<128x16xf32>
    %86 = vector.shape_cast %85 : vector<128x16xf32> to vector<8x16x16xf32>
    %c0_39 = arith.constant 0 : index
    %c0_40 = arith.constant 0 : index
    %c0_41 = arith.constant 0 : index
    %c0_42 = arith.constant 0 : index
    %87 = vector.load %arg2[%c0_39, %c0_40, %c0_41, %c0_42] : memref<1x8x16x16xbf16, #tpu.memory_space<vmem>>, vector<1x8x16x16xbf16>
    %88 = vector.shape_cast %87 : vector<1x8x16x16xbf16> to vector<8x16x16xbf16>
    %89 = arith.extf %88 : vector<8x16x16xbf16> to vector<8x16x16xf32>
    %90 = arith.addf %86, %89 : vector<8x16x16xf32>
    %91 = arith.truncf %90 : vector<8x16x16xf32> to vector<8x16x16xbf16>
    %c0_43 = arith.constant 0 : index
    %c0_44 = arith.constant 0 : index
    %c0_45 = arith.constant 0 : index
    %c0_46 = arith.constant 0 : index
    %92 = vector.load %arg12[%c0_43, %c0_44, %c0_45, %c0_46] : memref<1x8x16x16xbf16, #tpu.memory_space<vmem>>, vector<1x8x16x16xbf16>
    %93 = vector.shape_cast %92 : vector<1x8x16x16xbf16> to vector<8x16x16xbf16>
    %94 = vector.shape_cast %91 : vector<8x16x16xbf16> to vector<1x8x16x16xbf16>
    tpu.vector_store %arg12[%c0_43, %c0_44, %c0_45, %c0_46], %94 {strides = array<i32>} : memref<1x8x16x16xbf16, #tpu.memory_space<vmem>>, vector<1x8x16x16xbf16>,
    return
  }
  func.func @transform_0(%arg0: i32, %arg1: i32) -> (i32, i32, i32, i32) {
    %c0_i32 = arith.constant 0 : i32
    %c0_i32_0 = arith.constant 0 : i32
    %c0_i32_1 = arith.constant 0 : i32
    return %arg0, %arg1, %c0_i32, %c0_i32_0 : i32, i32, i32, i32
  }
  func.func @transform_1(%arg0: i32, %arg1: i32) -> (i32, i32, i32, i32) {
    %c8_i32 = arith.constant 8 : i32
    %0 = arith.muli %arg1, %c8_i32 : i32
    %c1_i32 = arith.constant 1 : i32
    %1 = arith.subi %0, %c1_i32 : i32
    %c0_i32 = arith.constant 0 : i32
    %2 = arith.maxsi %1, %c0_i32 : i32
    %c0_i32_0 = arith.constant 0 : i32
    %c0_i32_1 = arith.constant 0 : i32
    %c0_i32_2 = arith.constant 0 : i32
    return %arg0, %2, %c0_i32_0, %c0_i32_1 : i32, i32, i32, i32
  }
  func.func @transform_2(%arg0: i32, %arg1: i32) -> (i32, i32, i32, i32) {
    %c1_i32 = arith.constant 1 : i32
    %0 = arith.addi %arg1, %c1_i32 : i32
    %c8_i32 = arith.constant 8 : i32
    %1 = arith.muli %0, %c8_i32 : i32
    %c15_i32 = arith.constant 15 : i32
    %2 = arith.minsi %1, %c15_i32 : i32
    %c0_i32 = arith.constant 0 : i32
    %c0_i32_0 = arith.constant 0 : i32
    %c0_i32_1 = arith.constant 0 : i32
    return %arg0, %2, %c0_i32, %c0_i32_0 : i32, i32, i32, i32
  }
  func.func @transform_3(%arg0: i32, %arg1: i32) -> (i32, i32) {
    %c0_i32 = arith.constant 0 : i32
    %c0_i32_0 = arith.constant 0 : i32
    %c0_i32_1 = arith.constant 0 : i32
    return %c0_i32, %c0_i32_0 : i32, i32
  }
  func.func @transform_4(%arg0: i32, %arg1: i32) -> (i32, i32) {
    %c0_i32 = arith.constant 0 : i32
    %c0_i32_0 = arith.constant 0 : i32
    %c0_i32_1 = arith.constant 0 : i32
    return %c0_i32, %c0_i32_0 : i32, i32
  }
  func.func @transform_5(%arg0: i32, %arg1: i32) -> (i32, i32, i32) {
    %c0_i32 = arith.constant 0 : i32
    %c0_i32_0 = arith.constant 0 : i32
    %c0_i32_1 = arith.constant 0 : i32
    %c0_i32_2 = arith.constant 0 : i32
    return %c0_i32, %c0_i32_0, %c0_i32_1 : i32, i32, i32
  }
  func.func @transform_6(%arg0: i32, %arg1: i32) -> (i32, i32) {
    %c0_i32 = arith.constant 0 : i32
    %c0_i32_0 = arith.constant 0 : i32
    %c0_i32_1 = arith.constant 0 : i32
    return %c0_i32, %c0_i32_0 : i32, i32
  }
  func.func @transform_7(%arg0: i32, %arg1: i32) -> (i32, i32) {
    %c0_i32 = arith.constant 0 : i32
    %c0_i32_0 = arith.constant 0 : i32
    %c0_i32_1 = arith.constant 0 : i32
    return %c0_i32, %c0_i32_0 : i32, i32
  }
  func.func @transform_8(%arg0: i32, %arg1: i32) -> (i32, i32) {
    %c0_i32 = arith.constant 0 : i32
    %c0_i32_0 = arith.constant 0 : i32
    %c0_i32_1 = arith.constant 0 : i32
    return %c0_i32, %c0_i32_0 : i32, i32
  }
  func.func @transform_9(%arg0: i32, %arg1: i32) -> (i32, i32) {
    %c0_i32 = arith.constant 0 : i32
    %c0_i32_0 = arith.constant 0 : i32
    %c0_i32_1 = arith.constant 0 : i32
    return %c0_i32, %c0_i32_0 : i32, i32
  }
  func.func @transform_10(%arg0: i32, %arg1: i32) -> (i32, i32, i32, i32) {
    %c0_i32 = arith.constant 0 : i32
    %c0_i32_0 = arith.constant 0 : i32
    %c0_i32_1 = arith.constant 0 : i32
    return %arg0, %arg1, %c0_i32, %c0_i32_0 : i32, i32, i32, i32
  }
}

module attributes {stable_mosaic.version = 11 : i64} {
  func.func @_ibasic_kernel(%arg0: i32, %arg1: i32, %arg2: memref<1x8x16x16xbf16, #tpu.memory_space<vmem>>, %arg3: memref<1x1x16x16xbf16, #tpu.memory_space<vmem>>, %arg4: memref<1x1x16x16xbf16, #tpu.memory_space<vmem>>, %arg5: memref<16x4xbf16, #tpu.memory_space<vmem>>, %arg6: memref<1x4xf32, #tpu.memory_space<vmem>>, %arg7: memref<3x3x4x4xbf16, #tpu.memory_space<vmem>>, %arg8: memref<1x4xf32, #tpu.memory_space<vmem>>, %arg9: memref<1x4xf32, #tpu.memory_space<vmem>>, %arg10: memref<4x16xbf16, #tpu.memory_space<vmem>>, %arg11: memref<1x16xf32, #tpu.memory_space<vmem>>, %arg12: memref<1x8x16x16xbf16, #tpu.memory_space<vmem>>) attributes {dimension_semantics = [#tpu.dimension_semantics<parallel>, #tpu.dimension_semantics<parallel>], iteration_bounds = array<i64: 2, 2>, scalar_prefetch = 0 : i64, scratch_operands = 0 : i64, tpu.core_type = #tpu.core_type<tc>, window_params = [{transform_indices = @transform_0, window_bounds = array<i64: 1, 8, 16, 16>}, {transform_indices = @transform_1, window_bounds = array<i64: 1, 1, 16, 16>}, {transform_indices = @transform_2, window_bounds = array<i64: 1, 1, 16, 16>}, {pipeline_mode = #tpu.pipeline_mode<synchronous>, transform_indices = @transform_3, window_bounds = array<i64: 16, 4>}, {pipeline_mode = #tpu.pipeline_mode<synchronous>, transform_indices = @transform_4, window_bounds = array<i64: 1, 4>}, {pipeline_mode = #tpu.pipeline_mode<synchronous>, transform_indices = @transform_5, window_bounds = array<i64: 3, 3, 4, 4>}, {pipeline_mode = #tpu.pipeline_mode<synchronous>, transform_indices = @transform_6, window_bounds = array<i64: 1, 4>}, {pipeline_mode = #tpu.pipeline_mode<synchronous>, transform_indices = @transform_7, window_bounds = array<i64: 1, 4>}, {pipeline_mode = #tpu.pipeline_mode<synchronous>, transform_indices = @transform_8, window_bounds = array<i64: 4, 16>}, {pipeline_mode = #tpu.pipeline_mode<synchronous>, transform_indices = @transform_9, window_bounds = array<i64: 1, 16>}, {transform_indices = @transform_10, window_bounds = array<i64: 1, 8, 16, 16>}]} {
    %c0 = arith.constant 0 : index
    %c0_0 = arith.constant 0 : index
    %c0_1 = arith.constant 0 : index
    %c0_2 = arith.constant 0 : index
    %0 = vector.load %arg3[%c0, %c0_0, %c0_1, %c0_2] : memref<1x1x16x16xbf16, #tpu.memory_space<vmem>>, vector<1x1x16x16xbf16>
    %1 = vector.shape_cast %0 : vector<1x1x16x16xbf16> to vector<1x16x16xbf16>
    %c0_3 = arith.constant 0 : index
    %c0_4 = arith.constant 0 : index
    %c0_5 = arith.constant 0 : index
    %c0_6 = arith.constant 0 : index
    %2 = vector.load %arg2[%c0_3, %c0_4, %c0_5, %c0_6] : memref<1x8x16x16xbf16, #tpu.memory_space<vmem>>, vector<1x8x16x16xbf16>
    %3 = vector.shape_cast %2 : vector<1x8x16x16xbf16> to vector<8x16x16xbf16>
    %c0_7 = arith.constant 0 : index
    %c0_8 = arith.constant 0 : index
    %c0_9 = arith.constant 0 : index
    %c0_10 = arith.constant 0 : index
    %4 = vector.load %arg4[%c0_7, %c0_8, %c0_9, %c0_10] : memref<1x1x16x16xbf16, #tpu.memory_space<vmem>>, vector<1x1x16x16xbf16>
    %5 = vector.shape_cast %4 : vector<1x1x16x16xbf16> to vector<1x16x16xbf16>
    %6 = tpu.concatenate %1, %3, %5 in 0 : vector<1x16x16xbf16>, vector<8x16x16xbf16>, vector<1x16x16xbf16> -> vector<10x16x16xbf16>
    %7 = vector.shape_cast %6 : vector<10x16x16xbf16> to vector<160x16xbf16>
    %c0_11 = arith.constant 0 : index
    %c0_12 = arith.constant 0 : index
    %8 = vector.load %arg5[%c0_11, %c0_12] : memref<16x4xbf16, #tpu.memory_space<vmem>>, vector<16x4xbf16>
    %cst = arith.constant dense<0.000000e+00> : vector<160x4xf32>
    %9 = tpu.matmul %7, %8, %cst {dimension_numbers = #tpu.dot_dimension_numbers<[1], [0], [0], [1], [0, 0, 1, 1], [], []>} : vector<160x16xbf16>, vector<16x4xbf16>, vector<160x4xf32> -> vector<160x4xf32>
    %c0_13 = arith.constant 0 : index
    %c0_14 = arith.constant 0 : index
    %10 = vector.load %arg6[%c0_13, %c0_14] : memref<1x4xf32, #tpu.memory_space<vmem>>, vector<1x4xf32>
    %11 = vector.broadcast %10 : vector<1x4xf32> to vector<160x4xf32>
    %12 = arith.addf %9, %11 : vector<160x4xf32>
    %13 = vector.shape_cast %12 : vector<160x4xf32> to vector<10x16x4xf32>
    %14 = tpu.iota {dimensions = array<i32: 0>} : vector<10x1x1xi32>
    %15 = tpu.iota {dimensions = array<i32: 1>} : vector<1x16x1xi32>
    %c0_i32 = arith.constant 0 : i32
    %16 = arith.cmpi sgt, %arg1, %c0_i32 : i32
    %c0_i32_15 = arith.constant 0 : i32
    %17 = vector.broadcast %c0_i32_15 : i32 to vector<10x1x1xi32>
    %18 = arith.cmpi ne, %14, %17 : vector<10x1x1xi32>
    %19 = vector.broadcast %16 : i1 to vector<10x1x1xi1>
    %20 = arith.ori %19, %18 : vector<10x1x1xi1>
    %c1_i32 = arith.constant 1 : i32
    %21 = arith.cmpi slt, %arg1, %c1_i32 : i32
    %c9_i32 = arith.constant 9 : i32
    %22 = vector.broadcast %c9_i32 : i32 to vector<10x1x1xi32>
    %23 = arith.cmpi ne, %14, %22 : vector<10x1x1xi32>
    %24 = vector.broadcast %21 : i1 to vector<10x1x1xi1>
    %25 = arith.ori %24, %23 : vector<10x1x1xi1>
    %26 = arith.andi %20, %25 : vector<10x1x1xi1>
    %c16_i32 = arith.constant 16 : i32
    %27 = vector.broadcast %c16_i32 : i32 to vector<1x16x1xi32>
    %28 = arith.cmpi slt, %15, %27 : vector<1x16x1xi32>
    %29 = vector.broadcast %26 : vector<10x1x1xi1> to vector<10x16x1xi1>
    %30 = vector.broadcast %28 : vector<1x16x1xi1> to vector<10x16x1xi1>
    %31 = arith.andi %29, %30 : vector<10x16x1xi1>
    %32 = arith.extui %31 : vector<10x16x1xi1> to vector<10x16x1xi32>
    %33 = arith.sitofp %32 : vector<10x16x1xi32> to vector<10x16x1xf32>
    %34 = vector.broadcast %33 : vector<10x16x1xf32> to vector<10x16x4xf32>
    %35 = arith.mulf %13, %34 : vector<10x16x4xf32>
    %c1_i32_16 = arith.constant 1 : i32
    %36 = tpu.dynamic_rotate %35 by %c1_i32_16 dim 1 : vector<10x16x4xf32>, i32 -> vector<10x16x4xf32>
    %c0_i32_17 = arith.constant 0 : i32
    %37 = vector.broadcast %c0_i32_17 : i32 to vector<1x16x1xi32>
    %38 = arith.cmpi ne, %15, %37 : vector<1x16x1xi32>
    %39 = arith.extui %38 : vector<1x16x1xi1> to vector<1x16x1xi32>
    %40 = arith.sitofp %39 : vector<1x16x1xi32> to vector<1x16x1xf32>
    %41 = vector.broadcast %40 : vector<1x16x1xf32> to vector<10x16x4xf32>
    %42 = arith.mulf %36, %41 : vector<10x16x4xf32>
    %c15_i32 = arith.constant 15 : i32
    %43 = tpu.dynamic_rotate %35 by %c15_i32 dim 1 : vector<10x16x4xf32>, i32 -> vector<10x16x4xf32>
    %c15_i32_18 = arith.constant 15 : i32
    %44 = vector.broadcast %c15_i32_18 : i32 to vector<1x16x1xi32>
    %45 = arith.cmpi ne, %15, %44 : vector<1x16x1xi32>
    %46 = arith.extui %45 : vector<1x16x1xi1> to vector<1x16x1xi32>
    %47 = arith.sitofp %46 : vector<1x16x1xi32> to vector<1x16x1xf32>
    %48 = vector.broadcast %47 : vector<1x16x1xf32> to vector<10x16x4xf32>
    %49 = arith.mulf %43, %48 : vector<10x16x4xf32>
    %50 = arith.truncf %42 : vector<10x16x4xf32> to vector<10x16x4xbf16>
    %51 = arith.truncf %35 : vector<10x16x4xf32> to vector<10x16x4xbf16>
    %52 = arith.truncf %49 : vector<10x16x4xf32> to vector<10x16x4xbf16>
    %cst_19 = arith.constant 0.000000e+00 : f32
    %53 = vector.broadcast %cst_19 : f32 to vector<128x4xf32>
    %54 = vector.extract_strided_slice %50 {offsets = [0, 0, 0], sizes = [8, 16, 4], strides = [1, 1, 1]} : vector<10x16x4xbf16> to vector<8x16x4xbf16>
    %55 = vector.shape_cast %54 : vector<8x16x4xbf16> to vector<128x4xbf16>
    %c0_20 = arith.constant 0 : index
    %c0_21 = arith.constant 0 : index
    %c0_22 = arith.constant 0 : index
    %c0_23 = arith.constant 0 : index
    %56 = vector.load %arg7[%c0_20, %c0_21, %c0_22, %c0_23] : memref<3x3x4x4xbf16, #tpu.memory_space<vmem>>, vector<1x1x4x4xbf16>
    %57 = vector.shape_cast %56 : vector<1x1x4x4xbf16> to vector<4x4xbf16>
    %cst_24 = arith.constant dense<0.000000e+00> : vector<128x4xf32>
    %58 = tpu.matmul %55, %57, %cst_24 {dimension_numbers = #tpu.dot_dimension_numbers<[1], [0], [0], [1], [0, 0, 1, 1], [], []>} : vector<128x4xbf16>, vector<4x4xbf16>, vector<128x4xf32> -> vector<128x4xf32>
    %59 = arith.addf %53, %58 : vector<128x4xf32>
    %60 = vector.extract_strided_slice %51 {offsets = [0, 0, 0], sizes = [8, 16, 4], strides = [1, 1, 1]} : vector<10x16x4xbf16> to vector<8x16x4xbf16>
    %61 = vector.shape_cast %60 : vector<8x16x4xbf16> to vector<128x4xbf16>
    %c0_25 = arith.constant 0 : index
    %c1 = arith.constant 1 : index
    %c0_26 = arith.constant 0 : index
    %c0_27 = arith.constant 0 : index
    %62 = vector.load %arg7[%c0_25, %c1, %c0_26, %c0_27] : memref<3x3x4x4xbf16, #tpu.memory_space<vmem>>, vector<1x1x4x4xbf16>
    %63 = vector.shape_cast %62 : vector<1x1x4x4xbf16> to vector<4x4xbf16>
    %cst_28 = arith.constant dense<0.000000e+00> : vector<128x4xf32>
    %64 = tpu.matmul %61, %63, %cst_28 {dimension_numbers = #tpu.dot_dimension_numbers<[1], [0], [0], [1], [0, 0, 1, 1], [], []>} : vector<128x4xbf16>, vector<4x4xbf16>, vector<128x4xf32> -> vector<128x4xf32>
    %65 = arith.addf %59, %64 : vector<128x4xf32>
    %66 = vector.extract_strided_slice %52 {offsets = [0, 0, 0], sizes = [8, 16, 4], strides = [1, 1, 1]} : vector<10x16x4xbf16> to vector<8x16x4xbf16>
    %67 = vector.shape_cast %66 : vector<8x16x4xbf16> to vector<128x4xbf16>
    %c0_29 = arith.constant 0 : index
    %c2 = arith.constant 2 : index
    %c0_30 = arith.constant 0 : index
    %c0_31 = arith.constant 0 : index
    %68 = vector.load %arg7[%c0_29, %c2, %c0_30, %c0_31] : memref<3x3x4x4xbf16, #tpu.memory_space<vmem>>, vector<1x1x4x4xbf16>
    %69 = vector.shape_cast %68 : vector<1x1x4x4xbf16> to vector<4x4xbf16>
    %cst_32 = arith.constant dense<0.000000e+00> : vector<128x4xf32>
    %70 = tpu.matmul %67, %69, %cst_32 {dimension_numbers = #tpu.dot_dimension_numbers<[1], [0], [0], [1], [0, 0, 1, 1], [], []>} : vector<128x4xbf16>, vector<4x4xbf16>, vector<128x4xf32> -> vector<128x4xf32>
    %71 = arith.addf %65, %70 : vector<128x4xf32>
    %72 = vector.extract_strided_slice %50 {offsets = [1, 0, 0], sizes = [8, 16, 4], strides = [1, 1, 1]} : vector<10x16x4xbf16> to vector<8x16x4xbf16>
    %73 = vector.shape_cast %72 : vector<8x16x4xbf16> to vector<128x4xbf16>
    %c1_33 = arith.constant 1 : index
    %c0_34 = arith.constant 0 : index
    %c0_35 = arith.constant 0 : index
    %c0_36 = arith.constant 0 : index
    %74 = vector.load %arg7[%c1_33, %c0_34, %c0_35, %c0_36] : memref<3x3x4x4xbf16, #tpu.memory_space<vmem>>, vector<1x1x4x4xbf16>
    %75 = vector.shape_cast %74 : vector<1x1x4x4xbf16> to vector<4x4xbf16>
    %cst_37 = arith.constant dense<0.000000e+00> : vector<128x4xf32>
    %76 = tpu.matmul %73, %75, %cst_37 {dimension_numbers = #tpu.dot_dimension_numbers<[1], [0], [0], [1], [0, 0, 1, 1], [], []>} : vector<128x4xbf16>, vector<4x4xbf16>, vector<128x4xf32> -> vector<128x4xf32>
    %77 = arith.addf %71, %76 : vector<128x4xf32>
    %78 = vector.extract_strided_slice %51 {offsets = [1, 0, 0], sizes = [8, 16, 4], strides = [1, 1, 1]} : vector<10x16x4xbf16> to vector<8x16x4xbf16>
    %79 = vector.shape_cast %78 : vector<8x16x4xbf16> to vector<128x4xbf16>
    %c1_38 = arith.constant 1 : index
    %c1_39 = arith.constant 1 : index
    %c0_40 = arith.constant 0 : index
    %c0_41 = arith.constant 0 : index
    %80 = vector.load %arg7[%c1_38, %c1_39, %c0_40, %c0_41] : memref<3x3x4x4xbf16, #tpu.memory_space<vmem>>, vector<1x1x4x4xbf16>
    %81 = vector.shape_cast %80 : vector<1x1x4x4xbf16> to vector<4x4xbf16>
    %cst_42 = arith.constant dense<0.000000e+00> : vector<128x4xf32>
    %82 = tpu.matmul %79, %81, %cst_42 {dimension_numbers = #tpu.dot_dimension_numbers<[1], [0], [0], [1], [0, 0, 1, 1], [], []>} : vector<128x4xbf16>, vector<4x4xbf16>, vector<128x4xf32> -> vector<128x4xf32>
    %83 = arith.addf %77, %82 : vector<128x4xf32>
    %84 = vector.extract_strided_slice %52 {offsets = [1, 0, 0], sizes = [8, 16, 4], strides = [1, 1, 1]} : vector<10x16x4xbf16> to vector<8x16x4xbf16>
    %85 = vector.shape_cast %84 : vector<8x16x4xbf16> to vector<128x4xbf16>
    %c1_43 = arith.constant 1 : index
    %c2_44 = arith.constant 2 : index
    %c0_45 = arith.constant 0 : index
    %c0_46 = arith.constant 0 : index
    %86 = vector.load %arg7[%c1_43, %c2_44, %c0_45, %c0_46] : memref<3x3x4x4xbf16, #tpu.memory_space<vmem>>, vector<1x1x4x4xbf16>
    %87 = vector.shape_cast %86 : vector<1x1x4x4xbf16> to vector<4x4xbf16>
    %cst_47 = arith.constant dense<0.000000e+00> : vector<128x4xf32>
    %88 = tpu.matmul %85, %87, %cst_47 {dimension_numbers = #tpu.dot_dimension_numbers<[1], [0], [0], [1], [0, 0, 1, 1], [], []>} : vector<128x4xbf16>, vector<4x4xbf16>, vector<128x4xf32> -> vector<128x4xf32>
    %89 = arith.addf %83, %88 : vector<128x4xf32>
    %90 = vector.extract_strided_slice %50 {offsets = [2, 0, 0], sizes = [8, 16, 4], strides = [1, 1, 1]} : vector<10x16x4xbf16> to vector<8x16x4xbf16>
    %91 = vector.shape_cast %90 : vector<8x16x4xbf16> to vector<128x4xbf16>
    %c2_48 = arith.constant 2 : index
    %c0_49 = arith.constant 0 : index
    %c0_50 = arith.constant 0 : index
    %c0_51 = arith.constant 0 : index
    %92 = vector.load %arg7[%c2_48, %c0_49, %c0_50, %c0_51] : memref<3x3x4x4xbf16, #tpu.memory_space<vmem>>, vector<1x1x4x4xbf16>
    %93 = vector.shape_cast %92 : vector<1x1x4x4xbf16> to vector<4x4xbf16>
    %cst_52 = arith.constant dense<0.000000e+00> : vector<128x4xf32>
    %94 = tpu.matmul %91, %93, %cst_52 {dimension_numbers = #tpu.dot_dimension_numbers<[1], [0], [0], [1], [0, 0, 1, 1], [], []>} : vector<128x4xbf16>, vector<4x4xbf16>, vector<128x4xf32> -> vector<128x4xf32>
    %95 = arith.addf %89, %94 : vector<128x4xf32>
    %96 = vector.extract_strided_slice %51 {offsets = [2, 0, 0], sizes = [8, 16, 4], strides = [1, 1, 1]} : vector<10x16x4xbf16> to vector<8x16x4xbf16>
    %97 = vector.shape_cast %96 : vector<8x16x4xbf16> to vector<128x4xbf16>
    %c2_53 = arith.constant 2 : index
    %c1_54 = arith.constant 1 : index
    %c0_55 = arith.constant 0 : index
    %c0_56 = arith.constant 0 : index
    %98 = vector.load %arg7[%c2_53, %c1_54, %c0_55, %c0_56] : memref<3x3x4x4xbf16, #tpu.memory_space<vmem>>, vector<1x1x4x4xbf16>
    %99 = vector.shape_cast %98 : vector<1x1x4x4xbf16> to vector<4x4xbf16>
    %cst_57 = arith.constant dense<0.000000e+00> : vector<128x4xf32>
    %100 = tpu.matmul %97, %99, %cst_57 {dimension_numbers = #tpu.dot_dimension_numbers<[1], [0], [0], [1], [0, 0, 1, 1], [], []>} : vector<128x4xbf16>, vector<4x4xbf16>, vector<128x4xf32> -> vector<128x4xf32>
    %101 = arith.addf %95, %100 : vector<128x4xf32>
    %102 = vector.extract_strided_slice %52 {offsets = [2, 0, 0], sizes = [8, 16, 4], strides = [1, 1, 1]} : vector<10x16x4xbf16> to vector<8x16x4xbf16>
    %103 = vector.shape_cast %102 : vector<8x16x4xbf16> to vector<128x4xbf16>
    %c2_58 = arith.constant 2 : index
    %c2_59 = arith.constant 2 : index
    %c0_60 = arith.constant 0 : index
    %c0_61 = arith.constant 0 : index
    %104 = vector.load %arg7[%c2_58, %c2_59, %c0_60, %c0_61] : memref<3x3x4x4xbf16, #tpu.memory_space<vmem>>, vector<1x1x4x4xbf16>
    %105 = vector.shape_cast %104 : vector<1x1x4x4xbf16> to vector<4x4xbf16>
    %cst_62 = arith.constant dense<0.000000e+00> : vector<128x4xf32>
    %106 = tpu.matmul %103, %105, %cst_62 {dimension_numbers = #tpu.dot_dimension_numbers<[1], [0], [0], [1], [0, 0, 1, 1], [], []>} : vector<128x4xbf16>, vector<4x4xbf16>, vector<128x4xf32> -> vector<128x4xf32>
    %107 = arith.addf %101, %106 : vector<128x4xf32>
    %c0_63 = arith.constant 0 : index
    %c0_64 = arith.constant 0 : index
    %108 = vector.load %arg8[%c0_63, %c0_64] : memref<1x4xf32, #tpu.memory_space<vmem>>, vector<1x4xf32>
    %109 = vector.broadcast %108 : vector<1x4xf32> to vector<128x4xf32>
    %110 = arith.addf %107, %109 : vector<128x4xf32>
    %cst_65 = arith.constant 0.000000e+00 : f32
    %111 = vector.broadcast %cst_65 : f32 to vector<128x4xf32>
    %112 = arith.cmpf ogt, %110, %111 : vector<128x4xf32>
    %c0_66 = arith.constant 0 : index
    %c0_67 = arith.constant 0 : index
    %113 = vector.load %arg9[%c0_66, %c0_67] : memref<1x4xf32, #tpu.memory_space<vmem>>, vector<1x4xf32>
    %114 = vector.broadcast %113 : vector<1x4xf32> to vector<128x4xf32>
    %115 = arith.mulf %114, %110 : vector<128x4xf32>
    %116 = arith.select %112, %110, %115 : vector<128x4xi1>, vector<128x4xf32>
    %117 = arith.truncf %116 : vector<128x4xf32> to vector<128x4xbf16>
    %c0_68 = arith.constant 0 : index
    %c0_69 = arith.constant 0 : index
    %118 = vector.load %arg10[%c0_68, %c0_69] : memref<4x16xbf16, #tpu.memory_space<vmem>>, vector<4x16xbf16>
    %cst_70 = arith.constant dense<0.000000e+00> : vector<128x16xf32>
    %119 = tpu.matmul %117, %118, %cst_70 {dimension_numbers = #tpu.dot_dimension_numbers<[1], [0], [0], [1], [0, 0, 1, 1], [], []>} : vector<128x4xbf16>, vector<4x16xbf16>, vector<128x16xf32> -> vector<128x16xf32>
    %c0_71 = arith.constant 0 : index
    %c0_72 = arith.constant 0 : index
    %120 = vector.load %arg11[%c0_71, %c0_72] : memref<1x16xf32, #tpu.memory_space<vmem>>, vector<1x16xf32>
    %121 = vector.broadcast %120 : vector<1x16xf32> to vector<128x16xf32>
    %122 = arith.addf %119, %121 : vector<128x16xf32>
    %123 = vector.shape_cast %122 : vector<128x16xf32> to vector<8x16x16xf32>
    %c0_73 = arith.constant 0 : index
    %c0_74 = arith.constant 0 : index
    %c0_75 = arith.constant 0 : index
    %c0_76 = arith.constant 0 : index
    %124 = vector.load %arg2[%c0_73, %c0_74, %c0_75, %c0_76] : memref<1x8x16x16xbf16, #tpu.memory_space<vmem>>, vector<1x8x16x16xbf16>
    %125 = vector.shape_cast %124 : vector<1x8x16x16xbf16> to vector<8x16x16xbf16>
    %126 = arith.extf %125 : vector<8x16x16xbf16> to vector<8x16x16xf32>
    %127 = arith.addf %123, %126 : vector<8x16x16xf32>
    %128 = arith.truncf %127 : vector<8x16x16xf32> to vector<8x16x16xbf16>
    %c0_77 = arith.constant 0 : index
    %c0_78 = arith.constant 0 : index
    %c0_79 = arith.constant 0 : index
    %c0_80 = arith.constant 0 : index
    %129 = vector.load %arg12[%c0_77, %c0_78, %c0_79, %c0_80] : memref<1x8x16x16xbf16, #tpu.memory_space<vmem>>, vector<1x8x16x16xbf16>
    %130 = vector.shape_cast %129 : vector<1x8x16x16xbf16> to vector<8x16x16xbf16>
    %131 = vector.shape_cast %128 : vector<8x16x16xbf16> to vector<1x8x16x16xbf16>
    tpu.vector_store %arg12[%c0_77, %c0_78, %c0_79, %c0_80], %131 {strides = array<i32>} : memref<1x8x16x16xbf16, #tpu.memory_space<vmem>>, vector<1x8x16x16xbf16>,
    return
  }
  func.func @transform_0(%arg0: i32, %arg1: i32) -> (i32, i32, i32, i32) {
    %c0_i32 = arith.constant 0 : i32
    %c0_i32_0 = arith.constant 0 : i32
    %c0_i32_1 = arith.constant 0 : i32
    return %arg0, %arg1, %c0_i32, %c0_i32_0 : i32, i32, i32, i32
  }
  func.func @transform_1(%arg0: i32, %arg1: i32) -> (i32, i32, i32, i32) {
    %c8_i32 = arith.constant 8 : i32
    %0 = arith.muli %arg1, %c8_i32 : i32
    %c1_i32 = arith.constant 1 : i32
    %1 = arith.subi %0, %c1_i32 : i32
    %c0_i32 = arith.constant 0 : i32
    %2 = arith.maxsi %1, %c0_i32 : i32
    %c0_i32_0 = arith.constant 0 : i32
    %c0_i32_1 = arith.constant 0 : i32
    %c0_i32_2 = arith.constant 0 : i32
    return %arg0, %2, %c0_i32_0, %c0_i32_1 : i32, i32, i32, i32
  }
  func.func @transform_2(%arg0: i32, %arg1: i32) -> (i32, i32, i32, i32) {
    %c1_i32 = arith.constant 1 : i32
    %0 = arith.addi %arg1, %c1_i32 : i32
    %c8_i32 = arith.constant 8 : i32
    %1 = arith.muli %0, %c8_i32 : i32
    %c15_i32 = arith.constant 15 : i32
    %2 = arith.minsi %1, %c15_i32 : i32
    %c0_i32 = arith.constant 0 : i32
    %c0_i32_0 = arith.constant 0 : i32
    %c0_i32_1 = arith.constant 0 : i32
    return %arg0, %2, %c0_i32, %c0_i32_0 : i32, i32, i32, i32
  }
  func.func @transform_3(%arg0: i32, %arg1: i32) -> (i32, i32) {
    %c0_i32 = arith.constant 0 : i32
    %c0_i32_0 = arith.constant 0 : i32
    %c0_i32_1 = arith.constant 0 : i32
    return %c0_i32, %c0_i32_0 : i32, i32
  }
  func.func @transform_4(%arg0: i32, %arg1: i32) -> (i32, i32) {
    %c0_i32 = arith.constant 0 : i32
    %c0_i32_0 = arith.constant 0 : i32
    %c0_i32_1 = arith.constant 0 : i32
    return %c0_i32, %c0_i32_0 : i32, i32
  }
  func.func @transform_5(%arg0: i32, %arg1: i32) -> (i32, i32, i32, i32) {
    %c0_i32 = arith.constant 0 : i32
    %c0_i32_0 = arith.constant 0 : i32
    %c0_i32_1 = arith.constant 0 : i32
    %c0_i32_2 = arith.constant 0 : i32
    %c0_i32_3 = arith.constant 0 : i32
    return %c0_i32, %c0_i32_0, %c0_i32_1, %c0_i32_2 : i32, i32, i32, i32
  }
  func.func @transform_6(%arg0: i32, %arg1: i32) -> (i32, i32) {
    %c0_i32 = arith.constant 0 : i32
    %c0_i32_0 = arith.constant 0 : i32
    %c0_i32_1 = arith.constant 0 : i32
    return %c0_i32, %c0_i32_0 : i32, i32
  }
  func.func @transform_7(%arg0: i32, %arg1: i32) -> (i32, i32) {
    %c0_i32 = arith.constant 0 : i32
    %c0_i32_0 = arith.constant 0 : i32
    %c0_i32_1 = arith.constant 0 : i32
    return %c0_i32, %c0_i32_0 : i32, i32
  }
  func.func @transform_8(%arg0: i32, %arg1: i32) -> (i32, i32) {
    %c0_i32 = arith.constant 0 : i32
    %c0_i32_0 = arith.constant 0 : i32
    %c0_i32_1 = arith.constant 0 : i32
    return %c0_i32, %c0_i32_0 : i32, i32
  }
  func.func @transform_9(%arg0: i32, %arg1: i32) -> (i32, i32) {
    %c0_i32 = arith.constant 0 : i32
    %c0_i32_0 = arith.constant 0 : i32
    %c0_i32_1 = arith.constant 0 : i32
    return %c0_i32, %c0_i32_0 : i32, i32
  }
  func.func @transform_10(%arg0: i32, %arg1: i32) -> (i32, i32, i32, i32) {
    %c0_i32 = arith.constant 0 : i32
    %c0_i32_0 = arith.constant 0 : i32
    %c0_i32_1 = arith.constant 0 : i32
    return %arg0, %arg1, %c0_i32, %c0_i32_0 : i32, i32, i32, i32
  }
}

</mosaic_0001>

<llo_original>
// kernel: ibasic_block_first.1
$region0: #{ibasic_block_first.1}
  #allocation0 [shape = 'u32[]', space=smem, size = 0x4, offset = 0x4, fixed_abs, tag = 'smem constant byte address 0x4 - core index']
  #allocation1 [shape = 'u32[144,128]{1,0:T(1,128)}', space=vmem, size = 0x12000, scoped, tag = 'internal scratch']
  %s0 = inlined_call_operand.vmem [shape: bf16[2,16,16,16], index: 0, kind: input, shape index: {}, may-alias: {0,1,2}]
  %s1 = inlined_call_operand.vmem [shape: bf16[2,16,16,16], index: 1, kind: input, shape index: {}, may-alias: {0,1,2}]
  %s2 = inlined_call_operand.vmem [shape: bf16[2,16,16,16], index: 2, kind: input, shape index: {}, may-alias: {0,1,2}]
  %s3 = inlined_call_operand.vmem [shape: bf16[16,4], index: 3, kind: input, shape index: {}]
  %s4 = inlined_call_operand.vmem [shape: f32[1,4], index: 4, kind: input, shape index: {}]
  %s5 = inlined_call_operand.vmem [shape: bf16[3,12,4], index: 5, kind: input, shape index: {}]
  %s6 = inlined_call_operand.vmem [shape: f32[1,4], index: 6, kind: input, shape index: {}]
  %s7 = inlined_call_operand.vmem [shape: f32[1,4], index: 7, kind: input, shape index: {}]
  %s8 = inlined_call_operand.vmem [shape: bf16[4,16], index: 8, kind: input, shape index: {}]
  %s9 = inlined_call_operand.vmem [shape: f32[1,16], index: 9, kind: input, shape index: {}]
  %s10 = inlined_call_operand.hbm [shape: bf16[2,16,16,16], index: 10, kind: output, shape index: {}]
  %s11 = sld [smem:[#allocation0]]
  $region73: #{ibasic_block_first.1} parent=0
    _
  %s13 = ssub.s32 1, %s11
  %s14 = scalar_select 0, %s13, %s11
  $region1: #{ibasic_block_first.1} parent=0
    #allocation2 [shape = 'u8[65536]{0}', space=vmem, size = 0x10000, scoped, tag = 'output window, operand 0']
    #allocation3 [shape = 's32[2]{0}', space=sflag, size = 0x8, scoped, tag = 'scoped memory for ibasic_block_first.1']
    %15 = vsyncpa [#allocation3], 0
    %s16 = scalar_lea.sflag [#allocation3], 1
    %17 = vsyncpa %s16, 0
    loop: start=0, step=1, limit=6
    $region2: #{ibasic_block_first.1} parent=1 // loop_pre_header
      _
    $region3: #{ibasic_block_first.1} parent=1 // loop_header
      %s19 = sphi 0, %s23
      %p20 = scmp.ge.s32.totalorder %s19, 6
      %s26 = sphi 0, %s38
      %s27 = sphi 0, %s34
      %s28 = sphi 0, %s26
      %s29 = sphi 0, %s27
      %s30 = sphi 0, %s28
      %s31 = sphi 0, %s29
      %s43 = sphi 0, %s45
      %s46 = sphi 0, %s43
      %s47 = sphi 0, %s46
      %s63 = sphi 0, %s47
      %s79 = sphi 0, %s81
      %s82 = sphi 0, %s79
      %s83 = sphi 0, %s82
      %s99 = sphi 0, %s83
      %s115 = sphi 0, %s117
      %s118 = sphi 0, %s115
      %s119 = sphi 0, %s118
      %s135 = sphi 0, %s119
      %s139 = sphi 0, %s139
      %s141 = sphi 0, %s139
      %s142 = sphi 0, %s141
      %s156 = sphi 0, %s142
      %s160 = sphi 0, %s160
      %s162 = sphi 0, %s160
      %s163 = sphi 0, %s162
      %s177 = sphi 0, %s163
      %s181 = sphi 0, %s181
      %s183 = sphi 0, %s181
      %s184 = sphi 0, %s183
      %s198 = sphi 0, %s184
      %s202 = sphi 0, %s202
      %s204 = sphi 0, %s202
      %s205 = sphi 0, %s204
      %s219 = sphi 0, %s205
      %s223 = sphi 0, %s223
      %s225 = sphi 0, %s223
      %s226 = sphi 0, %s225
      %s240 = sphi 0, %s226
      %s244 = sphi 0, %s244
      %s246 = sphi 0, %s244
      %s247 = sphi 0, %s246
      %s261 = sphi 0, %s247
      %s265 = sphi 0, %s265
      %s267 = sphi 0, %s265
      %s268 = sphi 0, %s267
      %s282 = sphi 0, %s268
      %s290 = sphi 0, %s292
      %s293 = sphi 0, %s290
      %s294 = sphi 0, %s293
      %s310 = sphi 0, %s294
    $region4: #{ibasic_block_first.1} parent=1 // loop_header_branch
      %22 = sbr.rel (%p20) target = $region8
    $region5: #{ibasic_block_first.1} parent=1 // loop_body
      %s24 = ssub.s32 %s19, 1
      %s25 = ssub.s32 %s19, 2
      %s32 = sadd.s32 1, %s27
      %p33 = scmp.ge.s32.totalorder %s32, 2
      %s34 = scalar_select %p33, 0, %s32
      %s35 = sadd.s32 1, %s26
      %s36 = scalar_select %p33, %s35, %s26
      %p37 = scmp.ge.s32.totalorder %s36, 2
      %s38 = scalar_select %p37, 0, %s36
      %s39 = ssub.s32 %s26, %s38
      %s40 = ssub.s32 %s27, %s34
      %s41 = sor.u32 %s39, %s40
      %p42 = scmp.eq.s32.totalorder %s41, 0
      %s44 = sadd.s32 %s43, 1
      %s45 = scalar_select %p42, %s43, %s44
      %p48 = pneg %p42
      %p49 = scmp.eq.s32.totalorder %s19, 3
      %p50 = por %p48, %p49
      %p51 = scmp.ne.s32.totalorder %s43, %s46
      %p52 = scmp.eq.s32.totalorder %s19, 0
      %p53 = por %p51, %p52
      %p54 = scmp.ne.s32.totalorder %s43, %s46
      %p55 = scmp.eq.s32.totalorder %s24, 3
      %p56 = por %p54, %p55
      %p57 = scmp.ne.s32.totalorder %s46, %s47
      %p58 = scmp.eq.s32.totalorder %s24, 0
      %p59 = por %p57, %p58
      %p60 = scmp.ne.s32.totalorder %s46, %s47
      %p61 = scmp.eq.s32.totalorder %s25, 3
      %p62 = por %p60, %p61
      %p64 = scmp.ne.s32.totalorder %s47, %s63
      %p65 = scmp.eq.s32.totalorder %s25, 0
      %p66 = por %p64, %p65
      %s67 = smul.u32 %s27, 8
      %s68 = ssub.s32 %s67, 1
      %p69 = scmp.gt.s32.totalorder %s68, 0
      %s70 = scalar_select %p69, %s68, 0
      %s71 = smul.u32 %s34, 8
      %s72 = ssub.s32 %s71, 1
      %p73 = scmp.gt.s32.totalorder %s72, 0
      %s74 = scalar_select %p73, %s72, 0
      %s75 = ssub.s32 %s26, %s38
      %s76 = ssub.s32 %s70, %s74
      %s77 = sor.u32 %s75, %s76
      %p78 = scmp.eq.s32.totalorder %s77, 0
      %s80 = sadd.s32 %s79, 1
      %s81 = scalar_select %p78, %s79, %s80
      %p84 = pneg %p78
      %p85 = scmp.eq.s32.totalorder %s19, 3
      %p86 = por %p84, %p85
      %p87 = scmp.ne.s32.totalorder %s79, %s82
      %p88 = scmp.eq.s32.totalorder %s19, 0
      %p89 = por %p87, %p88
      %p90 = scmp.ne.s32.totalorder %s79, %s82
      %p91 = scmp.eq.s32.totalorder %s24, 3
      %p92 = por %p90, %p91
      %p93 = scmp.ne.s32.totalorder %s82, %s83
      %p94 = scmp.eq.s32.totalorder %s24, 0
      %p95 = por %p93, %p94
      %p96 = scmp.ne.s32.totalorder %s82, %s83
      %p97 = scmp.eq.s32.totalorder %s25, 3
      %p98 = por %p96, %p97
      %p100 = scmp.ne.s32.totalorder %s83, %s99
      %p101 = scmp.eq.s32.totalorder %s25, 0
      %p102 = por %p100, %p101
      %s103 = sadd.s32 %s27, 1
      %s104 = smul.u32 %s103, 8
      %p105 = scmp.lt.s32.totalorder %s104, 15
      %s106 = scalar_select %p105, %s104, 15
      %s107 = sadd.s32 %s34, 1
      %s108 = smul.u32 %s107, 8
      %p109 = scmp.lt.s32.totalorder %s108, 15
      %s110 = scalar_select %p109, %s108, 15
      %s111 = ssub.s32 %s26, %s38
      %s112 = ssub.s32 %s106, %s110
      %s113 = sor.u32 %s111, %s112
      %p114 = scmp.eq.s32.totalorder %s113, 0
      %s116 = sadd.s32 %s115, 1
      %s117 = scalar_select %p114, %s115, %s116
      %p120 = pneg %p114
      %p121 = scmp.eq.s32.totalorder %s19, 3
      %p122 = por %p120, %p121
      %p123 = scmp.ne.s32.totalorder %s115, %s118
      %p124 = scmp.eq.s32.totalorder %s19, 0
      %p125 = por %p123, %p124
      %p126 = scmp.ne.s32.totalorder %s115, %s118
      %p127 = scmp.eq.s32.totalorder %s24, 3
      %p128 = por %p126, %p127
      %p129 = scmp.ne.s32.totalorder %s118, %s119
      %p130 = scmp.eq.s32.totalorder %s24, 0
      %p131 = por %p129, %p130
      %p132 = scmp.ne.s32.totalorder %s118, %s119
      %p133 = scmp.eq.s32.totalorder %s25, 3
      %p134 = por %p132, %p133
      %p136 = scmp.ne.s32.totalorder %s119, %s135
      %p137 = scmp.eq.s32.totalorder %s25, 0
      %p138 = por %p136, %p137
      %s140 = sadd.s32 %s139, 1
      %p143 = scmp.eq.s32.totalorder %s19, 3
      %p144 = scmp.ne.s32.totalorder %s139, %s141
      %p145 = scmp.eq.s32.totalorder %s19, 0
      %p146 = por %p144, %p145
      %p147 = scmp.ne.s32.totalorder %s139, %s141
      %p148 = scmp.eq.s32.totalorder %s24, 3
      %p149 = por %p147, %p148
      %p150 = scmp.ne.s32.totalorder %s141, %s142
      %p151 = scmp.eq.s32.totalorder %s24, 0
      %p152 = por %p150, %p151
      %p153 = scmp.ne.s32.totalorder %s141, %s142
      %p154 = scmp.eq.s32.totalorder %s25, 3
      %p155 = por %p153, %p154
      %p157 = scmp.ne.s32.totalorder %s142, %s156
      %p158 = scmp.eq.s32.totalorder %s25, 0
      %p159 = por %p157, %p158
      %s161 = sadd.s32 %s160, 1
      %p164 = scmp.eq.s32.totalorder %s19, 3
      %p165 = scmp.ne.s32.totalorder %s160, %s162
      %p166 = scmp.eq.s32.totalorder %s19, 0
      %p167 = por %p165, %p166
      %p168 = scmp.ne.s32.totalorder %s160, %s162
      %p169 = scmp.eq.s32.totalorder %s24, 3
      %p170 = por %p168, %p169
      %p171 = scmp.ne.s32.totalorder %s162, %s163
      %p172 = scmp.eq.s32.totalorder %s24, 0
      %p173 = por %p171, %p172
      %p174 = scmp.ne.s32.totalorder %s162, %s163
      %p175 = scmp.eq.s32.totalorder %s25, 3
      %p176 = por %p174, %p175
      %p178 = scmp.ne.s32.totalorder %s163, %s177
      %p179 = scmp.eq.s32.totalorder %s25, 0
      %p180 = por %p178, %p179
      %s182 = sadd.s32 %s181, 1
      %p185 = scmp.eq.s32.totalorder %s19, 3
      %p186 = scmp.ne.s32.totalorder %s181, %s183
      %p187 = scmp.eq.s32.totalorder %s19, 0
      %p188 = por %p186, %p187
      %p189 = scmp.ne.s32.totalorder %s181, %s183
      %p190 = scmp.eq.s32.totalorder %s24, 3
      %p191 = por %p189, %p190
      %p192 = scmp.ne.s32.totalorder %s183, %s184
      %p193 = scmp.eq.s32.totalorder %s24, 0
      %p194 = por %p192, %p193
      %p195 = scmp.ne.s32.totalorder %s183, %s184
      %p196 = scmp.eq.s32.totalorder %s25, 3
      %p197 = por %p195, %p196
      %p199 = scmp.ne.s32.totalorder %s184, %s198
      %p200 = scmp.eq.s32.totalorder %s25, 0
      %p201 = por %p199, %p200
      %s203 = sadd.s32 %s202, 1
      %p206 = scmp.eq.s32.totalorder %s19, 3
      %p207 = scmp.ne.s32.totalorder %s202, %s204
      %p208 = scmp.eq.s32.totalorder %s19, 0
      %p209 = por %p207, %p208
      %p210 = scmp.ne.s32.totalorder %s202, %s204
      %p211 = scmp.eq.s32.totalorder %s24, 3
      %p212 = por %p210, %p211
      %p213 = scmp.ne.s32.totalorder %s204, %s205
      %p214 = scmp.eq.s32.totalorder %s24, 0
      %p215 = por %p213, %p214
      %p216 = scmp.ne.s32.totalorder %s204, %s205
      %p217 = scmp.eq.s32.totalorder %s25, 3
      %p218 = por %p216, %p217
      %p220 = scmp.ne.s32.totalorder %s205, %s219
      %p221 = scmp.eq.s32.totalorder %s25, 0
      %p222 = por %p220, %p221
      %s224 = sadd.s32 %s223, 1
      %p227 = scmp.eq.s32.totalorder %s19, 3
      %p228 = scmp.ne.s32.totalorder %s223, %s225
      %p229 = scmp.eq.s32.totalorder %s19, 0
      %p230 = por %p228, %p229
      %p231 = scmp.ne.s32.totalorder %s223, %s225
      %p232 = scmp.eq.s32.totalorder %s24, 3
      %p233 = por %p231, %p232
      %p234 = scmp.ne.s32.totalorder %s225, %s226
      %p235 = scmp.eq.s32.totalorder %s24, 0
      %p236 = por %p234, %p235
      %p237 = scmp.ne.s32.totalorder %s225, %s226
      %p238 = scmp.eq.s32.totalorder %s25, 3
      %p239 = por %p237, %p238
      %p241 = scmp.ne.s32.totalorder %s226, %s240
      %p242 = scmp.eq.s32.totalorder %s25, 0
      %p243 = por %p241, %p242
      %s245 = sadd.s32 %s244, 1
      %p248 = scmp.eq.s32.totalorder %s19, 3
      %p249 = scmp.ne.s32.totalorder %s244, %s246
      %p250 = scmp.eq.s32.totalorder %s19, 0
      %p251 = por %p249, %p250
      %p252 = scmp.ne.s32.totalorder %s244, %s246
      %p253 = scmp.eq.s32.totalorder %s24, 3
      %p254 = por %p252, %p253
      %p255 = scmp.ne.s32.totalorder %s246, %s247
      %p256 = scmp.eq.s32.totalorder %s24, 0
      %p257 = por %p255, %p256
      %p258 = scmp.ne.s32.totalorder %s246, %s247
      %p259 = scmp.eq.s32.totalorder %s25, 3
      %p260 = por %p258, %p259
      %p262 = scmp.ne.s32.totalorder %s247, %s261
      %p263 = scmp.eq.s32.totalorder %s25, 0
      %p264 = por %p262, %p263
      %s266 = sadd.s32 %s265, 1
      %p269 = scmp.eq.s32.totalorder %s19, 3
      %p270 = scmp.ne.s32.totalorder %s265, %s267
      %p271 = scmp.eq.s32.totalorder %s19, 0
      %p272 = por %p270, %p271
      %p273 = scmp.ne.s32.totalorder %s265, %s267
      %p274 = scmp.eq.s32.totalorder %s24, 3
      %p275 = por %p273, %p274
      %p276 = scmp.ne.s32.totalorder %s267, %s268
      %p277 = scmp.eq.s32.totalorder %s24, 0
      %p278 = por %p276, %p277
      %p279 = scmp.ne.s32.totalorder %s267, %s268
      %p280 = scmp.eq.s32.totalorder %s25, 3
      %p281 = por %p279, %p280
      %p283 = scmp.ne.s32.totalorder %s268, %s282
      %p284 = scmp.eq.s32.totalorder %s25, 0
      %p285 = por %p283, %p284
      %s286 = ssub.s32 %s26, %s38
      %s287 = ssub.s32 %s27, %s34
      %s288 = sor.u32 %s286, %s287
      %p289 = scmp.eq.s32.totalorder %s288, 0
      %s291 = sadd.s32 %s290, 1
      %s292 = scalar_select %p289, %s290, %s291
      %p295 = pneg %p289
      %p296 = scmp.eq.s32.totalorder %s19, 3
      %p297 = por %p295, %p296
      %p298 = scmp.ne.s32.totalorder %s290, %s293
      %p299 = scmp.eq.s32.totalorder %s19, 0
      %p300 = por %p298, %p299
      %p301 = scmp.ne.s32.totalorder %s290, %s293
      %p302 = scmp.eq.s32.totalorder %s24, 3
      %p303 = por %p301, %p302
      %p304 = scmp.ne.s32.totalorder %s293, %s294
      %p305 = scmp.eq.s32.totalorder %s24, 0
      %p306 = por %p304, %p305
      %p307 = scmp.ne.s32.totalorder %s293, %s294
      %p308 = scmp.eq.s32.totalorder %s25, 3
      %p309 = por %p307, %p308
      %p311 = scmp.ne.s32.totalorder %s294, %s310
      %p312 = scmp.eq.s32.totalorder %s25, 0
      %p313 = por %p311, %p312
      %p314 = scmp.le.s32.totalorder 1, %s19
      %p315 = scmp.lt.s32.totalorder %s19, 5
      %p316 = pnand %p314, %p315
      %p317 = pneg %p316
      // Predicated region
      $region9: #{ibasic_block_first.1} parent=5 // pred_check
        _
      $region10: #{ibasic_block_first.1} parent=5 // pred_check_branch
        %319 = sbr.rel (%p316) target = $region12
      $region11: #{ibasic_block_first.1} parent=5 // pred_region
        %s320 = ssub.s32 %s19, 1
        // Predicated region
        $region13: #{ibasic_block_first.1} parent=11 // pred_check
          %p321 = pneg %p152
        $region14: #{ibasic_block_first.1} parent=11 // pred_check_branch
          %323 = sbr.rel (%p321) target = $region16
        $region15: #{ibasic_block_first.1} parent=11 // pred_region
          _
        $region16: #{ibasic_block_first.1} parent=11 // pred_fallthru
          _
        // Predicated region
        $region17: #{ibasic_block_first.1} parent=11 // pred_check
          %p324 = pneg %p173
        $region18: #{ibasic_block_first.1} parent=11 // pred_check_branch
          %326 = sbr.rel (%p324) target = $region20
        $region19: #{ibasic_block_first.1} parent=11 // pred_region
          _
        $region20: #{ibasic_block_first.1} parent=11 // pred_fallthru
          _
        // Predicated region
        $region21: #{ibasic_block_first.1} parent=11 // pred_check
          %p327 = pneg %p194
        $region22: #{ibasic_block_first.1} parent=11 // pred_check_branch
          %329 = sbr.rel (%p327) target = $region24
        $region23: #{ibasic_block_first.1} parent=11 // pred_region
          _
        $region24: #{ibasic_block_first.1} parent=11 // pred_fallthru
          _
        // Predicated region
        $region25: #{ibasic_block_first.1} parent=11 // pred_check
          %p330 = pneg %p215
        $region26: #{ibasic_block_first.1} parent=11 // pred_check_branch
          %332 = sbr.rel (%p330) target = $region28
        $region27: #{ibasic_block_first.1} parent=11 // pred_region
          _
        $region28: #{ibasic_block_first.1} parent=11 // pred_fallthru
          _
        // Predicated region
        $region29: #{ibasic_block_first.1} parent=11 // pred_check
          %p333 = pneg %p236
        $region30: #{ibasic_block_first.1} parent=11 // pred_check_branch
          %335 = sbr.rel (%p333) target = $region32
        $region31: #{ibasic_block_first.1} parent=11 // pred_region
          _
        $region32: #{ibasic_block_first.1} parent=11 // pred_fallthru
          _
        // Predicated region
        $region33: #{ibasic_block_first.1} parent=11 // pred_check
          %p336 = pneg %p257
        $region34: #{ibasic_block_first.1} parent=11 // pred_check_branch
          %338 = sbr.rel (%p336) target = $region36
        $region35: #{ibasic_block_first.1} parent=11 // pred_region
          _
        $region36: #{ibasic_block_first.1} parent=11 // pred_fallthru
          _
        // Predicated region
        $region37: #{ibasic_block_first.1} parent=11 // pred_check
          %p339 = pneg %p278
        $region38: #{ibasic_block_first.1} parent=11 // pred_check_branch
          %341 = sbr.rel (%p339) target = $region40
        $region39: #{ibasic_block_first.1} parent=11 // pred_region
          _
        $region40: #{ibasic_block_first.1} parent=11 // pred_fallthru
          _
      $region12: #{ibasic_block_first.1} parent=5 // pred_fallthru
        _
      %p342 = scmp.lt.s32.totalorder %s19, 4
      // Predicated region
      $region41: #{ibasic_block_first.1} parent=5 // pred_check
        %p343 = pneg %p342
      $region42: #{ibasic_block_first.1} parent=5 // pred_check_branch
        %345 = sbr.rel (%p343) target = $region44
      $region43: #{ibasic_block_first.1} parent=5 // pred_region
        // Predicated region
        $region45: #{ibasic_block_first.1} parent=43 // pred_check
          %p346 = pneg %p53
        $region46: #{ibasic_block_first.1} parent=43 // pred_check_branch
          %348 = sbr.rel (%p346) target = $region48
        $region47: #{ibasic_block_first.1} parent=43 // pred_region
          %s349 = smul.u32 8, %s27
          %p350 = scmp.lt.s32.totalorder %s26, 1
          %s351 = scalar_select %p350, %s26, 1
          %p352 = scmp.lt.s32.totalorder %s349, 15
          %s353 = scalar_select %p352, %s349, 15
          %s354 = smul.addr %s353, 2
          %s355 = smul.addr %s351, 32
          %s356 = sadd.s32 %s354, %s355
          %s357 = smul.addr %s356, 4
          %s358 = scalar_lea.vmem %s0, %s357
          %s359 = smul.u32 8, %s27
        $region48: #{ibasic_block_first.1} parent=43 // pred_fallthru
          _
        // Predicated region
        $region49: #{ibasic_block_first.1} parent=43 // pred_check
          %p360 = pneg %p89
        $region50: #{ibasic_block_first.1} parent=43 // pred_check_branch
          %362 = sbr.rel (%p360) target = $region52
        $region51: #{ibasic_block_first.1} parent=43 // pred_region
          %s363 = smul.u32 %s27, 8
          %s364 = ssub.s32 %s363, 1
          %p365 = scmp.gt.s32.totalorder %s364, 0
          %s366 = scalar_select %p365, %s364, 0
          %p367 = scmp.lt.s32.totalorder %s26, 1
          %s368 = scalar_select %p367, %s26, 1
          %p369 = scmp.lt.s32.totalorder %s366, 15
          %s370 = scalar_select %p369, %s366, 15
          %s371 = smul.addr %s370, 2
          %s372 = smul.addr %s368, 32
          %s373 = sadd.s32 %s371, %s372
          %s374 = smul.addr %s373, 4
          %s375 = scalar_lea.vmem %s1, %s374
          %s376 = smul.u32 %s27, 8
          %s377 = ssub.s32 %s376, 1
          %p378 = scmp.gt.s32.totalorder %s377, 0
          %s379 = scalar_select %p378, %s377, 0
        $region52: #{ibasic_block_first.1} parent=43 // pred_fallthru
          _
        // Predicated region
        $region53: #{ibasic_block_first.1} parent=43 // pred_check
          %p380 = pneg %p125
        $region54: #{ibasic_block_first.1} parent=43 // pred_check_branch
          %382 = sbr.rel (%p380) target = $region56
        $region55: #{ibasic_block_first.1} parent=43 // pred_region
          %s383 = sadd.s32 %s27, 1
          %s384 = smul.u32 %s383, 8
          %p385 = scmp.lt.s32.totalorder %s384, 15
          %s386 = scalar_select %p385, %s384, 15
          %p387 = scmp.lt.s32.totalorder %s26, 1
          %s388 = scalar_select %p387, %s26, 1
          %p389 = scmp.lt.s32.totalorder %s386, 15
          %s390 = scalar_select %p389, %s386, 15
          %s391 = smul.addr %s390, 2
          %s392 = smul.addr %s388, 32
          %s393 = sadd.s32 %s391, %s392
          %s394 = smul.addr %s393, 4
          %s395 = scalar_lea.vmem %s2, %s394
          %s396 = sadd.s32 %s27, 1
          %s397 = smul.u32 %s396, 8
          %p398 = scmp.lt.s32.totalorder %s397, 15
          %s399 = scalar_select %p398, %s397, 15
        $region56: #{ibasic_block_first.1} parent=43 // pred_fallthru
          _
      $region44: #{ibasic_block_first.1} parent=5 // pred_fallthru
        _
      %p400 = scmp.le.s32.totalorder 1, %s19
      %p401 = scmp.lt.s32.totalorder %s19, 5
      %p402 = pnand %p400, %p401
      %p403 = pneg %p402
      // Predicated region
      $region57: #{ibasic_block_first.1} parent=5 // pred_check
        _
      $region58: #{ibasic_block_first.1} parent=5 // pred_check_branch
        %405 = sbr.rel (%p402) target = $region60
      $region59: #{ibasic_block_first.1} parent=5 // pred_region
        %s406 = ssub.s32 %s19, 1
        %s407 = smul.u32 8, %s29
        %p408 = scmp.lt.s32.totalorder %s28, 1
        %s409 = scalar_select %p408, %s28, 1
        %p410 = scmp.lt.s32.totalorder %s407, 15
        %s411 = scalar_select %p410, %s407, 15
        %s412 = smul.addr %s411, 2
        %s413 = smul.addr %s409, 32
        %s414 = sadd.s32 %s412, %s413
        %s415 = smul.addr %s414, 4
        %s416 = scalar_lea.vmem %s0, %s415
        %p417 = pneg %p59
        %p418 = pneg %p56
        %s419 = smul.u32 %s29, 8
        %s420 = ssub.s32 %s419, 1
        %p421 = scmp.gt.s32.totalorder %s420, 0
        %s422 = scalar_select %p421, %s420, 0
        %p423 = scmp.lt.s32.totalorder %s28, 1
        %s424 = scalar_select %p423, %s28, 1
        %p425 = scmp.lt.s32.totalorder %s422, 15
        %s426 = scalar_select %p425, %s422, 15
        %s427 = smul.addr %s426, 2
        %s428 = smul.addr %s424, 32
        %s429 = sadd.s32 %s427, %s428
        %s430 = smul.addr %s429, 4
        %s431 = scalar_lea.vmem %s1, %s430
        %p432 = pneg %p95
        %p433 = pneg %p92
        %s434 = sadd.s32 %s29, 1
        %s435 = smul.u32 %s434, 8
        %p436 = scmp.lt.s32.totalorder %s435, 15
        %s437 = scalar_select %p436, %s435, 15
        %p438 = scmp.lt.s32.totalorder %s28, 1
        %s439 = scalar_select %p438, %s28, 1
        %p440 = scmp.lt.s32.totalorder %s437, 15
        %s441 = scalar_select %p440, %s437, 15
        %s442 = smul.addr %s441, 2
        %s443 = smul.addr %s439, 32
        %s444 = sadd.s32 %s442, %s443
        %s445 = smul.addr %s444, 4
        %s446 = scalar_lea.vmem %s2, %s445
        %p447 = pneg %p131
        %p448 = pneg %p128
        %p449 = pneg %p152
        %p450 = pneg %p149
        %p451 = pneg %p173
        %p452 = pneg %p170
        %p453 = pneg %p194
        %p454 = pneg %p191
        %p455 = pneg %p215
        %p456 = pneg %p212
        %p457 = pneg %p236
        %p458 = pneg %p233
        %p459 = pneg %p257
        %p460 = pneg %p254
        %p461 = pneg %p278
        %p462 = pneg %p275
        %p463 = pneg %p306
        %p464 = pneg %p303
        %s465 = sand.u32 %s293, 1
        %s466 = scalar_lea.sflag [#allocation3], %s465
        %s467 = sand.u32 %s293, 1
        %s468 = smul.addr %s467, 64
        %s469 = scalar_lea.vmem [#allocation2], %s468
        %s470 = smul.u32 8, %s29
        %p471 = scmp.lt.s32.totalorder %s28, 1
        %s472 = scalar_select %p471, %s28, 1
        %p473 = scmp.lt.s32.totalorder %s470, 15
        %s474 = scalar_select %p473, %s470, 15
        %s475 = smul.addr %s474, 2
        %s476 = smul.addr %s472, 32
        %s477 = sadd.s32 %s475, %s476
        %s478 = smul.addr %s477, 4
        %s479 = scalar_lea.vmem %s0, %s478
        %s480 = smul.u32 8, %s29
        %s481 = smul.u32 %s29, 8
        %s482 = ssub.s32 %s481, 1
        %p483 = scmp.gt.s32.totalorder %s482, 0
        %s484 = scalar_select %p483, %s482, 0
        %p485 = scmp.lt.s32.totalorder %s28, 1
        %s486 = scalar_select %p485, %s28, 1
        %p487 = scmp.lt.s32.totalorder %s484, 15
        %s488 = scalar_select %p487, %s484, 15
        %s489 = smul.addr %s488, 2
        %s490 = smul.addr %s486, 32
        %s491 = sadd.s32 %s489, %s490
        %s492 = smul.addr %s491, 4
        %s493 = scalar_lea.vmem %s1, %s492
        %s494 = smul.u32 %s29, 8
        %s495 = ssub.s32 %s494, 1
        %p496 = scmp.gt.s32.totalorder %s495, 0
        %s497 = scalar_select %p496, %s495, 0
        %s498 = sadd.s32 %s29, 1
        %s499 = smul.u32 %s498, 8
        %p500 = scmp.lt.s32.totalorder %s499, 15
        %s501 = scalar_select %p500, %s499, 15
        %p502 = scmp.lt.s32.totalorder %s28, 1
        %s503 = scalar_select %p502, %s28, 1
        %p504 = scmp.lt.s32.totalorder %s501, 15
        %s505 = scalar_select %p504, %s501, 15
        %s506 = smul.addr %s505, 2
        %s507 = smul.addr %s503, 32
        %s508 = sadd.s32 %s506, %s507
        %s509 = smul.addr %s508, 4
        %s510 = scalar_lea.vmem %s2, %s509
        %s511 = sadd.s32 %s29, 1
        %s512 = smul.u32 %s511, 8
        %p513 = scmp.lt.s32.totalorder %s512, 15
        %s514 = scalar_select %p513, %s512, 15
        %s515 = smul.u32 8, %s29
        %v517 = vld [vmem:[%s493] sm:$0xf]
        %v518 = vld [vmem:[%s493 + $0x4] sm:$0xf]
        %v519 = vld [vmem:[%s479] sm:$0xf]
        %v520 = vld [vmem:[%s479 + $0x4] sm:$0xf]
        %v521 = vld [vmem:[%s479 + $0x8] sm:$0xf]
        %v522 = vld [vmem:[%s479 + $0xc] sm:$0xf]
        %v523 = vld [vmem:[%s479 + $0x10] sm:$0xf]
        %v524 = vld [vmem:[%s479 + $0x14] sm:$0xf]
        %v525 = vld [vmem:[%s479 + $0x18] sm:$0xf]
        %v526 = vld [vmem:[%s479 + $0x1c] sm:$0xf]
        %v527 = vld [vmem:[%s479 + $0x20] sm:$0xf]
        %v528 = vld [vmem:[%s479 + $0x24] sm:$0xf]
        %v529 = vld [vmem:[%s479 + $0x28] sm:$0xf]
        %v530 = vld [vmem:[%s479 + $0x2c] sm:$0xf]
        %v531 = vld [vmem:[%s479 + $0x30] sm:$0xf]
        %v532 = vld [vmem:[%s479 + $0x34] sm:$0xf]
        %v533 = vld [vmem:[%s479 + $0x38] sm:$0xf]
        %v534 = vld [vmem:[%s479 + $0x3c] sm:$0xf]
        %v535 = vld [vmem:[%s510] sm:$0xf]
        %v536 = vld [vmem:[%s510 + $0x4] sm:$0xf]
        %v537 = vld [vmem:[%s3] sm:$0xf]
        %v538 = vld [vmem:[%s3 + $0x4] sm:$0xf]
        %v539 = vld [vmem:[%s4] sm:$0x1]
        %v541 = vlaneseq
        %v542 = vshrl.u32 %v541, 7
        %v543 = vsub.s32 0, %v542
        %v544 = vrot.slane %v539, %v543
        %v566 = vunpack.c.l.b16 %v517
        %v567 = vunpack.c.l.b16 %v518
        %v568 = vunpack.c.l.b16 %v519
        %v569 = vunpack.c.l.b16 %v520
        %v570 = vunpack.c.l.b16 %v521
        %v571 = vunpack.c.l.b16 %v522
        %v572 = vunpack.c.l.b16 %v523
        %v573 = vunpack.c.l.b16 %v524
        %v574 = vunpack.c.l.b16 %v525
        %v575 = vunpack.c.l.b16 %v526
        %v576 = vunpack.c.l.b16 %v527
        %v577 = vunpack.c.l.b16 %v528
        %v578 = vunpack.c.l.b16 %v529
        %v579 = vunpack.c.l.b16 %v530
        %v580 = vunpack.c.l.b16 %v531
        %v581 = vunpack.c.l.b16 %v532
        %v582 = vunpack.c.l.b16 %v533
        %v583 = vunpack.c.l.b16 %v534
        %v584 = vunpack.c.l.b16 %v535
        %v585 = vunpack.c.l.b16 %v536
        %v586 = vpack.c.b16 %v567, %v566
        %v587 = vpack.c.b16 %v569, %v568
        %v588 = vpack.c.b16 %v571, %v570
        %v589 = vpack.c.b16 %v573, %v572
        %v590 = vpack.c.b16 %v575, %v574
        %v591 = vpack.c.b16 %v577, %v576
        %v592 = vpack.c.b16 %v579, %v578
        %v593 = vpack.c.b16 %v581, %v580
        %v594 = vpack.c.b16 %v583, %v582
        %v595 = vpack.c.b16 %v585, %v584
        %v598 = vunpack.c.l.b16 %v537
        %v599 = vunpack.c.l.b16 %v538
        %v600 = vpack.c.b16 %v599, %v598
        %vm602 = vcmask 130048
        %v604 = vsel %vm602, %v586, 0
        %v607 = vsel %vm602, %v587, 0
        %v610 = vsel %vm602, %v588, 0
        %v613 = vsel %vm602, %v589, 0
        %v616 = vsel %vm602, %v590, 0
        %v619 = vsel %vm602, %v591, 0
        %v622 = vsel %vm602, %v592, 0
        %v625 = vsel %vm602, %v593, 0
        %v628 = vsel %vm602, %v594, 0
        %v631 = vsel %vm602, %v595, 0
        %633 = vmatprep.subr.bf16.mxu0 0
        %634 = vmatpush1.bf16.msra.mxu0 %v600
        %635 = vmatprep.subr.bf16.mxu0 0
        %636 = vmatpush1.bf16.msra.mxu0 0
        %637 = vmatprep.subr.bf16.mxu0 0
        %638 = vmatpush1.bf16.msra.mxu0 0
        %639 = vmatprep.subr.bf16.mxu0 0
        %640 = vmatpush1.bf16.msra.mxu0 0
        %641 = vmatprep.subr.bf16.mxu0 0
        %642 = vmatpush1.bf16.msra.mxu0 0
        %643 = vmatprep.subr.bf16.mxu0 0
        %644 = vmatpush1.bf16.msra.mxu0 0
        %645 = vmatprep.subr.bf16.mxu0 0
        %646 = vmatpush1.bf16.msra.mxu0 0
        %647 = vmatprep.subr.bf16.mxu0 0
        %648 = vmatpush1.bf16.msra.mxu0 0
        %649 = vmatprep.subr.bf16.mxu0 0
        %650 = vmatpush1.bf16.msra.mxu0 0
        %651 = vmatprep.subr.bf16.mxu0 0
        %652 = vmatpush1.bf16.msra.mxu0 0
        %653 = vmatprep.subr.bf16.mxu0 0
        %654 = vmatpush1.bf16.msra.mxu0 0
        %655 = vmatprep.subr.bf16.mxu0 0
        %656 = vmatpush1.bf16.msra.mxu0 0
        %657 = vmatprep.subr.bf16.mxu0 0
        %658 = vmatpush1.bf16.msra.mxu0 0
        %659 = vmatprep.subr.bf16.mxu0 0
        %660 = vmatpush1.bf16.msra.mxu0 0
        %661 = vmatprep.subr.bf16.mxu0 0
        %662 = vmatpush1.bf16.msra.mxu0 0
        %663 = vmatprep.subr.bf16.mxu0 0
        %664 = vmatpush1.bf16.msra.mxu0 0
        %665 = vmatprep.mubr.bf16.mxu0 0
        %666 = vmatmul.mubr.bf16.gmra.mrb[0].mxu0 %v604
        %v667 = vpop.f32.mrb[0].mxu0
        %v668 = vadd.f32 %v544, %v667
        %v669 = vpop.f32.mrb[0].mxu0
        %v670 = vpop.f32.mrb[0].mxu0
        %v671 = vadd.f32 %v544, %v670
        %v672 = vpop.f32.mrb[0].mxu0
        %673 = vmatprep.mubr.bf16.mxu0 0
        %674 = vmatmul.mubr.bf16.gmra.mrb[0].mxu0 %v607
        %v675 = vpop.f32.mrb[0].mxu0
        %v676 = vadd.f32 %v544, %v675
        %v677 = vpop.f32.mrb[0].mxu0
        %v678 = vpop.f32.mrb[0].mxu0
        %v679 = vadd.f32 %v544, %v678
        %v680 = vpop.f32.mrb[0].mxu0
        %681 = vmatprep.mubr.bf16.mxu0 0
        %682 = vmatmul.mubr.bf16.gmra.mrb[0].mxu0 %v610
        %v683 = vpop.f32.mrb[0].mxu0
        %v684 = vadd.f32 %v544, %v683
        %v685 = vpop.f32.mrb[0].mxu0
        %v686 = vpop.f32.mrb[0].mxu0
        %v687 = vadd.f32 %v544, %v686
        %v688 = vpop.f32.mrb[0].mxu0
        %689 = vmatprep.mubr.bf16.mxu0 0
        %690 = vmatmul.mubr.bf16.gmra.mrb[0].mxu0 %v613
        %v691 = vpop.f32.mrb[0].mxu0
        %v692 = vadd.f32 %v544, %v691
        %v693 = vpop.f32.mrb[0].mxu0
        %v694 = vpop.f32.mrb[0].mxu0
        %v695 = vadd.f32 %v544, %v694
        %v696 = vpop.f32.mrb[0].mxu0
        %697 = vmatprep.mubr.bf16.mxu0 0
        %698 = vmatmul.mubr.bf16.gmra.mrb[0].mxu0 %v616
        %v699 = vpop.f32.mrb[0].mxu0
        %v700 = vadd.f32 %v544, %v699
        %v701 = vpop.f32.mrb[0].mxu0
        %v702 = vpop.f32.mrb[0].mxu0
        %v703 = vadd.f32 %v544, %v702
        %v704 = vpop.f32.mrb[0].mxu0
        %705 = vmatprep.mubr.bf16.mxu0 0
        %706 = vmatmul.mubr.bf16.gmra.mrb[0].mxu0 %v619
        %v707 = vpop.f32.mrb[0].mxu0
        %v708 = vadd.f32 %v544, %v707
        %v709 = vpop.f32.mrb[0].mxu0
        %v710 = vpop.f32.mrb[0].mxu0
        %v711 = vadd.f32 %v544, %v710
        %v712 = vpop.f32.mrb[0].mxu0
        %713 = vmatprep.mubr.bf16.mxu0 0
        %714 = vmatmul.mubr.bf16.gmra.mrb[0].mxu0 %v622
        %v715 = vpop.f32.mrb[0].mxu0
        %v716 = vadd.f32 %v544, %v715
        %v717 = vpop.f32.mrb[0].mxu0
        %v718 = vpop.f32.mrb[0].mxu0
        %v719 = vadd.f32 %v544, %v718
        %v720 = vpop.f32.mrb[0].mxu0
        %721 = vmatprep.mubr.bf16.mxu0 0
        %722 = vmatmul.mubr.bf16.gmra.mrb[0].mxu0 %v625
        %v723 = vpop.f32.mrb[0].mxu0
        %v724 = vadd.f32 %v544, %v723
        %v725 = vpop.f32.mrb[0].mxu0
        %v726 = vpop.f32.mrb[0].mxu0
        %v727 = vadd.f32 %v544, %v726
        %v728 = vpop.f32.mrb[0].mxu0
        %729 = vmatprep.mubr.bf16.mxu0 0
        %730 = vmatmul.mubr.bf16.gmra.mrb[0].mxu0 %v628
        %v731 = vpop.f32.mrb[0].mxu0
        %v732 = vadd.f32 %v544, %v731
        %v733 = vpop.f32.mrb[0].mxu0
        %v734 = vpop.f32.mrb[0].mxu0
        %v735 = vadd.f32 %v544, %v734
        %v736 = vpop.f32.mrb[0].mxu0
        %737 = vmatprep.mubr.bf16.mxu0 0
        %738 = vmatmul.mubr.bf16.gmra.mrb[0].mxu0 %v631
        %v739 = vpop.f32.mrb[0].mxu0
        %v740 = vadd.f32 %v544, %v739
        %v741 = vpop.f32.mrb[0].mxu0
        %v742 = vpop.f32.mrb[0].mxu0
        %v743 = vadd.f32 %v544, %v742
        %v744 = vpop.f32.mrb[0].mxu0
        %745 = vdwg.mxu0
        %v746 = vlaneseq
        %v747 = vshrl.u32 %v746, 7
        %v748 = vadd.s32 %v747, 8
        %p749 = scmp.gt.s32.totalorder %s29, 0
        %s750 = scalar_select %p749, 1, 0
        %v751 = vstv %s750
        %vm752 = vcmp.eq.s32.totalorder %v751, 1
        %p753 = scmp.lt.s32.totalorder %s29, 1
        %s754 = scalar_select %p753, 1, 0
        %v755 = vstv %s754
        %vm756 = vcmp.eq.s32.totalorder %v755, 1
        %vm757 = vcmp.lt.s32.totalorder %v747, 16
        %vm758 = vcmp.lt.s32.totalorder %v748, 16
        %v759 = vsel %vm752, 1, 0
        %v760 = vsel %vm756, 1, 0
        %vm761 = vcmp.eq.s32.totalorder %v759, 1
        %vm762 = vcmp.eq.s32.totalorder %v760, 1
        %v763 = vsel %vm757, 1, 0
        %v764 = vsel %vm758, 1, 0
        %vm765 = vcmp.eq.s32.totalorder %v763, 1
        %vm766 = vcmp.eq.s32.totalorder %v764, 1
        %vm767 = vmand %vm761, %vm765
        %vm768 = vmand %vm761, %vm766
        %vm769 = vmand 1, %vm765
        %vm770 = vmand 1, %vm766
        %vm771 = vmand %vm762, %vm765
        %vm772 = vmand %vm762, %vm766
        %v773 = vsel %vm767, 1, 0
        %v774 = vsel %vm768, 1, 0
        %v775 = vsel %vm769, 1, 0
        %v776 = vsel %vm770, 1, 0
        %v777 = vsel %vm771, 1, 0
        %v778 = vsel %vm772, 1, 0
        %v779 = vcvt.s32.f32 %v773
        %v780 = vcvt.s32.f32 %v774
        %v781 = vcvt.s32.f32 %v775
        %v782 = vcvt.s32.f32 %v776
        %v783 = vcvt.s32.f32 %v777
        %v784 = vcvt.s32.f32 %v778
        %v785 = vmul.f32 %v668, %v779
        %v786 = vmul.f32 %v671, %v780
        %v787 = vmul.f32 %v676, %v781
        %v788 = vmul.f32 %v679, %v782
        %v789 = vmul.f32 %v684, %v781
        %v790 = vmul.f32 %v687, %v782
        %v791 = vmul.f32 %v692, %v781
        %v792 = vmul.f32 %v695, %v782
        %v793 = vmul.f32 %v700, %v781
        %v794 = vmul.f32 %v703, %v782
        %v795 = vmul.f32 %v708, %v781
        %v796 = vmul.f32 %v711, %v782
        %v797 = vmul.f32 %v716, %v781
        %v798 = vmul.f32 %v719, %v782
        %v799 = vmul.f32 %v724, %v781
        %v800 = vmul.f32 %v727, %v782
        %v801 = vmul.f32 %v732, %v781
        %v802 = vmul.f32 %v735, %v782
        %v803 = vmul.f32 %v740, %v783
        %v804 = vmul.f32 %v743, %v784
        %v805 = vrot.slane %v785, 7
        %v806 = vrot.slane %v787, 7
        %v807 = vrot.slane %v789, 7
        %v808 = vrot.slane %v791, 7
        %v809 = vrot.slane %v793, 7
        %v810 = vrot.slane %v795, 7
        %v811 = vrot.slane %v797, 7
        %v812 = vrot.slane %v799, 7
        %v813 = vrot.slane %v801, 7
        %v814 = vrot.slane %v803, 7
        %v815 = vrot.slane %v786, 7
        %v816 = vrot.slane %v788, 7
        %v817 = vrot.slane %v790, 7
        %v818 = vrot.slane %v792, 7
        %v819 = vrot.slane %v794, 7
        %v820 = vrot.slane %v796, 7
        %v821 = vrot.slane %v798, 7
        %v822 = vrot.slane %v800, 7
        %v823 = vrot.slane %v802, 7
        %v824 = vrot.slane %v804, 7
        %vm825 = vcmp.lt.s32.totalorder %v747, 1
        %v826 = vsel %vm825, %v805, %v815
        %v827 = vsel %vm825, %v806, %v816
        %v828 = vsel %vm825, %v807, %v817
        %v829 = vsel %vm825, %v808, %v818
        %v830 = vsel %vm825, %v809, %v819
        %v831 = vsel %vm825, %v810, %v820
        %v832 = vsel %vm825, %v811, %v821
        %v833 = vsel %vm825, %v812, %v822
        %v834 = vsel %vm825, %v813, %v823
        %v835 = vsel %vm825, %v814, %v824
        %v836 = vsel %vm825, %v815, %v805
        %v837 = vsel %vm825, %v816, %v806
        %v838 = vsel %vm825, %v817, %v807
        %v839 = vsel %vm825, %v818, %v808
        %v840 = vsel %vm825, %v819, %v809
        %v841 = vsel %vm825, %v820, %v810
        %v842 = vsel %vm825, %v821, %v811
        %v843 = vsel %vm825, %v822, %v812
        %v844 = vsel %vm825, %v823, %v813
        %v845 = vsel %vm825, %v824, %v814
        %vm846 = vcmp.ne.s32.totalorder %v747, 0
        %vm847 = vcmp.ne.s32.totalorder %v748, 0
        %v848 = vsel %vm846, 1, 0
        %v849 = vsel %vm847, 1, 0
        %v850 = vcvt.s32.f32 %v848
        %v851 = vcvt.s32.f32 %v849
        %v852 = vmul.f32 %v836, %v850
        %v853 = vmul.f32 %v826, %v851
        %v854 = vmul.f32 %v837, %v850
        %v855 = vmul.f32 %v827, %v851
        %v856 = vmul.f32 %v838, %v850
        %v857 = vmul.f32 %v828, %v851
        %v858 = vmul.f32 %v839, %v850
        %v859 = vmul.f32 %v829, %v851
        %v860 = vmul.f32 %v840, %v850
        %v861 = vmul.f32 %v830, %v851
        %v862 = vmul.f32 %v841, %v850
        %v863 = vmul.f32 %v831, %v851
        %v864 = vmul.f32 %v842, %v850
        %v865 = vmul.f32 %v832, %v851
        %v866 = vmul.f32 %v843, %v850
        %v867 = vmul.f32 %v833, %v851
        %v868 = vmul.f32 %v844, %v850
        %v869 = vmul.f32 %v834, %v851
        %v870 = vmul.f32 %v845, %v850
        %v871 = vmul.f32 %v835, %v851
        %v872 = vrot.slane %v785, 1
        %v873 = vrot.slane %v787, 1
        %v874 = vrot.slane %v789, 1
        %v875 = vrot.slane %v791, 1
        %v876 = vrot.slane %v793, 1
        %v877 = vrot.slane %v795, 1
        %v878 = vrot.slane %v797, 1
        %v879 = vrot.slane %v799, 1
        %v880 = vrot.slane %v801, 1
        %v881 = vrot.slane %v803, 1
        %v882 = vrot.slane %v786, 1
        %v883 = vrot.slane %v788, 1
        %v884 = vrot.slane %v790, 1
        %v885 = vrot.slane %v792, 1
        %v886 = vrot.slane %v794, 1
        %v887 = vrot.slane %v796, 1
        %v888 = vrot.slane %v798, 1
        %v889 = vrot.slane %v800, 1
        %v890 = vrot.slane %v802, 1
        %v891 = vrot.slane %v804, 1
        %vm892 = vcmp.lt.s32.totalorder %v747, 7
        %v893 = vsel %vm892, %v872, %v882
        %v894 = vsel %vm892, %v873, %v883
        %v895 = vsel %vm892, %v874, %v884
        %v896 = vsel %vm892, %v875, %v885
        %v897 = vsel %vm892, %v876, %v886
        %v898 = vsel %vm892, %v877, %v887
        %v899 = vsel %vm892, %v878, %v888
        %v900 = vsel %vm892, %v879, %v889
        %v901 = vsel %vm892, %v880, %v890
        %v902 = vsel %vm892, %v881, %v891
        %v903 = vsel %vm892, %v882, %v872
        %v904 = vsel %vm892, %v883, %v873
        %v905 = vsel %vm892, %v884, %v874
        %v906 = vsel %vm892, %v885, %v875
        %v907 = vsel %vm892, %v886, %v876
        %v908 = vsel %vm892, %v887, %v877
        %v909 = vsel %vm892, %v888, %v878
        %v910 = vsel %vm892, %v889, %v879
        %v911 = vsel %vm892, %v890, %v880
        %v912 = vsel %vm892, %v891, %v881
        %vm913 = vcmp.ne.s32.totalorder %v747, 15
        %vm914 = vcmp.ne.s32.totalorder %v748, 15
        %v915 = vsel %vm913, 1, 0
        %v916 = vsel %vm914, 1, 0
        %v917 = vcvt.s32.f32 %v915
        %v918 = vcvt.s32.f32 %v916
        %v919 = vmul.f32 %v893, %v917
        %v920 = vmul.f32 %v903, %v918
        %v921 = vmul.f32 %v894, %v917
        %v922 = vmul.f32 %v904, %v918
        %v923 = vmul.f32 %v895, %v917
        %v924 = vmul.f32 %v905, %v918
        %v925 = vmul.f32 %v896, %v917
        %v926 = vmul.f32 %v906, %v918
        %v927 = vmul.f32 %v897, %v917
        %v928 = vmul.f32 %v907, %v918
        %v929 = vmul.f32 %v898, %v917
        %v930 = vmul.f32 %v908, %v918
        %v931 = vmul.f32 %v899, %v917
        %v932 = vmul.f32 %v909, %v918
        %v933 = vmul.f32 %v900, %v917
        %v934 = vmul.f32 %v910, %v918
        %v935 = vmul.f32 %v901, %v917
        %v936 = vmul.f32 %v911, %v918
        %v937 = vmul.f32 %v902, %v917
        %v938 = vmul.f32 %v912, %v918
        %v939 = vpack.c.bf16 %v853, %v852
        %v940 = vpack.c.bf16 %v855, %v854
        %v941 = vpack.c.bf16 %v857, %v856
        %v942 = vpack.c.bf16 %v859, %v858
        %v943 = vpack.c.bf16 %v861, %v860
        %v944 = vpack.c.bf16 %v863, %v862
        %v945 = vpack.c.bf16 %v865, %v864
        %v946 = vpack.c.bf16 %v867, %v866
        %v947 = vpack.c.bf16 %v869, %v868
        %v948 = vpack.c.bf16 %v871, %v870
        %v949 = vpack.c.bf16 %v786, %v785
        %v950 = vpack.c.bf16 %v788, %v787
        %v951 = vpack.c.bf16 %v790, %v789
        %v952 = vpack.c.bf16 %v792, %v791
        %v953 = vpack.c.bf16 %v794, %v793
        %v954 = vpack.c.bf16 %v796, %v795
        %v955 = vpack.c.bf16 %v798, %v797
        %v956 = vpack.c.bf16 %v800, %v799
        %v957 = vpack.c.bf16 %v802, %v801
        %v958 = vpack.c.bf16 %v804, %v803
        %v959 = vpack.c.bf16 %v920, %v919
        %v960 = vpack.c.bf16 %v922, %v921
        %v961 = vpack.c.bf16 %v924, %v923
        %v962 = vpack.c.bf16 %v926, %v925
        %v963 = vpack.c.bf16 %v928, %v927
        %v964 = vpack.c.bf16 %v930, %v929
        %v965 = vpack.c.bf16 %v932, %v931
        %v966 = vpack.c.bf16 %v934, %v933
        %v967 = vpack.c.bf16 %v936, %v935
        %v968 = vpack.c.bf16 %v938, %v937
        %979 = vrot.lane.b32.xlu0 %v949, 4
        %v980 = vpop.permute.xlu0 %979
        %981 = vrot.lane.b32.xlu0 %v950, 4
        %v982 = vpop.permute.xlu0 %981
        %983 = vrot.lane.b32.xlu0 %v951, 4
        %v984 = vpop.permute.xlu0 %983
        %985 = vrot.lane.b32.xlu0 %v952, 4
        %v986 = vpop.permute.xlu0 %985
        %987 = vrot.lane.b32.xlu0 %v953, 4
        %v988 = vpop.permute.xlu0 %987
        %989 = vrot.lane.b32.xlu0 %v954, 4
        %v990 = vpop.permute.xlu0 %989
        %991 = vrot.lane.b32.xlu0 %v955, 4
        %v992 = vpop.permute.xlu0 %991
        %993 = vrot.lane.b32.xlu0 %v956, 4
        %v994 = vpop.permute.xlu0 %993
        %995 = vrot.lane.b32.xlu0 %v957, 4
        %v996 = vpop.permute.xlu0 %995
        %997 = vrot.lane.b32.xlu0 %v958, 4
        %v998 = vpop.permute.xlu0 %997
        %1009 = vrot.lane.b32.xlu0 %v959, 8
        %v1010 = vpop.permute.xlu0 %1009
        %1011 = vrot.lane.b32.xlu0 %v960, 8
        %v1012 = vpop.permute.xlu0 %1011
        %1013 = vrot.lane.b32.xlu0 %v961, 8
        %v1014 = vpop.permute.xlu0 %1013
        %1015 = vrot.lane.b32.xlu0 %v962, 8
        %v1016 = vpop.permute.xlu0 %1015
        %1017 = vrot.lane.b32.xlu0 %v963, 8
        %v1018 = vpop.permute.xlu0 %1017
        %1019 = vrot.lane.b32.xlu0 %v964, 8
        %v1020 = vpop.permute.xlu0 %1019
        %1021 = vrot.lane.b32.xlu0 %v965, 8
        %v1022 = vpop.permute.xlu0 %1021
        %1023 = vrot.lane.b32.xlu0 %v966, 8
        %v1024 = vpop.permute.xlu0 %1023
        %1025 = vrot.lane.b32.xlu0 %v967, 8
        %v1026 = vpop.permute.xlu0 %1025
        %1027 = vrot.lane.b32.xlu0 %v968, 8
        %v1028 = vpop.permute.xlu0 %1027
        %vm1029 = vcmask 31744
        %v1032 = vsel %vm1029, %v939, %v980
        %v1035 = vsel %vm1029, %v940, %v982
        %v1038 = vsel %vm1029, %v941, %v984
        %v1041 = vsel %vm1029, %v942, %v986
        %v1044 = vsel %vm1029, %v943, %v988
        %v1047 = vsel %vm1029, %v944, %v990
        %v1050 = vsel %vm1029, %v945, %v992
        %v1053 = vsel %vm1029, %v946, %v994
        %v1056 = vsel %vm1029, %v947, %v996
        %v1059 = vsel %vm1029, %v948, %v998
        %vm1060 = vcmask 64512
        %v1062 = vsel %vm1060, %v1032, %v1010
        %v1064 = vsel %vm1060, %v1035, %v1012
        %v1066 = vsel %vm1060, %v1038, %v1014
        %v1068 = vsel %vm1060, %v1041, %v1016
        %v1070 = vsel %vm1060, %v1044, %v1018
        %v1072 = vsel %vm1060, %v1047, %v1020
        %v1074 = vsel %vm1060, %v1050, %v1022
        %v1076 = vsel %vm1060, %v1053, %v1024
        %v1078 = vsel %vm1060, %v1056, %v1026
        %v1080 = vsel %vm1060, %v1059, %v1028
        %v1081 = vld [vmem:[%s5] sm:$0xf]
        %v1082 = vld [vmem:[%s5 + $0x4] sm:$0x3]
        %s1083 = scalar_lea.vmem %s5, 8
        %v1084 = vld [vmem:[%s1083] sm:$0xf]
        %v1085 = vld [vmem:[%s1083 + $0x4] sm:$0x3]
        %v1088 = vunpack.c.l.b16 %v1084
        %v1089 = vunpack.c.l.b16 %v1085
        %v1090 = vpack.c.b16 %v1089, %v1088
        %vm1091 = vcmask 97280
        %v1092 = vsel %vm1091, %v1064, 0
        %v1094 = vsel %vm1091, %v1066, 0
        %v1096 = vsel %vm1091, %v1068, 0
        %v1098 = vsel %vm1091, %v1070, 0
        %v1100 = vsel %vm1091, %v1072, 0
        %v1102 = vsel %vm1091, %v1074, 0
        %v1104 = vsel %vm1091, %v1076, 0
        %v1106 = vsel %vm1091, %v1078, 0
        %vm1108 = vcmask 1045504
        %v1110 = vsel %vm1108, %v1090, 0
        %1112 = vmatprep.subr.bf16.mxu0 0
        %1113 = vmatpush1.bf16.msra.mxu0 %v1110
        %1114 = vmatprep.subr.bf16.mxu0 0
        %1115 = vmatpush1.bf16.msra.mxu0 0
        %1116 = vmatprep.subr.bf16.mxu0 0
        %1117 = vmatpush1.bf16.msra.mxu0 0
        %1118 = vmatprep.subr.bf16.mxu0 0
        %1119 = vmatpush1.bf16.msra.mxu0 0
        %1120 = vmatprep.subr.bf16.mxu0 0
        %1121 = vmatpush1.bf16.msra.mxu0 0
        %1122 = vmatprep.subr.bf16.mxu0 0
        %1123 = vmatpush1.bf16.msra.mxu0 0
        %1124 = vmatprep.subr.bf16.mxu0 0
        %1125 = vmatpush1.bf16.msra.mxu0 0
        %1126 = vmatprep.subr.bf16.mxu0 0
        %1127 = vmatpush1.bf16.msra.mxu0 0
        %1128 = vmatprep.subr.bf16.mxu0 0
        %1129 = vmatpush1.bf16.msra.mxu0 0
        %1130 = vmatprep.subr.bf16.mxu0 0
        %1131 = vmatpush1.bf16.msra.mxu0 0
        %1132 = vmatprep.subr.bf16.mxu0 0
        %1133 = vmatpush1.bf16.msra.mxu0 0
        %1134 = vmatprep.subr.bf16.mxu0 0
        %1135 = vmatpush1.bf16.msra.mxu0 0
        %1136 = vmatprep.subr.bf16.mxu0 0
        %1137 = vmatpush1.bf16.msra.mxu0 0
        %1138 = vmatprep.subr.bf16.mxu0 0
        %1139 = vmatpush1.bf16.msra.mxu0 0
        %1140 = vmatprep.subr.bf16.mxu0 0
        %1141 = vmatpush1.bf16.msra.mxu0 0
        %1142 = vmatprep.subr.bf16.mxu0 0
        %1143 = vmatpush1.bf16.msra.mxu0 0
        %1144 = vmatprep.mubr.bf16.mxu0 0
        %1145 = vmatmul.mubr.bf16.gmra.mrb[0].mxu0 %v1092
        %v1146 = vpop.f32.mrb[0].mxu0
        %v1147 = vadd.f32 0.0, %v1146
        %v1148 = vpop.f32.mrb[0].mxu0
        %v1149 = vpop.f32.mrb[0].mxu0
        %v1150 = vadd.f32 0.0, %v1149
        %v1151 = vpop.f32.mrb[0].mxu0
        %1152 = vmatprep.mubr.bf16.mxu0 0
        %1153 = vmatmul.mubr.bf16.gmra.mrb[0].mxu0 %v1094
        %v1154 = vpop.f32.mrb[0].mxu0
        %v1155 = vadd.f32 0.0, %v1154
        %v1156 = vpop.f32.mrb[0].mxu0
        %v1157 = vpop.f32.mrb[0].mxu0
        %v1158 = vadd.f32 0.0, %v1157
        %v1159 = vpop.f32.mrb[0].mxu0
        %1160 = vmatprep.mubr.bf16.mxu0 0
        %1161 = vmatmul.mubr.bf16.gmra.mrb[0].mxu0 %v1096
        %v1162 = vpop.f32.mrb[0].mxu0
        %v1163 = vadd.f32 0.0, %v1162
        %v1164 = vpop.f32.mrb[0].mxu0
        %v1165 = vpop.f32.mrb[0].mxu0
        %v1166 = vadd.f32 0.0, %v1165
        %v1167 = vpop.f32.mrb[0].mxu0
        %1168 = vmatprep.mubr.bf16.mxu0 0
        %1169 = vmatmul.mubr.bf16.gmra.mrb[0].mxu0 %v1098
        %v1170 = vpop.f32.mrb[0].mxu0
        %v1171 = vadd.f32 0.0, %v1170
        %v1172 = vpop.f32.mrb[0].mxu0
        %v1173 = vpop.f32.mrb[0].mxu0
        %v1174 = vadd.f32 0.0, %v1173
        %v1175 = vpop.f32.mrb[0].mxu0
        %1176 = vmatprep.mubr.bf16.mxu0 0
        %1177 = vmatmul.mubr.bf16.gmra.mrb[0].mxu0 %v1100
        %v1178 = vpop.f32.mrb[0].mxu0
        %v1179 = vadd.f32 0.0, %v1178
        %v1180 = vpop.f32.mrb[0].mxu0
        %v1181 = vpop.f32.mrb[0].mxu0
        %v1182 = vadd.f32 0.0, %v1181
        %v1183 = vpop.f32.mrb[0].mxu0
        %1184 = vmatprep.mubr.bf16.mxu0 0
        %1185 = vmatmul.mubr.bf16.gmra.mrb[0].mxu0 %v1102
        %v1186 = vpop.f32.mrb[0].mxu0
        %v1187 = vadd.f32 0.0, %v1186
        %v1188 = vpop.f32.mrb[0].mxu0
        %v1189 = vpop.f32.mrb[0].mxu0
        %v1190 = vadd.f32 0.0, %v1189
        %v1191 = vpop.f32.mrb[0].mxu0
        %1192 = vmatprep.mubr.bf16.mxu0 0
        %1193 = vmatmul.mubr.bf16.gmra.mrb[0].mxu0 %v1104
        %v1194 = vpop.f32.mrb[0].mxu0
        %v1195 = vadd.f32 0.0, %v1194
        %v1196 = vpop.f32.mrb[0].mxu0
        %v1197 = vpop.f32.mrb[0].mxu0
        %v1198 = vadd.f32 0.0, %v1197
        %v1199 = vpop.f32.mrb[0].mxu0
        %1200 = vmatprep.mubr.bf16.mxu0 0
        %1201 = vmatmul.mubr.bf16.gmra.mrb[0].mxu0 %v1106
        %v1202 = vpop.f32.mrb[0].mxu0
        %v1203 = vadd.f32 0.0, %v1202
        %v1204 = vpop.f32.mrb[0].mxu0
        %v1205 = vpop.f32.mrb[0].mxu0
        %v1206 = vadd.f32 0.0, %v1205
        %v1207 = vpop.f32.mrb[0].mxu0
        %1208 = vdwg.mxu0
        %v1211 = vunpack.c.l.b16 %v1081
        %v1212 = vunpack.c.l.b16 %v1082
        %v1213 = vpack.c.b16 %v1212, %v1211
        %v1214 = vsel %vm1091, %v1062, 0
        %v1217 = vsel %vm1108, %v1213, 0
        %1219 = vmatprep.subr.bf16.mxu0 0
        %1220 = vmatpush1.bf16.msra.mxu0 %v1217
        %1221 = vmatprep.subr.bf16.mxu0 0
        %1222 = vmatpush1.bf16.msra.mxu0 0
        %1223 = vmatprep.subr.bf16.mxu0 0
        %1224 = vmatpush1.bf16.msra.mxu0 0
        %1225 = vmatprep.subr.bf16.mxu0 0
        %1226 = vmatpush1.bf16.msra.mxu0 0
        %1227 = vmatprep.subr.bf16.mxu0 0
        %1228 = vmatpush1.bf16.msra.mxu0 0
        %1229 = vmatprep.subr.bf16.mxu0 0
        %1230 = vmatpush1.bf16.msra.mxu0 0
        %1231 = vmatprep.subr.bf16.mxu0 0
        %1232 = vmatpush1.bf16.msra.mxu0 0
        %1233 = vmatprep.subr.bf16.mxu0 0
        %1234 = vmatpush1.bf16.msra.mxu0 0
        %1235 = vmatprep.subr.bf16.mxu0 0
        %1236 = vmatpush1.bf16.msra.mxu0 0
        %1237 = vmatprep.subr.bf16.mxu0 0
        %1238 = vmatpush1.bf16.msra.mxu0 0
        %1239 = vmatprep.subr.bf16.mxu0 0
        %1240 = vmatpush1.bf16.msra.mxu0 0
        %1241 = vmatprep.subr.bf16.mxu0 0
        %1242 = vmatpush1.bf16.msra.mxu0 0
        %1243 = vmatprep.subr.bf16.mxu0 0
        %1244 = vmatpush1.bf16.msra.mxu0 0
        %1245 = vmatprep.subr.bf16.mxu0 0
        %1246 = vmatpush1.bf16.msra.mxu0 0
        %1247 = vmatprep.subr.bf16.mxu0 0
        %1248 = vmatpush1.bf16.msra.mxu0 0
        %1249 = vmatprep.subr.bf16.mxu0 0
        %1250 = vmatpush1.bf16.msra.mxu0 0
        %1251 = vmatprep.mubr.bf16.mxu0 0
        %1252 = vmatmul.mubr.bf16.gmra.mrb[0].mxu0 %v1214
        %v1253 = vpop.f32.mrb[0].mxu0
        %v1254 = vadd.f32 %v1147, %v1253
        %v1255 = vpop.f32.mrb[0].mxu0
        %v1256 = vpop.f32.mrb[0].mxu0
        %v1257 = vadd.f32 %v1150, %v1256
        %v1258 = vpop.f32.mrb[0].mxu0
        %1259 = vmatprep.mubr.bf16.mxu0 0
        %1260 = vmatmul.mubr.bf16.gmra.mrb[0].mxu0 %v1092
        %v1261 = vpop.f32.mrb[0].mxu0
        %v1262 = vadd.f32 %v1155, %v1261
        %v1263 = vpop.f32.mrb[0].mxu0
        %v1264 = vpop.f32.mrb[0].mxu0
        %v1265 = vadd.f32 %v1158, %v1264
        %v1266 = vpop.f32.mrb[0].mxu0
        %1267 = vmatprep.mubr.bf16.mxu0 0
        %1268 = vmatmul.mubr.bf16.gmra.mrb[0].mxu0 %v1094
        %v1269 = vpop.f32.mrb[0].mxu0
        %v1270 = vadd.f32 %v1163, %v1269
        %v1271 = vpop.f32.mrb[0].mxu0
        %v1272 = vpop.f32.mrb[0].mxu0
        %v1273 = vadd.f32 %v1166, %v1272
        %v1274 = vpop.f32.mrb[0].mxu0
        %1275 = vmatprep.mubr.bf16.mxu0 0
        %1276 = vmatmul.mubr.bf16.gmra.mrb[0].mxu0 %v1096
        %v1277 = vpop.f32.mrb[0].mxu0
        %v1278 = vadd.f32 %v1171, %v1277
        %v1279 = vpop.f32.mrb[0].mxu0
        %v1280 = vpop.f32.mrb[0].mxu0
        %v1281 = vadd.f32 %v1174, %v1280
        %v1282 = vpop.f32.mrb[0].mxu0
        %1283 = vmatprep.mubr.bf16.mxu0 0
        %1284 = vmatmul.mubr.bf16.gmra.mrb[0].mxu0 %v1098
        %v1285 = vpop.f32.mrb[0].mxu0
        %v1286 = vadd.f32 %v1179, %v1285
        %v1287 = vpop.f32.mrb[0].mxu0
        %v1288 = vpop.f32.mrb[0].mxu0
        %v1289 = vadd.f32 %v1182, %v1288
        %v1290 = vpop.f32.mrb[0].mxu0
        %1291 = vmatprep.mubr.bf16.mxu0 0
        %1292 = vmatmul.mubr.bf16.gmra.mrb[0].mxu0 %v1100
        %v1293 = vpop.f32.mrb[0].mxu0
        %v1294 = vadd.f32 %v1187, %v1293
        %v1295 = vpop.f32.mrb[0].mxu0
        %v1296 = vpop.f32.mrb[0].mxu0
        %v1297 = vadd.f32 %v1190, %v1296
        %v1298 = vpop.f32.mrb[0].mxu0
        %1299 = vmatprep.mubr.bf16.mxu0 0
        %1300 = vmatmul.mubr.bf16.gmra.mrb[0].mxu0 %v1102
        %v1301 = vpop.f32.mrb[0].mxu0
        %v1302 = vadd.f32 %v1195, %v1301
        %v1303 = vpop.f32.mrb[0].mxu0
        %v1304 = vpop.f32.mrb[0].mxu0
        %v1305 = vadd.f32 %v1198, %v1304
        %v1306 = vpop.f32.mrb[0].mxu0
        %1307 = vmatprep.mubr.bf16.mxu0 0
        %1308 = vmatmul.mubr.bf16.gmra.mrb[0].mxu0 %v1104
        %v1309 = vpop.f32.mrb[0].mxu0
        %v1310 = vadd.f32 %v1203, %v1309
        %v1311 = vpop.f32.mrb[0].mxu0
        %v1312 = vpop.f32.mrb[0].mxu0
        %v1313 = vadd.f32 %v1206, %v1312
        %v1314 = vpop.f32.mrb[0].mxu0
        %1315 = vdwg.mxu0
        %s1316 = scalar_lea.vmem %s5, 16
        %v1317 = vld [vmem:[%s1316] sm:$0xf]
        %v1318 = vld [vmem:[%s1316 + $0x4] sm:$0x3]
        %v1321 = vunpack.c.l.b16 %v1317
        %v1322 = vunpack.c.l.b16 %v1318
        %v1323 = vpack.c.b16 %v1322, %v1321
        %v1324 = vsel %vm1091, %v1080, 0
        %v1327 = vsel %vm1108, %v1323, 0
        %1329 = vmatprep.subr.bf16.mxu0 0
        %1330 = vmatpush1.bf16.msra.mxu0 %v1327
        %1331 = vmatprep.subr.bf16.mxu0 0
        %1332 = vmatpush1.bf16.msra.mxu0 0
        %1333 = vmatprep.subr.bf16.mxu0 0
        %1334 = vmatpush1.bf16.msra.mxu0 0
        %1335 = vmatprep.subr.bf16.mxu0 0
        %1336 = vmatpush1.bf16.msra.mxu0 0
        %1337 = vmatprep.subr.bf16.mxu0 0
        %1338 = vmatpush1.bf16.msra.mxu0 0
        %1339 = vmatprep.subr.bf16.mxu0 0
        %1340 = vmatpush1.bf16.msra.mxu0 0
        %1341 = vmatprep.subr.bf16.mxu0 0
        %1342 = vmatpush1.bf16.msra.mxu0 0
        %1343 = vmatprep.subr.bf16.mxu0 0
        %1344 = vmatpush1.bf16.msra.mxu0 0
        %1345 = vmatprep.subr.bf16.mxu0 0
        %1346 = vmatpush1.bf16.msra.mxu0 0
        %1347 = vmatprep.subr.bf16.mxu0 0
        %1348 = vmatpush1.bf16.msra.mxu0 0
        %1349 = vmatprep.subr.bf16.mxu0 0
        %1350 = vmatpush1.bf16.msra.mxu0 0
        %1351 = vmatprep.subr.bf16.mxu0 0
        %1352 = vmatpush1.bf16.msra.mxu0 0
        %1353 = vmatprep.subr.bf16.mxu0 0
        %1354 = vmatpush1.bf16.msra.mxu0 0
        %1355 = vmatprep.subr.bf16.mxu0 0
        %1356 = vmatpush1.bf16.msra.mxu0 0
        %1357 = vmatprep.subr.bf16.mxu0 0
        %1358 = vmatpush1.bf16.msra.mxu0 0
        %1359 = vmatprep.subr.bf16.mxu0 0
        %1360 = vmatpush1.bf16.msra.mxu0 0
        %1361 = vmatprep.mubr.bf16.mxu0 0
        %1362 = vmatmul.mubr.bf16.gmra.mrb[0].mxu0 %v1094
        %v1363 = vpop.f32.mrb[0].mxu0
        %v1364 = vadd.f32 0.0, %v1363
        %v1365 = vpop.f32.mrb[0].mxu0
        %v1366 = vpop.f32.mrb[0].mxu0
        %v1367 = vadd.f32 0.0, %v1366
        %v1368 = vpop.f32.mrb[0].mxu0
        %1369 = vmatprep.mubr.bf16.mxu0 0
        %1370 = vmatmul.mubr.bf16.gmra.mrb[0].mxu0 %v1096
        %v1371 = vpop.f32.mrb[0].mxu0
        %v1372 = vadd.f32 0.0, %v1371
        %v1373 = vpop.f32.mrb[0].mxu0
        %v1374 = vpop.f32.mrb[0].mxu0
        %v1375 = vadd.f32 0.0, %v1374
        %v1376 = vpop.f32.mrb[0].mxu0
        %1377 = vmatprep.mubr.bf16.mxu0 0
        %1378 = vmatmul.mubr.bf16.gmra.mrb[0].mxu0 %v1098
        %v1379 = vpop.f32.mrb[0].mxu0
        %v1380 = vadd.f32 0.0, %v1379
        %v1381 = vpop.f32.mrb[0].mxu0
        %v1382 = vpop.f32.mrb[0].mxu0
        %v1383 = vadd.f32 0.0, %v1382
        %v1384 = vpop.f32.mrb[0].mxu0
        %1385 = vmatprep.mubr.bf16.mxu0 0
        %1386 = vmatmul.mubr.bf16.gmra.mrb[0].mxu0 %v1100
        %v1387 = vpop.f32.mrb[0].mxu0
        %v1388 = vadd.f32 0.0, %v1387
        %v1389 = vpop.f32.mrb[0].mxu0
        %v1390 = vpop.f32.mrb[0].mxu0
        %v1391 = vadd.f32 0.0, %v1390
        %v1392 = vpop.f32.mrb[0].mxu0
        %1393 = vmatprep.mubr.bf16.mxu0 0
        %1394 = vmatmul.mubr.bf16.gmra.mrb[0].mxu0 %v1102
        %v1395 = vpop.f32.mrb[0].mxu0
        %v1396 = vadd.f32 0.0, %v1395
        %v1397 = vpop.f32.mrb[0].mxu0
        %v1398 = vpop.f32.mrb[0].mxu0
        %v1399 = vadd.f32 0.0, %v1398
        %v1400 = vpop.f32.mrb[0].mxu0
        %1401 = vmatprep.mubr.bf16.mxu0 0
        %1402 = vmatmul.mubr.bf16.gmra.mrb[0].mxu0 %v1104
        %v1403 = vpop.f32.mrb[0].mxu0
        %v1404 = vadd.f32 0.0, %v1403
        %v1405 = vpop.f32.mrb[0].mxu0
        %v1406 = vpop.f32.mrb[0].mxu0
        %v1407 = vadd.f32 0.0, %v1406
        %v1408 = vpop.f32.mrb[0].mxu0
        %1409 = vmatprep.mubr.bf16.mxu0 0
        %1410 = vmatmul.mubr.bf16.gmra.mrb[0].mxu0 %v1106
        %v1411 = vpop.f32.mrb[0].mxu0
        %v1412 = vadd.f32 0.0, %v1411
        %v1413 = vpop.f32.mrb[0].mxu0
        %v1414 = vpop.f32.mrb[0].mxu0
        %v1415 = vadd.f32 0.0, %v1414
        %v1416 = vpop.f32.mrb[0].mxu0
        %1417 = vmatprep.mubr.bf16.mxu0 0
        %1418 = vmatmul.mubr.bf16.gmra.mrb[0].mxu0 %v1324
        %v1419 = vpop.f32.mrb[0].mxu0
        %v1420 = vadd.f32 0.0, %v1419
        %v1421 = vpop.f32.mrb[0].mxu0
        %v1422 = vpop.f32.mrb[0].mxu0
        %v1423 = vadd.f32 0.0, %v1422
        %v1424 = vpop.f32.mrb[0].mxu0
        %1425 = vdwg.mxu0
        %v1426 = vadd.f32 %v1254, %v1364
        %v1427 = vadd.f32 %v1257, %v1367
        %v1428 = vadd.f32 %v1262, %v1372
        %v1429 = vadd.f32 %v1265, %v1375
        %v1430 = vadd.f32 %v1270, %v1380
        %v1431 = vadd.f32 %v1273, %v1383
        %v1432 = vadd.f32 %v1278, %v1388
        %v1433 = vadd.f32 %v1281, %v1391
        %v1434 = vadd.f32 %v1286, %v1396
        %v1435 = vadd.f32 %v1289, %v1399
        %v1436 = vadd.f32 %v1294, %v1404
        %v1437 = vadd.f32 %v1297, %v1407
        %v1438 = vadd.f32 %v1302, %v1412
        %v1439 = vadd.f32 %v1305, %v1415
        %v1440 = vadd.f32 %v1310, %v1420
        %v1441 = vadd.f32 %v1313, %v1423
        %v1442 = vld [vmem:[%s6] sm:$0x1]
        %v1444 = vlaneseq
        %v1445 = vshrl.u32 %v1444, 7
        %v1446 = vsub.s32 0, %v1445
        %v1447 = vrot.slane %v1442, %v1446
        %v1449 = vadd.f32 %v1426, %v1447
        %v1450 = vadd.f32 %v1427, %v1447
        %v1451 = vadd.f32 %v1428, %v1447
        %v1452 = vadd.f32 %v1429, %v1447
        %v1453 = vadd.f32 %v1430, %v1447
        %v1454 = vadd.f32 %v1431, %v1447
        %v1455 = vadd.f32 %v1432, %v1447
        %v1456 = vadd.f32 %v1433, %v1447
        %v1457 = vadd.f32 %v1434, %v1447
        %v1458 = vadd.f32 %v1435, %v1447
        %v1459 = vadd.f32 %v1436, %v1447
        %v1460 = vadd.f32 %v1437, %v1447
        %v1461 = vadd.f32 %v1438, %v1447
        %v1462 = vadd.f32 %v1439, %v1447
        %v1463 = vadd.f32 %v1440, %v1447
        %v1464 = vadd.f32 %v1441, %v1447
        %vm1465 = vcmp.gt.f32.partialorder %v1449, 0.0
        %vm1466 = vcmp.gt.f32.partialorder %v1450, 0.0
        %vm1467 = vcmp.gt.f32.partialorder %v1451, 0.0
        %vm1468 = vcmp.gt.f32.partialorder %v1452, 0.0
        %vm1469 = vcmp.gt.f32.partialorder %v1453, 0.0
        %vm1470 = vcmp.gt.f32.partialorder %v1454, 0.0
        %vm1471 = vcmp.gt.f32.partialorder %v1455, 0.0
        %vm1472 = vcmp.gt.f32.partialorder %v1456, 0.0
        %vm1473 = vcmp.gt.f32.partialorder %v1457, 0.0
        %vm1474 = vcmp.gt.f32.partialorder %v1458, 0.0
        %vm1475 = vcmp.gt.f32.partialorder %v1459, 0.0
        %vm1476 = vcmp.gt.f32.partialorder %v1460, 0.0
        %vm1477 = vcmp.gt.f32.partialorder %v1461, 0.0
        %vm1478 = vcmp.gt.f32.partialorder %v1462, 0.0
        %vm1479 = vcmp.gt.f32.partialorder %v1463, 0.0
        %vm1480 = vcmp.gt.f32.partialorder %v1464, 0.0
        %v1481 = vld [vmem:[%s7] sm:$0x1]
        %v1483 = vlaneseq
        %v1484 = vshrl.u32 %v1483, 7
        %v1485 = vsub.s32 0, %v1484
        %v1486 = vrot.slane %v1481, %v1485
        %v1488 = vmul.f32 %v1486, %v1449
        %v1489 = vmul.f32 %v1486, %v1450
        %v1490 = vmul.f32 %v1486, %v1451
        %v1491 = vmul.f32 %v1486, %v1452
        %v1492 = vmul.f32 %v1486, %v1453
        %v1493 = vmul.f32 %v1486, %v1454
        %v1494 = vmul.f32 %v1486, %v1455
        %v1495 = vmul.f32 %v1486, %v1456
        %v1496 = vmul.f32 %v1486, %v1457
        %v1497 = vmul.f32 %v1486, %v1458
        %v1498 = vmul.f32 %v1486, %v1459
        %v1499 = vmul.f32 %v1486, %v1460
        %v1500 = vmul.f32 %v1486, %v1461
        %v1501 = vmul.f32 %v1486, %v1462
        %v1502 = vmul.f32 %v1486, %v1463
        %v1503 = vmul.f32 %v1486, %v1464
        %v1504 = vsel %vm1465, %v1449, %v1488
        %v1505 = vsel %vm1466, %v1450, %v1489
        %v1506 = vsel %vm1467, %v1451, %v1490
        %v1507 = vsel %vm1468, %v1452, %v1491
        %v1508 = vsel %vm1469, %v1453, %v1492
        %v1509 = vsel %vm1470, %v1454, %v1493
        %v1510 = vsel %vm1471, %v1455, %v1494
        %v1511 = vsel %vm1472, %v1456, %v1495
        %v1512 = vsel %vm1473, %v1457, %v1496
        %v1513 = vsel %vm1474, %v1458, %v1497
        %v1514 = vsel %vm1475, %v1459, %v1498
        %v1515 = vsel %vm1476, %v1460, %v1499
        %v1516 = vsel %vm1477, %v1461, %v1500
        %v1517 = vsel %vm1478, %v1462, %v1501
        %v1518 = vsel %vm1479, %v1463, %v1502
        %v1519 = vsel %vm1480, %v1464, %v1503
        %v1520 = vpack.c.bf16 %v1505, %v1504
        %v1521 = vpack.c.bf16 %v1507, %v1506
        %v1522 = vpack.c.bf16 %v1509, %v1508
        %v1523 = vpack.c.bf16 %v1511, %v1510
        %v1524 = vpack.c.bf16 %v1513, %v1512
        %v1525 = vpack.c.bf16 %v1515, %v1514
        %v1526 = vpack.c.bf16 %v1517, %v1516
        %v1527 = vpack.c.bf16 %v1519, %v1518
        %v1528 = vld [vmem:[%s8] sm:$0x3]
        %v1529 = vld [vmem:[%s9] sm:$0x1]
        %v1531 = vlaneseq
        %v1532 = vshrl.u32 %v1531, 7
        %v1533 = vsub.s32 0, %v1532
        %v1534 = vrot.slane %v1529, %v1533
        %v1537 = vsel %vm1029, %v1520, 0
        %v1540 = vsel %vm1029, %v1521, 0
        %v1543 = vsel %vm1029, %v1522, 0
        %v1546 = vsel %vm1029, %v1523, 0
        %v1549 = vsel %vm1029, %v1524, 0
        %v1552 = vsel %vm1029, %v1525, 0
        %v1555 = vsel %vm1029, %v1526, 0
        %v1558 = vsel %vm1029, %v1527, 0
        %vm1560 = vcmask 1041408
        %v1562 = vsel %vm1560, %v1528, 0
        %1564 = vmatprep.subr.bf16.mxu0 0
        %1565 = vmatpush1.bf16.msra.mxu0 %v1562
        %1566 = vmatprep.subr.bf16.mxu0 0
        %1567 = vmatpush1.bf16.msra.mxu0 0
        %1568 = vmatprep.subr.bf16.mxu0 0
        %1569 = vmatpush1.bf16.msra.mxu0 0
        %1570 = vmatprep.subr.bf16.mxu0 0
        %1571 = vmatpush1.bf16.msra.mxu0 0
        %1572 = vmatprep.subr.bf16.mxu0 0
        %1573 = vmatpush1.bf16.msra.mxu0 0
        %1574 = vmatprep.subr.bf16.mxu0 0
        %1575 = vmatpush1.bf16.msra.mxu0 0
        %1576 = vmatprep.subr.bf16.mxu0 0
        %1577 = vmatpush1.bf16.msra.mxu0 0
        %1578 = vmatprep.subr.bf16.mxu0 0
        %1579 = vmatpush1.bf16.msra.mxu0 0
        %1580 = vmatprep.subr.bf16.mxu0 0
        %1581 = vmatpush1.bf16.msra.mxu0 0
        %1582 = vmatprep.subr.bf16.mxu0 0
        %1583 = vmatpush1.bf16.msra.mxu0 0
        %1584 = vmatprep.subr.bf16.mxu0 0
        %1585 = vmatpush1.bf16.msra.mxu0 0
        %1586 = vmatprep.subr.bf16.mxu0 0
        %1587 = vmatpush1.bf16.msra.mxu0 0
        %1588 = vmatprep.subr.bf16.mxu0 0
        %1589 = vmatpush1.bf16.msra.mxu0 0
        %1590 = vmatprep.subr.bf16.mxu0 0
        %1591 = vmatpush1.bf16.msra.mxu0 0
        %1592 = vmatprep.subr.bf16.mxu0 0
        %1593 = vmatpush1.bf16.msra.mxu0 0
        %1594 = vmatprep.subr.bf16.mxu0 0
        %1595 = vmatpush1.bf16.msra.mxu0 0
        %1596 = vmatprep.mubr.bf16.mxu0 0
        %1597 = vmatmul.mubr.bf16.gmra.mrb[0].mxu0 %v1537
        %v1598 = vpop.f32.mrb[0].mxu0
        %v1599 = vadd.f32 %v1534, %v1598
        %v1600 = vpop.f32.mrb[0].mxu0
        %v1601 = vpop.f32.mrb[0].mxu0
        %v1602 = vadd.f32 %v1534, %v1601
        %v1603 = vpop.f32.mrb[0].mxu0
        %1604 = vmatprep.mubr.bf16.mxu0 0
        %1605 = vmatmul.mubr.bf16.gmra.mrb[0].mxu0 %v1540
        %v1606 = vpop.f32.mrb[0].mxu0
        %v1607 = vadd.f32 %v1534, %v1606
        %v1608 = vpop.f32.mrb[0].mxu0
        %v1609 = vpop.f32.mrb[0].mxu0
        %v1610 = vadd.f32 %v1534, %v1609
        %v1611 = vpop.f32.mrb[0].mxu0
        %1612 = vmatprep.mubr.bf16.mxu0 0
        %1613 = vmatmul.mubr.bf16.gmra.mrb[0].mxu0 %v1543
        %v1614 = vpop.f32.mrb[0].mxu0
        %v1615 = vadd.f32 %v1534, %v1614
        %v1616 = vpop.f32.mrb[0].mxu0
        %v1617 = vpop.f32.mrb[0].mxu0
        %v1618 = vadd.f32 %v1534, %v1617
        %v1619 = vpop.f32.mrb[0].mxu0
        %1620 = vmatprep.mubr.bf16.mxu0 0
        %1621 = vmatmul.mubr.bf16.gmra.mrb[0].mxu0 %v1546
        %v1622 = vpop.f32.mrb[0].mxu0
        %v1623 = vadd.f32 %v1534, %v1622
        %v1624 = vpop.f32.mrb[0].mxu0
        %v1625 = vpop.f32.mrb[0].mxu0
        %v1626 = vadd.f32 %v1534, %v1625
        %v1627 = vpop.f32.mrb[0].mxu0
        %1628 = vmatprep.mubr.bf16.mxu0 0
        %1629 = vmatmul.mubr.bf16.gmra.mrb[0].mxu0 %v1549
        %v1630 = vpop.f32.mrb[0].mxu0
        %v1631 = vadd.f32 %v1534, %v1630
        %v1632 = vpop.f32.mrb[0].mxu0
        %v1633 = vpop.f32.mrb[0].mxu0
        %v1634 = vadd.f32 %v1534, %v1633
        %v1635 = vpop.f32.mrb[0].mxu0
        %1636 = vmatprep.mubr.bf16.mxu0 0
        %1637 = vmatmul.mubr.bf16.gmra.mrb[0].mxu0 %v1552
        %v1638 = vpop.f32.mrb[0].mxu0
        %v1639 = vadd.f32 %v1534, %v1638
        %v1640 = vpop.f32.mrb[0].mxu0
        %v1641 = vpop.f32.mrb[0].mxu0
        %v1642 = vadd.f32 %v1534, %v1641
        %v1643 = vpop.f32.mrb[0].mxu0
        %1644 = vmatprep.mubr.bf16.mxu0 0
        %1645 = vmatmul.mubr.bf16.gmra.mrb[0].mxu0 %v1555
        %v1646 = vpop.f32.mrb[0].mxu0
        %v1647 = vadd.f32 %v1534, %v1646
        %v1648 = vpop.f32.mrb[0].mxu0
        %v1649 = vpop.f32.mrb[0].mxu0
        %v1650 = vadd.f32 %v1534, %v1649
        %v1651 = vpop.f32.mrb[0].mxu0
        %1652 = vmatprep.mubr.bf16.mxu0 0
        %1653 = vmatmul.mubr.bf16.gmra.mrb[0].mxu0 %v1558
        %v1654 = vpop.f32.mrb[0].mxu0
        %v1655 = vadd.f32 %v1534, %v1654
        %v1656 = vpop.f32.mrb[0].mxu0
        %v1657 = vpop.f32.mrb[0].mxu0
        %v1658 = vadd.f32 %v1534, %v1657
        %v1659 = vpop.f32.mrb[0].mxu0
        %1660 = vdwg.mxu0
        %v1661 = vunpack.c.l.bf16 %v519
        %v1662 = vunpack.c.l.bf16 %v520
        %v1663 = vunpack.c.l.bf16 %v521
        %v1664 = vunpack.c.l.bf16 %v522
        %v1665 = vunpack.c.l.bf16 %v523
        %v1666 = vunpack.c.l.bf16 %v524
        %v1667 = vunpack.c.l.bf16 %v525
        %v1668 = vunpack.c.l.bf16 %v526
        %v1669 = vunpack.c.l.bf16 %v527
        %v1670 = vunpack.c.l.bf16 %v528
        %v1671 = vunpack.c.l.bf16 %v529
        %v1672 = vunpack.c.l.bf16 %v530
        %v1673 = vunpack.c.l.bf16 %v531
        %v1674 = vunpack.c.l.bf16 %v532
        %v1675 = vunpack.c.l.bf16 %v533
        %v1676 = vunpack.c.l.bf16 %v534
        %v1677 = vadd.f32 %v1599, %v1661
        %v1678 = vadd.f32 %v1602, %v1662
        %v1679 = vadd.f32 %v1607, %v1663
        %v1680 = vadd.f32 %v1610, %v1664
        %v1681 = vadd.f32 %v1615, %v1665
        %v1682 = vadd.f32 %v1618, %v1666
        %v1683 = vadd.f32 %v1623, %v1667
        %v1684 = vadd.f32 %v1626, %v1668
        %v1685 = vadd.f32 %v1631, %v1669
        %v1686 = vadd.f32 %v1634, %v1670
        %v1687 = vadd.f32 %v1639, %v1671
        %v1688 = vadd.f32 %v1642, %v1672
        %v1689 = vadd.f32 %v1647, %v1673
        %v1690 = vadd.f32 %v1650, %v1674
        %v1691 = vadd.f32 %v1655, %v1675
        %v1692 = vadd.f32 %v1658, %v1676
        %v1693 = vpack.c.bf16 %v1678, %v1677
        %v1694 = vpack.c.bf16 %v1680, %v1679
        %v1695 = vpack.c.bf16 %v1682, %v1681
        %v1696 = vpack.c.bf16 %v1684, %v1683
        %v1697 = vpack.c.bf16 %v1686, %v1685
        %v1698 = vpack.c.bf16 %v1688, %v1687
        %v1699 = vpack.c.bf16 %v1690, %v1689
        %v1700 = vpack.c.bf16 %v1692, %v1691
        %v1709 = vunpack.c.l.b16 %v1693
        %v1710 = vunpack.c.h.b16 %v1693
        %v1711 = vunpack.c.l.b16 %v1694
        %v1712 = vunpack.c.h.b16 %v1694
        %v1713 = vunpack.c.l.b16 %v1695
        %v1714 = vunpack.c.h.b16 %v1695
        %v1715 = vunpack.c.l.b16 %v1696
        %v1716 = vunpack.c.h.b16 %v1696
        %v1717 = vunpack.c.l.b16 %v1697
        %v1718 = vunpack.c.h.b16 %v1697
        %v1719 = vunpack.c.l.b16 %v1698
        %v1720 = vunpack.c.h.b16 %v1698
        %v1721 = vunpack.c.l.b16 %v1699
        %v1722 = vunpack.c.h.b16 %v1699
        %v1723 = vunpack.c.l.b16 %v1700
        %v1724 = vunpack.c.h.b16 %v1700
        %v1725 = vpack.c.b16 %v1709, %v1709
        %v1726 = vpack.c.b16 %v1710, %v1710
        %v1727 = vpack.c.b16 %v1711, %v1711
        %v1728 = vpack.c.b16 %v1712, %v1712
        %v1729 = vpack.c.b16 %v1713, %v1713
        %v1730 = vpack.c.b16 %v1714, %v1714
        %v1731 = vpack.c.b16 %v1715, %v1715
        %v1732 = vpack.c.b16 %v1716, %v1716
        %v1733 = vpack.c.b16 %v1717, %v1717
        %v1734 = vpack.c.b16 %v1718, %v1718
        %v1735 = vpack.c.b16 %v1719, %v1719
        %v1736 = vpack.c.b16 %v1720, %v1720
        %v1737 = vpack.c.b16 %v1721, %v1721
        %v1738 = vpack.c.b16 %v1722, %v1722
        %v1739 = vpack.c.b16 %v1723, %v1723
        %v1740 = vpack.c.b16 %v1724, %v1724
        %vm1757 = vcmask 125952
        %1758 = vst.msk [vmem:[%s469] sm:$0xf] %vm1757, %v1725
        %1759 = vst.msk [vmem:[%s469 + $0x4] sm:$0xf] %vm1757, %v1726
        %1760 = vst.msk [vmem:[%s469 + $0x8] sm:$0xf] %vm1757, %v1727
        %1761 = vst.msk [vmem:[%s469 + $0xc] sm:$0xf] %vm1757, %v1728
        %1762 = vst.msk [vmem:[%s469 + $0x10] sm:$0xf] %vm1757, %v1729
        %1763 = vst.msk [vmem:[%s469 + $0x14] sm:$0xf] %vm1757, %v1730
        %1764 = vst.msk [vmem:[%s469 + $0x18] sm:$0xf] %vm1757, %v1731
        %1765 = vst.msk [vmem:[%s469 + $0x1c] sm:$0xf] %vm1757, %v1732
        %1766 = vst.msk [vmem:[%s469 + $0x20] sm:$0xf] %vm1757, %v1733
        %1767 = vst.msk [vmem:[%s469 + $0x24] sm:$0xf] %vm1757, %v1734
        %1768 = vst.msk [vmem:[%s469 + $0x28] sm:$0xf] %vm1757, %v1735
        %1769 = vst.msk [vmem:[%s469 + $0x2c] sm:$0xf] %vm1757, %v1736
        %1770 = vst.msk [vmem:[%s469 + $0x30] sm:$0xf] %vm1757, %v1737
        %1771 = vst.msk [vmem:[%s469 + $0x34] sm:$0xf] %vm1757, %v1738
        %1772 = vst.msk [vmem:[%s469 + $0x38] sm:$0xf] %vm1757, %v1739
        %1773 = vst.msk [vmem:[%s469 + $0x3c] sm:$0xf] %vm1757, %v1740
        %s1774 = sand.u32 %s293, 1
        %s1775 = scalar_lea.sflag [#allocation3], %s1774
        %s1776 = sand.u32 %s293, 1
        %s1777 = smul.addr %s1776, 64
        %s1778 = scalar_lea.vmem [#allocation2], %s1777
        // Predicated region
        $region61: #{ibasic_block_first.1} parent=59 // pred_check
          %p1779 = pneg %p303
        $region62: #{ibasic_block_first.1} parent=59 // pred_check_branch
          %1781 = sbr.rel (%p1779) target = $region64
        $region63: #{ibasic_block_first.1} parent=59 // pred_region
          %s1782 = smul.u32 8, %s29
          %s1784 = ssub.s32 1024, 1024
          %1785 = vsyncadd %s1775, %s1784
          %s1786 = smul.addr %s1782, 2
          %s1787 = smul.addr %s28, 32
          %s1788 = sadd.s32 %s1786, %s1787
          %s1789 = smul.addr %s1788, 64
          %s1790 = scalar_lea.hbm %s10, %s1789
          %s1791 = sshll.u32 %s1778, 4
          %s1792 = int_to_ptr.vmem [resolvable:$true] %s1791
          %1797 = dma.vmem_to_hbm [thread:$0]  %s1792, 1024, %s1790, %s1775, 64, 64, 4
        $region64: #{ibasic_block_first.1} parent=59 // pred_fallthru
          _
      $region60: #{ibasic_block_first.1} parent=5 // pred_fallthru
        _
      %p1798 = scmp.le.s32.totalorder 2, %s19
      // Predicated region
      $region65: #{ibasic_block_first.1} parent=5 // pred_check
        %p1799 = pneg %p1798
      $region66: #{ibasic_block_first.1} parent=5 // pred_check_branch
        %1801 = sbr.rel (%p1799) target = $region68
      $region67: #{ibasic_block_first.1} parent=5 // pred_region
        %s1802 = ssub.s32 %s19, 2
        // Predicated region
        $region69: #{ibasic_block_first.1} parent=67 // pred_check
          %p1803 = pneg %p309
        $region70: #{ibasic_block_first.1} parent=67 // pred_check_branch
          %1805 = sbr.rel (%p1803) target = $region72
        $region71: #{ibasic_block_first.1} parent=67 // pred_region
          %s1806 = sand.u32 %s294, 1
          %s1807 = scalar_lea.sflag [#allocation3], %s1806
          %s1808 = sand.u32 %s294, 1
          %s1809 = smul.addr %s1808, 64
          %s1810 = scalar_lea.vmem [#allocation2], %s1809
          %1811 = dma.done %s1807, 1024
        $region72: #{ibasic_block_first.1} parent=67 // pred_fallthru
          _
      $region68: #{ibasic_block_first.1} parent=5 // pred_fallthru
        _
    $region6: #{ibasic_block_first.1} parent=1 // loop_footer
      %s23 = sadd.s32 1, %s19
    $region7: #{ibasic_block_first.1} parent=1 // loop_footer_branch
      %18 = sbr.rel target = $region3
    $region8: #{ibasic_block_first.1} parent=1 // loop_exit
      _
    %1812 = vsyncpa [#allocation3], 1
    %s1813 = scalar_lea.sflag [#allocation3], 1
    %1814 = vsyncpa %s1813, 1

// kernel: ibasic_block_first.1
$region0: #{ibasic_block_first.1}
  #allocation0 [shape = 'u32[]', space=smem, size = 0x4, offset = 0x4, fixed_abs, tag = 'smem constant byte address 0x4 - core index']
  #allocation1 [shape = 'u32[144,128]{1,0:T(1,128)}', space=vmem, size = 0x12000, scoped, tag = 'internal scratch']
  %s0 = inlined_call_operand.hbm [shape: bf16[2,16,16,16], index: 0, kind: input, shape index: {}, may-alias: {0,1,2}]
  %s1 = inlined_call_operand.hbm [shape: bf16[2,16,16,16], index: 1, kind: input, shape index: {}, may-alias: {0,1,2}]
  %s2 = inlined_call_operand.hbm [shape: bf16[2,16,16,16], index: 2, kind: input, shape index: {}, may-alias: {0,1,2}]
  %s3 = inlined_call_operand.vmem [shape: bf16[16,4], index: 3, kind: input, shape index: {}]
  %s4 = inlined_call_operand.vmem [shape: f32[1,4], index: 4, kind: input, shape index: {}]
  %s5 = inlined_call_operand.vmem [shape: bf16[3,3,4,4], index: 5, kind: input, shape index: {}]
  %s6 = inlined_call_operand.vmem [shape: f32[1,4], index: 6, kind: input, shape index: {}]
  %s7 = inlined_call_operand.vmem [shape: f32[1,4], index: 7, kind: input, shape index: {}]
  %s8 = inlined_call_operand.vmem [shape: bf16[4,16], index: 8, kind: input, shape index: {}]
  %s9 = inlined_call_operand.vmem [shape: f32[1,16], index: 9, kind: input, shape index: {}]
  %s10 = inlined_call_operand.hbm [shape: bf16[2,16,16,16], index: 10, kind: output, shape index: {}]
  %s11 = sld [smem:[#allocation0]]
  $region85: #{ibasic_block_first.1} parent=0
    _
  %s13 = ssub.s32 1, %s11
  %s14 = scalar_select 0, %s13, %s11
  $region1: #{ibasic_block_first.1} parent=0
    #allocation2 [shape = 'u8[65536]{0}', space=vmem, size = 0x10000, scoped, tag = 'input window, operand 0']
    #allocation3 [shape = 's32[2]{0}', space=sflag, size = 0x8, scoped, tag = 'scoped memory for ibasic_block_first.1']
    #allocation4 [shape = 's32[2]{0}', space=sflag, size = 0x8, scoped, tag = 'scoped memory for ibasic_block_first.1']
    #allocation5 [shape = 'u8[8192]{0}', space=vmem, size = 0x2000, scoped, tag = 'input window, operand 1']
    #allocation6 [shape = 's32[2]{0}', space=sflag, size = 0x8, scoped, tag = 'scoped memory for ibasic_block_first.1']
    #allocation7 [shape = 'u8[8192]{0}', space=vmem, size = 0x2000, scoped, tag = 'input window, operand 2']
    #allocation8 [shape = 'u8[65536]{0}', space=vmem, size = 0x10000, scoped, tag = 'output window, operand 0']
    %15 = vsyncpa [#allocation3], 0
    %s16 = scalar_lea.sflag [#allocation3], 1
    %17 = vsyncpa %s16, 0
    %18 = vsyncpa [#allocation6], 0
    %s19 = scalar_lea.sflag [#allocation6], 1
    %20 = vsyncpa %s19, 0
    %21 = vsyncpa [#allocation4], 0
    %s22 = scalar_lea.sflag [#allocation4], 1
    %23 = vsyncpa %s22, 0
    loop: start=0, step=1, limit=6
    $region2: #{ibasic_block_first.1} parent=1 // loop_pre_header
      _
    $region3: #{ibasic_block_first.1} parent=1 // loop_header
      %s25 = sphi 0, %s29
      %p26 = scmp.ge.s32.totalorder %s25, 6
      %s32 = sphi 0, %s44
      %s33 = sphi 0, %s40
      %s34 = sphi 0, %s32
      %s35 = sphi 0, %s33
      %s36 = sphi 0, %s34
      %s37 = sphi 0, %s35
      %s49 = sphi 0, %s51
      %s52 = sphi 0, %s49
      %s53 = sphi 0, %s52
      %s69 = sphi 0, %s53
      %s85 = sphi 0, %s87
      %s88 = sphi 0, %s85
      %s89 = sphi 0, %s88
      %s105 = sphi 0, %s89
      %s121 = sphi 0, %s123
      %s124 = sphi 0, %s121
      %s125 = sphi 0, %s124
      %s141 = sphi 0, %s125
      %s145 = sphi 0, %s145
      %s147 = sphi 0, %s145
      %s148 = sphi 0, %s147
      %s162 = sphi 0, %s148
      %s166 = sphi 0, %s166
      %s168 = sphi 0, %s166
      %s169 = sphi 0, %s168
      %s183 = sphi 0, %s169
      %s187 = sphi 0, %s187
      %s189 = sphi 0, %s187
      %s190 = sphi 0, %s189
      %s204 = sphi 0, %s190
      %s208 = sphi 0, %s208
      %s210 = sphi 0, %s208
      %s211 = sphi 0, %s210
      %s225 = sphi 0, %s211
      %s229 = sphi 0, %s229
      %s231 = sphi 0, %s229
      %s232 = sphi 0, %s231
      %s246 = sphi 0, %s232
      %s250 = sphi 0, %s250
      %s252 = sphi 0, %s250
      %s253 = sphi 0, %s252
      %s267 = sphi 0, %s253
      %s271 = sphi 0, %s271
      %s273 = sphi 0, %s271
      %s274 = sphi 0, %s273
      %s288 = sphi 0, %s274
      %s296 = sphi 0, %s298
      %s299 = sphi 0, %s296
      %s300 = sphi 0, %s299
      %s316 = sphi 0, %s300
    $region4: #{ibasic_block_first.1} parent=1 // loop_header_branch
      %28 = sbr.rel (%p26) target = $region8
    $region5: #{ibasic_block_first.1} parent=1 // loop_body
      %s30 = ssub.s32 %s25, 1
      %s31 = ssub.s32 %s25, 2
      %s38 = sadd.s32 1, %s33
      %p39 = scmp.ge.s32.totalorder %s38, 2
      %s40 = scalar_select %p39, 0, %s38
      %s41 = sadd.s32 1, %s32
      %s42 = scalar_select %p39, %s41, %s32
      %p43 = scmp.ge.s32.totalorder %s42, 2
      %s44 = scalar_select %p43, 0, %s42
      %s45 = ssub.s32 %s32, %s44
      %s46 = ssub.s32 %s33, %s40
      %s47 = sor.u32 %s45, %s46
      %p48 = scmp.eq.s32.totalorder %s47, 0
      %s50 = sadd.s32 %s49, 1
      %s51 = scalar_select %p48, %s49, %s50
      %p54 = pneg %p48
      %p55 = scmp.eq.s32.totalorder %s25, 3
      %p56 = por %p54, %p55
      %p57 = scmp.ne.s32.totalorder %s49, %s52
      %p58 = scmp.eq.s32.totalorder %s25, 0
      %p59 = por %p57, %p58
      %p60 = scmp.ne.s32.totalorder %s49, %s52
      %p61 = scmp.eq.s32.totalorder %s30, 3
      %p62 = por %p60, %p61
      %p63 = scmp.ne.s32.totalorder %s52, %s53
      %p64 = scmp.eq.s32.totalorder %s30, 0
      %p65 = por %p63, %p64
      %p66 = scmp.ne.s32.totalorder %s52, %s53
      %p67 = scmp.eq.s32.totalorder %s31, 3
      %p68 = por %p66, %p67
      %p70 = scmp.ne.s32.totalorder %s53, %s69
      %p71 = scmp.eq.s32.totalorder %s31, 0
      %p72 = por %p70, %p71
      %s73 = smul.u32 %s33, 8
      %s74 = ssub.s32 %s73, 1
      %p75 = scmp.gt.s32.totalorder %s74, 0
      %s76 = scalar_select %p75, %s74, 0
      %s77 = smul.u32 %s40, 8
      %s78 = ssub.s32 %s77, 1
      %p79 = scmp.gt.s32.totalorder %s78, 0
      %s80 = scalar_select %p79, %s78, 0
      %s81 = ssub.s32 %s32, %s44
      %s82 = ssub.s32 %s76, %s80
      %s83 = sor.u32 %s81, %s82
      %p84 = scmp.eq.s32.totalorder %s83, 0
      %s86 = sadd.s32 %s85, 1
      %s87 = scalar_select %p84, %s85, %s86
      %p90 = pneg %p84
      %p91 = scmp.eq.s32.totalorder %s25, 3
      %p92 = por %p90, %p91
      %p93 = scmp.ne.s32.totalorder %s85, %s88
      %p94 = scmp.eq.s32.totalorder %s25, 0
      %p95 = por %p93, %p94
      %p96 = scmp.ne.s32.totalorder %s85, %s88
      %p97 = scmp.eq.s32.totalorder %s30, 3
      %p98 = por %p96, %p97
      %p99 = scmp.ne.s32.totalorder %s88, %s89
      %p100 = scmp.eq.s32.totalorder %s30, 0
      %p101 = por %p99, %p100
      %p102 = scmp.ne.s32.totalorder %s88, %s89
      %p103 = scmp.eq.s32.totalorder %s31, 3
      %p104 = por %p102, %p103
      %p106 = scmp.ne.s32.totalorder %s89, %s105
      %p107 = scmp.eq.s32.totalorder %s31, 0
      %p108 = por %p106, %p107
      %s109 = sadd.s32 %s33, 1
      %s110 = smul.u32 %s109, 8
      %p111 = scmp.lt.s32.totalorder %s110, 15
      %s112 = scalar_select %p111, %s110, 15
      %s113 = sadd.s32 %s40, 1
      %s114 = smul.u32 %s113, 8
      %p115 = scmp.lt.s32.totalorder %s114, 15
      %s116 = scalar_select %p115, %s114, 15
      %s117 = ssub.s32 %s32, %s44
      %s118 = ssub.s32 %s112, %s116
      %s119 = sor.u32 %s117, %s118
      %p120 = scmp.eq.s32.totalorder %s119, 0
      %s122 = sadd.s32 %s121, 1
      %s123 = scalar_select %p120, %s121, %s122
      %p126 = pneg %p120
      %p127 = scmp.eq.s32.totalorder %s25, 3
      %p128 = por %p126, %p127
      %p129 = scmp.ne.s32.totalorder %s121, %s124
      %p130 = scmp.eq.s32.totalorder %s25, 0
      %p131 = por %p129, %p130
      %p132 = scmp.ne.s32.totalorder %s121, %s124
      %p133 = scmp.eq.s32.totalorder %s30, 3
      %p134 = por %p132, %p133
      %p135 = scmp.ne.s32.totalorder %s124, %s125
      %p136 = scmp.eq.s32.totalorder %s30, 0
      %p137 = por %p135, %p136
      %p138 = scmp.ne.s32.totalorder %s124, %s125
      %p139 = scmp.eq.s32.totalorder %s31, 3
      %p140 = por %p138, %p139
      %p142 = scmp.ne.s32.totalorder %s125, %s141
      %p143 = scmp.eq.s32.totalorder %s31, 0
      %p144 = por %p142, %p143
      %s146 = sadd.s32 %s145, 1
      %p149 = scmp.eq.s32.totalorder %s25, 3
      %p150 = scmp.ne.s32.totalorder %s145, %s147
      %p151 = scmp.eq.s32.totalorder %s25, 0
      %p152 = por %p150, %p151
      %p153 = scmp.ne.s32.totalorder %s145, %s147
      %p154 = scmp.eq.s32.totalorder %s30, 3
      %p155 = por %p153, %p154
      %p156 = scmp.ne.s32.totalorder %s147, %s148
      %p157 = scmp.eq.s32.totalorder %s30, 0
      %p158 = por %p156, %p157
      %p159 = scmp.ne.s32.totalorder %s147, %s148
      %p160 = scmp.eq.s32.totalorder %s31, 3
      %p161 = por %p159, %p160
      %p163 = scmp.ne.s32.totalorder %s148, %s162
      %p164 = scmp.eq.s32.totalorder %s31, 0
      %p165 = por %p163, %p164
      %s167 = sadd.s32 %s166, 1
      %p170 = scmp.eq.s32.totalorder %s25, 3
      %p171 = scmp.ne.s32.totalorder %s166, %s168
      %p172 = scmp.eq.s32.totalorder %s25, 0
      %p173 = por %p171, %p172
      %p174 = scmp.ne.s32.totalorder %s166, %s168
      %p175 = scmp.eq.s32.totalorder %s30, 3
      %p176 = por %p174, %p175
      %p177 = scmp.ne.s32.totalorder %s168, %s169
      %p178 = scmp.eq.s32.totalorder %s30, 0
      %p179 = por %p177, %p178
      %p180 = scmp.ne.s32.totalorder %s168, %s169
      %p181 = scmp.eq.s32.totalorder %s31, 3
      %p182 = por %p180, %p181
      %p184 = scmp.ne.s32.totalorder %s169, %s183
      %p185 = scmp.eq.s32.totalorder %s31, 0
      %p186 = por %p184, %p185
      %s188 = sadd.s32 %s187, 1
      %p191 = scmp.eq.s32.totalorder %s25, 3
      %p192 = scmp.ne.s32.totalorder %s187, %s189
      %p193 = scmp.eq.s32.totalorder %s25, 0
      %p194 = por %p192, %p193
      %p195 = scmp.ne.s32.totalorder %s187, %s189
      %p196 = scmp.eq.s32.totalorder %s30, 3
      %p197 = por %p195, %p196
      %p198 = scmp.ne.s32.totalorder %s189, %s190
      %p199 = scmp.eq.s32.totalorder %s30, 0
      %p200 = por %p198, %p199
      %p201 = scmp.ne.s32.totalorder %s189, %s190
      %p202 = scmp.eq.s32.totalorder %s31, 3
      %p203 = por %p201, %p202
      %p205 = scmp.ne.s32.totalorder %s190, %s204
      %p206 = scmp.eq.s32.totalorder %s31, 0
      %p207 = por %p205, %p206
      %s209 = sadd.s32 %s208, 1
      %p212 = scmp.eq.s32.totalorder %s25, 3
      %p213 = scmp.ne.s32.totalorder %s208, %s210
      %p214 = scmp.eq.s32.totalorder %s25, 0
      %p215 = por %p213, %p214
      %p216 = scmp.ne.s32.totalorder %s208, %s210
      %p217 = scmp.eq.s32.totalorder %s30, 3
      %p218 = por %p216, %p217
      %p219 = scmp.ne.s32.totalorder %s210, %s211
      %p220 = scmp.eq.s32.totalorder %s30, 0
      %p221 = por %p219, %p220
      %p222 = scmp.ne.s32.totalorder %s210, %s211
      %p223 = scmp.eq.s32.totalorder %s31, 3
      %p224 = por %p222, %p223
      %p226 = scmp.ne.s32.totalorder %s211, %s225
      %p227 = scmp.eq.s32.totalorder %s31, 0
      %p228 = por %p226, %p227
      %s230 = sadd.s32 %s229, 1
      %p233 = scmp.eq.s32.totalorder %s25, 3
      %p234 = scmp.ne.s32.totalorder %s229, %s231
      %p235 = scmp.eq.s32.totalorder %s25, 0
      %p236 = por %p234, %p235
      %p237 = scmp.ne.s32.totalorder %s229, %s231
      %p238 = scmp.eq.s32.totalorder %s30, 3
      %p239 = por %p237, %p238
      %p240 = scmp.ne.s32.totalorder %s231, %s232
      %p241 = scmp.eq.s32.totalorder %s30, 0
      %p242 = por %p240, %p241
      %p243 = scmp.ne.s32.totalorder %s231, %s232
      %p244 = scmp.eq.s32.totalorder %s31, 3
      %p245 = por %p243, %p244
      %p247 = scmp.ne.s32.totalorder %s232, %s246
      %p248 = scmp.eq.s32.totalorder %s31, 0
      %p249 = por %p247, %p248
      %s251 = sadd.s32 %s250, 1
      %p254 = scmp.eq.s32.totalorder %s25, 3
      %p255 = scmp.ne.s32.totalorder %s250, %s252
      %p256 = scmp.eq.s32.totalorder %s25, 0
      %p257 = por %p255, %p256
      %p258 = scmp.ne.s32.totalorder %s250, %s252
      %p259 = scmp.eq.s32.totalorder %s30, 3
      %p260 = por %p258, %p259
      %p261 = scmp.ne.s32.totalorder %s252, %s253
      %p262 = scmp.eq.s32.totalorder %s30, 0
      %p263 = por %p261, %p262
      %p264 = scmp.ne.s32.totalorder %s252, %s253
      %p265 = scmp.eq.s32.totalorder %s31, 3
      %p266 = por %p264, %p265
      %p268 = scmp.ne.s32.totalorder %s253, %s267
      %p269 = scmp.eq.s32.totalorder %s31, 0
      %p270 = por %p268, %p269
      %s272 = sadd.s32 %s271, 1
      %p275 = scmp.eq.s32.totalorder %s25, 3
      %p276 = scmp.ne.s32.totalorder %s271, %s273
      %p277 = scmp.eq.s32.totalorder %s25, 0
      %p278 = por %p276, %p277
      %p279 = scmp.ne.s32.totalorder %s271, %s273
      %p280 = scmp.eq.s32.totalorder %s30, 3
      %p281 = por %p279, %p280
      %p282 = scmp.ne.s32.totalorder %s273, %s274
      %p283 = scmp.eq.s32.totalorder %s30, 0
      %p284 = por %p282, %p283
      %p285 = scmp.ne.s32.totalorder %s273, %s274
      %p286 = scmp.eq.s32.totalorder %s31, 3
      %p287 = por %p285, %p286
      %p289 = scmp.ne.s32.totalorder %s274, %s288
      %p290 = scmp.eq.s32.totalorder %s31, 0
      %p291 = por %p289, %p290
      %s292 = ssub.s32 %s32, %s44
      %s293 = ssub.s32 %s33, %s40
      %s294 = sor.u32 %s292, %s293
      %p295 = scmp.eq.s32.totalorder %s294, 0
      %s297 = sadd.s32 %s296, 1
      %s298 = scalar_select %p295, %s296, %s297
      %p301 = pneg %p295
      %p302 = scmp.eq.s32.totalorder %s25, 3
      %p303 = por %p301, %p302
      %p304 = scmp.ne.s32.totalorder %s296, %s299
      %p305 = scmp.eq.s32.totalorder %s25, 0
      %p306 = por %p304, %p305
      %p307 = scmp.ne.s32.totalorder %s296, %s299
      %p308 = scmp.eq.s32.totalorder %s30, 3
      %p309 = por %p307, %p308
      %p310 = scmp.ne.s32.totalorder %s299, %s300
      %p311 = scmp.eq.s32.totalorder %s30, 0
      %p312 = por %p310, %p311
      %p313 = scmp.ne.s32.totalorder %s299, %s300
      %p314 = scmp.eq.s32.totalorder %s31, 3
      %p315 = por %p313, %p314
      %p317 = scmp.ne.s32.totalorder %s300, %s316
      %p318 = scmp.eq.s32.totalorder %s31, 0
      %p319 = por %p317, %p318
      %p320 = scmp.le.s32.totalorder 1, %s25
      %p321 = scmp.lt.s32.totalorder %s25, 5
      %p322 = pnand %p320, %p321
      %p323 = pneg %p322
      // Predicated region
      $region9: #{ibasic_block_first.1} parent=5 // pred_check
        _
      $region10: #{ibasic_block_first.1} parent=5 // pred_check_branch
        %325 = sbr.rel (%p322) target = $region12
      $region11: #{ibasic_block_first.1} parent=5 // pred_region
        %s326 = ssub.s32 %s25, 1
        // Predicated region
        $region13: #{ibasic_block_first.1} parent=11 // pred_check
          %p327 = pneg %p158
        $region14: #{ibasic_block_first.1} parent=11 // pred_check_branch
          %329 = sbr.rel (%p327) target = $region16
        $region15: #{ibasic_block_first.1} parent=11 // pred_region
          _
        $region16: #{ibasic_block_first.1} parent=11 // pred_fallthru
          _
        // Predicated region
        $region17: #{ibasic_block_first.1} parent=11 // pred_check
          %p330 = pneg %p179
        $region18: #{ibasic_block_first.1} parent=11 // pred_check_branch
          %332 = sbr.rel (%p330) target = $region20
        $region19: #{ibasic_block_first.1} parent=11 // pred_region
          _
        $region20: #{ibasic_block_first.1} parent=11 // pred_fallthru
          _
        // Predicated region
        $region21: #{ibasic_block_first.1} parent=11 // pred_check
          %p333 = pneg %p200
        $region22: #{ibasic_block_first.1} parent=11 // pred_check_branch
          %335 = sbr.rel (%p333) target = $region24
        $region23: #{ibasic_block_first.1} parent=11 // pred_region
          _
        $region24: #{ibasic_block_first.1} parent=11 // pred_fallthru
          _
        // Predicated region
        $region25: #{ibasic_block_first.1} parent=11 // pred_check
          %p336 = pneg %p221
        $region26: #{ibasic_block_first.1} parent=11 // pred_check_branch
          %338 = sbr.rel (%p336) target = $region28
        $region27: #{ibasic_block_first.1} parent=11 // pred_region
          _
        $region28: #{ibasic_block_first.1} parent=11 // pred_fallthru
          _
        // Predicated region
        $region29: #{ibasic_block_first.1} parent=11 // pred_check
          %p339 = pneg %p242
        $region30: #{ibasic_block_first.1} parent=11 // pred_check_branch
          %341 = sbr.rel (%p339) target = $region32
        $region31: #{ibasic_block_first.1} parent=11 // pred_region
          _
        $region32: #{ibasic_block_first.1} parent=11 // pred_fallthru
          _
        // Predicated region
        $region33: #{ibasic_block_first.1} parent=11 // pred_check
          %p342 = pneg %p263
        $region34: #{ibasic_block_first.1} parent=11 // pred_check_branch
          %344 = sbr.rel (%p342) target = $region36
        $region35: #{ibasic_block_first.1} parent=11 // pred_region
          _
        $region36: #{ibasic_block_first.1} parent=11 // pred_fallthru
          _
        // Predicated region
        $region37: #{ibasic_block_first.1} parent=11 // pred_check
          %p345 = pneg %p284
        $region38: #{ibasic_block_first.1} parent=11 // pred_check_branch
          %347 = sbr.rel (%p345) target = $region40
        $region39: #{ibasic_block_first.1} parent=11 // pred_region
          _
        $region40: #{ibasic_block_first.1} parent=11 // pred_fallthru
          _
      $region12: #{ibasic_block_first.1} parent=5 // pred_fallthru
        _
      %p348 = scmp.lt.s32.totalorder %s25, 4
      // Predicated region
      $region41: #{ibasic_block_first.1} parent=5 // pred_check
        %p349 = pneg %p348
      $region42: #{ibasic_block_first.1} parent=5 // pred_check_branch
        %351 = sbr.rel (%p349) target = $region44
      $region43: #{ibasic_block_first.1} parent=5 // pred_region
        // Predicated region
        $region45: #{ibasic_block_first.1} parent=43 // pred_check
          %p352 = pneg %p59
        $region46: #{ibasic_block_first.1} parent=43 // pred_check_branch
          %354 = sbr.rel (%p352) target = $region48
        $region47: #{ibasic_block_first.1} parent=43 // pred_region
          %s355 = sand.u32 %s49, 1
          %s356 = scalar_lea.sflag [#allocation3], %s355
          %s357 = sand.u32 %s49, 1
          %s358 = smul.addr %s357, 64
          %s359 = scalar_lea.vmem [#allocation2], %s358
          %s360 = smul.u32 8, %s33
          %s362 = ssub.s32 1024, 1024
          %363 = vsyncadd %s356, %s362
          %s364 = smul.addr %s360, 2
          %s365 = smul.addr %s32, 32
          %s366 = sadd.s32 %s364, %s365
          %s367 = smul.addr %s366, 64
          %s368 = scalar_lea.hbm %s0, %s367
          %s369 = sshll.u32 %s359, 4
          %s370 = int_to_ptr.vmem [resolvable:$true] %s369
          %375 = dma.hbm_to_vmem [thread:$0]  %s368, 1024, %s370, %s356, 64, 64, 4
        $region48: #{ibasic_block_first.1} parent=43 // pred_fallthru
          _
        // Predicated region
        $region49: #{ibasic_block_first.1} parent=43 // pred_check
          %p376 = pneg %p95
        $region50: #{ibasic_block_first.1} parent=43 // pred_check_branch
          %378 = sbr.rel (%p376) target = $region52
        $region51: #{ibasic_block_first.1} parent=43 // pred_region
          %s379 = sand.u32 %s25, 1
          %s380 = scalar_lea.sflag [#allocation6], %s379
          %s381 = sand.u32 %s85, 1
          %s382 = smul.addr %s381, 8
          %s383 = scalar_lea.vmem [#allocation5], %s382
          %s384 = smul.u32 %s33, 8
          %s385 = ssub.s32 %s384, 1
          %p386 = scmp.gt.s32.totalorder %s385, 0
          %s387 = scalar_select %p386, %s385, 0
          %s389 = ssub.s32 128, 128
          %390 = vsyncadd %s380, %s389
          %s391 = smul.addr %s387, 2
          %s392 = smul.addr %s32, 32
          %s393 = sadd.s32 %s391, %s392
          %s394 = smul.addr %s393, 64
          %s395 = scalar_lea.hbm %s1, %s394
          %s396 = sshll.u32 %s383, 4
          %s397 = int_to_ptr.vmem [resolvable:$true] %s396
          %402 = dma.hbm_to_vmem [thread:$0]  %s395, 128, %s397, %s380, 64, 64, 4
        $region52: #{ibasic_block_first.1} parent=43 // pred_fallthru
          _
        // Predicated region
        $region53: #{ibasic_block_first.1} parent=43 // pred_check
          %p403 = pneg %p131
        $region54: #{ibasic_block_first.1} parent=43 // pred_check_branch
          %405 = sbr.rel (%p403) target = $region56
        $region55: #{ibasic_block_first.1} parent=43 // pred_region
          %s406 = sand.u32 %s25, 1
          %s407 = scalar_lea.sflag [#allocation6], %s406
          %s408 = sand.u32 %s121, 1
          %s409 = smul.addr %s408, 8
          %s410 = scalar_lea.vmem [#allocation7], %s409
          %s411 = sadd.s32 %s33, 1
          %s412 = smul.u32 %s411, 8
          %p413 = scmp.lt.s32.totalorder %s412, 15
          %s414 = scalar_select %p413, %s412, 15
          %s416 = ssub.s32 128, 128
          %417 = vsyncadd %s407, %s416
          %s418 = smul.addr %s414, 2
          %s419 = smul.addr %s32, 32
          %s420 = sadd.s32 %s418, %s419
          %s421 = smul.addr %s420, 64
          %s422 = scalar_lea.hbm %s2, %s421
          %s423 = sshll.u32 %s410, 4
          %s424 = int_to_ptr.vmem [resolvable:$true] %s423
          %429 = dma.hbm_to_vmem [thread:$0]  %s422, 128, %s424, %s407, 64, 64, 4
        $region56: #{ibasic_block_first.1} parent=43 // pred_fallthru
          _
      $region44: #{ibasic_block_first.1} parent=5 // pred_fallthru
        _
      %p430 = scmp.le.s32.totalorder 1, %s25
      %p431 = scmp.lt.s32.totalorder %s25, 5
      %p432 = pnand %p430, %p431
      %p433 = pneg %p432
      // Predicated region
      $region57: #{ibasic_block_first.1} parent=5 // pred_check
        _
      $region58: #{ibasic_block_first.1} parent=5 // pred_check_branch
        %435 = sbr.rel (%p432) target = $region60
      $region59: #{ibasic_block_first.1} parent=5 // pred_region
        %s436 = ssub.s32 %s25, 1
        %s437 = sand.u32 %s52, 1
        %s438 = scalar_lea.sflag [#allocation3], %s437
        %s439 = sand.u32 %s52, 1
        %s440 = smul.addr %s439, 64
        %s441 = scalar_lea.vmem [#allocation2], %s440
        // Predicated region
        $region61: #{ibasic_block_first.1} parent=59 // pred_check
          %p442 = pneg %p65
        $region62: #{ibasic_block_first.1} parent=59 // pred_check_branch
          %444 = sbr.rel (%p442) target = $region64
        $region63: #{ibasic_block_first.1} parent=59 // pred_region
          %445 = dma.done %s438, 1024
        $region64: #{ibasic_block_first.1} parent=59 // pred_fallthru
          _
        %s446 = sand.u32 %s30, 1
        %s447 = scalar_lea.sflag [#allocation6], %s446
        %s448 = sand.u32 %s88, 1
        %s449 = smul.addr %s448, 8
        %s450 = scalar_lea.vmem [#allocation5], %s449
        // Predicated region
        $region65: #{ibasic_block_first.1} parent=59 // pred_check
          %p451 = pneg %p101
        $region66: #{ibasic_block_first.1} parent=59 // pred_check_branch
          %453 = sbr.rel (%p451) target = $region68
        $region67: #{ibasic_block_first.1} parent=59 // pred_region
          %454 = dma.done %s447, 128
        $region68: #{ibasic_block_first.1} parent=59 // pred_fallthru
          _
        %s455 = sand.u32 %s30, 1
        %s456 = scalar_lea.sflag [#allocation6], %s455
        %s457 = sand.u32 %s124, 1
        %s458 = smul.addr %s457, 8
        %s459 = scalar_lea.vmem [#allocation7], %s458
        // Predicated region
        $region69: #{ibasic_block_first.1} parent=59 // pred_check
          %p460 = pneg %p137
        $region70: #{ibasic_block_first.1} parent=59 // pred_check_branch
          %462 = sbr.rel (%p460) target = $region72
        $region71: #{ibasic_block_first.1} parent=59 // pred_region
          %463 = dma.done %s456, 128
        $region72: #{ibasic_block_first.1} parent=59 // pred_fallthru
          _
        %s464 = sand.u32 %s52, 1
        %s465 = scalar_lea.sflag [#allocation3], %s464
        %s466 = sand.u32 %s52, 1
        %s467 = smul.addr %s466, 64
        %s468 = scalar_lea.vmem [#allocation2], %s467
        %p469 = pneg %p65
        %p470 = pneg %p62
        %s471 = sand.u32 %s30, 1
        %s472 = scalar_lea.sflag [#allocation6], %s471
        %s473 = sand.u32 %s88, 1
        %s474 = smul.addr %s473, 8
        %s475 = scalar_lea.vmem [#allocation5], %s474
        %p476 = pneg %p101
        %p477 = pneg %p98
        %s478 = sand.u32 %s30, 1
        %s479 = scalar_lea.sflag [#allocation6], %s478
        %s480 = sand.u32 %s124, 1
        %s481 = smul.addr %s480, 8
        %s482 = scalar_lea.vmem [#allocation7], %s481
        %p483 = pneg %p137
        %p484 = pneg %p134
        %p485 = pneg %p158
        %p486 = pneg %p155
        %p487 = pneg %p179
        %p488 = pneg %p176
        %p489 = pneg %p200
        %p490 = pneg %p197
        %p491 = pneg %p221
        %p492 = pneg %p218
        %p493 = pneg %p242
        %p494 = pneg %p239
        %p495 = pneg %p263
        %p496 = pneg %p260
        %p497 = pneg %p284
        %p498 = pneg %p281
        %p499 = pneg %p312
        %p500 = pneg %p309
        %s501 = sand.u32 %s299, 1
        %s502 = scalar_lea.sflag [#allocation4], %s501
        %s503 = sand.u32 %s299, 1
        %s504 = smul.addr %s503, 64
        %s505 = scalar_lea.vmem [#allocation8], %s504
        %s506 = smul.u32 8, %s35
        %s507 = smul.u32 %s35, 8
        %s508 = ssub.s32 %s507, 1
        %p509 = scmp.gt.s32.totalorder %s508, 0
        %s510 = scalar_select %p509, %s508, 0
        %s511 = sadd.s32 %s35, 1
        %s512 = smul.u32 %s511, 8
        %p513 = scmp.lt.s32.totalorder %s512, 15
        %s514 = scalar_select %p513, %s512, 15
        %s515 = smul.u32 8, %s35
        %v517 = vld [vmem:[%s450] sm:$0xf]
        %v518 = vld [vmem:[%s450 + $0x4] sm:$0xf]
        %v519 = vld [vmem:[%s441] sm:$0xf]
        %v520 = vld [vmem:[%s441 + $0x4] sm:$0xf]
        %v521 = vld [vmem:[%s441 + $0x8] sm:$0xf]
        %v522 = vld [vmem:[%s441 + $0xc] sm:$0xf]
        %v523 = vld [vmem:[%s441 + $0x10] sm:$0xf]
        %v524 = vld [vmem:[%s441 + $0x14] sm:$0xf]
        %v525 = vld [vmem:[%s441 + $0x18] sm:$0xf]
        %v526 = vld [vmem:[%s441 + $0x1c] sm:$0xf]
        %v527 = vld [vmem:[%s441 + $0x20] sm:$0xf]
        %v528 = vld [vmem:[%s441 + $0x24] sm:$0xf]
        %v529 = vld [vmem:[%s441 + $0x28] sm:$0xf]
        %v530 = vld [vmem:[%s441 + $0x2c] sm:$0xf]
        %v531 = vld [vmem:[%s441 + $0x30] sm:$0xf]
        %v532 = vld [vmem:[%s441 + $0x34] sm:$0xf]
        %v533 = vld [vmem:[%s441 + $0x38] sm:$0xf]
        %v534 = vld [vmem:[%s441 + $0x3c] sm:$0xf]
        %v535 = vld [vmem:[%s459] sm:$0xf]
        %v536 = vld [vmem:[%s459 + $0x4] sm:$0xf]
        %v537 = vld [vmem:[%s3] sm:$0xf]
        %v538 = vld [vmem:[%s3 + $0x4] sm:$0xf]
        %v539 = vld [vmem:[%s4] sm:$0x1]
        %v541 = vlaneseq
        %v542 = vshrl.u32 %v541, 7
        %v543 = vsub.s32 0, %v542
        %v544 = vrot.slane %v539, %v543
        %v566 = vunpack.c.l.b16 %v517
        %v567 = vunpack.c.l.b16 %v518
        %v568 = vunpack.c.l.b16 %v519
        %v569 = vunpack.c.l.b16 %v520
        %v570 = vunpack.c.l.b16 %v521
        %v571 = vunpack.c.l.b16 %v522
        %v572 = vunpack.c.l.b16 %v523
        %v573 = vunpack.c.l.b16 %v524
        %v574 = vunpack.c.l.b16 %v525
        %v575 = vunpack.c.l.b16 %v526
        %v576 = vunpack.c.l.b16 %v527
        %v577 = vunpack.c.l.b16 %v528
        %v578 = vunpack.c.l.b16 %v529
        %v579 = vunpack.c.l.b16 %v530
        %v580 = vunpack.c.l.b16 %v531
        %v581 = vunpack.c.l.b16 %v532
        %v582 = vunpack.c.l.b16 %v533
        %v583 = vunpack.c.l.b16 %v534
        %v584 = vunpack.c.l.b16 %v535
        %v585 = vunpack.c.l.b16 %v536
        %v586 = vpack.c.b16 %v567, %v566
        %v587 = vpack.c.b16 %v569, %v568
        %v588 = vpack.c.b16 %v571, %v570
        %v589 = vpack.c.b16 %v573, %v572
        %v590 = vpack.c.b16 %v575, %v574
        %v591 = vpack.c.b16 %v577, %v576
        %v592 = vpack.c.b16 %v579, %v578
        %v593 = vpack.c.b16 %v581, %v580
        %v594 = vpack.c.b16 %v583, %v582
        %v595 = vpack.c.b16 %v585, %v584
        %v598 = vunpack.c.l.b16 %v537
        %v599 = vunpack.c.l.b16 %v538
        %v600 = vpack.c.b16 %v599, %v598
        %vm602 = vcmask 130048
        %v604 = vsel %vm602, %v586, 0
        %v607 = vsel %vm602, %v587, 0
        %v610 = vsel %vm602, %v588, 0
        %v613 = vsel %vm602, %v589, 0
        %v616 = vsel %vm602, %v590, 0
        %v619 = vsel %vm602, %v591, 0
        %v622 = vsel %vm602, %v592, 0
        %v625 = vsel %vm602, %v593, 0
        %v628 = vsel %vm602, %v594, 0
        %v631 = vsel %vm602, %v595, 0
        %633 = vmatprep.subr.bf16.mxu0 0
        %634 = vmatpush1.bf16.msra.mxu0 %v600
        %635 = vmatprep.subr.bf16.mxu0 0
        %636 = vmatpush1.bf16.msra.mxu0 0
        %637 = vmatprep.subr.bf16.mxu0 0
        %638 = vmatpush1.bf16.msra.mxu0 0
        %639 = vmatprep.subr.bf16.mxu0 0
        %640 = vmatpush1.bf16.msra.mxu0 0
        %641 = vmatprep.subr.bf16.mxu0 0
        %642 = vmatpush1.bf16.msra.mxu0 0
        %643 = vmatprep.subr.bf16.mxu0 0
        %644 = vmatpush1.bf16.msra.mxu0 0
        %645 = vmatprep.subr.bf16.mxu0 0
        %646 = vmatpush1.bf16.msra.mxu0 0
        %647 = vmatprep.subr.bf16.mxu0 0
        %648 = vmatpush1.bf16.msra.mxu0 0
        %649 = vmatprep.subr.bf16.mxu0 0
        %650 = vmatpush1.bf16.msra.mxu0 0
        %651 = vmatprep.subr.bf16.mxu0 0
        %652 = vmatpush1.bf16.msra.mxu0 0
        %653 = vmatprep.subr.bf16.mxu0 0
        %654 = vmatpush1.bf16.msra.mxu0 0
        %655 = vmatprep.subr.bf16.mxu0 0
        %656 = vmatpush1.bf16.msra.mxu0 0
        %657 = vmatprep.subr.bf16.mxu0 0
        %658 = vmatpush1.bf16.msra.mxu0 0
        %659 = vmatprep.subr.bf16.mxu0 0
        %660 = vmatpush1.bf16.msra.mxu0 0
        %661 = vmatprep.subr.bf16.mxu0 0
        %662 = vmatpush1.bf16.msra.mxu0 0
        %663 = vmatprep.subr.bf16.mxu0 0
        %664 = vmatpush1.bf16.msra.mxu0 0
        %665 = vmatprep.mubr.bf16.mxu0 0
        %666 = vmatmul.mubr.bf16.gmra.mrb[0].mxu0 %v604
        %v667 = vpop.f32.mrb[0].mxu0
        %v668 = vadd.f32 %v544, %v667
        %v669 = vpop.f32.mrb[0].mxu0
        %v670 = vpop.f32.mrb[0].mxu0
        %v671 = vadd.f32 %v544, %v670
        %v672 = vpop.f32.mrb[0].mxu0
        %673 = vmatprep.mubr.bf16.mxu0 0
        %674 = vmatmul.mubr.bf16.gmra.mrb[0].mxu0 %v607
        %v675 = vpop.f32.mrb[0].mxu0
        %v676 = vadd.f32 %v544, %v675
        %v677 = vpop.f32.mrb[0].mxu0
        %v678 = vpop.f32.mrb[0].mxu0
        %v679 = vadd.f32 %v544, %v678
        %v680 = vpop.f32.mrb[0].mxu0
        %681 = vmatprep.mubr.bf16.mxu0 0
        %682 = vmatmul.mubr.bf16.gmra.mrb[0].mxu0 %v610
        %v683 = vpop.f32.mrb[0].mxu0
        %v684 = vadd.f32 %v544, %v683
        %v685 = vpop.f32.mrb[0].mxu0
        %v686 = vpop.f32.mrb[0].mxu0
        %v687 = vadd.f32 %v544, %v686
        %v688 = vpop.f32.mrb[0].mxu0
        %689 = vmatprep.mubr.bf16.mxu0 0
        %690 = vmatmul.mubr.bf16.gmra.mrb[0].mxu0 %v613
        %v691 = vpop.f32.mrb[0].mxu0
        %v692 = vadd.f32 %v544, %v691
        %v693 = vpop.f32.mrb[0].mxu0
        %v694 = vpop.f32.mrb[0].mxu0
        %v695 = vadd.f32 %v544, %v694
        %v696 = vpop.f32.mrb[0].mxu0
        %697 = vmatprep.mubr.bf16.mxu0 0
        %698 = vmatmul.mubr.bf16.gmra.mrb[0].mxu0 %v616
        %v699 = vpop.f32.mrb[0].mxu0
        %v700 = vadd.f32 %v544, %v699
        %v701 = vpop.f32.mrb[0].mxu0
        %v702 = vpop.f32.mrb[0].mxu0
        %v703 = vadd.f32 %v544, %v702
        %v704 = vpop.f32.mrb[0].mxu0
        %705 = vmatprep.mubr.bf16.mxu0 0
        %706 = vmatmul.mubr.bf16.gmra.mrb[0].mxu0 %v619
        %v707 = vpop.f32.mrb[0].mxu0
        %v708 = vadd.f32 %v544, %v707
        %v709 = vpop.f32.mrb[0].mxu0
        %v710 = vpop.f32.mrb[0].mxu0
        %v711 = vadd.f32 %v544, %v710
        %v712 = vpop.f32.mrb[0].mxu0
        %713 = vmatprep.mubr.bf16.mxu0 0
        %714 = vmatmul.mubr.bf16.gmra.mrb[0].mxu0 %v622
        %v715 = vpop.f32.mrb[0].mxu0
        %v716 = vadd.f32 %v544, %v715
        %v717 = vpop.f32.mrb[0].mxu0
        %v718 = vpop.f32.mrb[0].mxu0
        %v719 = vadd.f32 %v544, %v718
        %v720 = vpop.f32.mrb[0].mxu0
        %721 = vmatprep.mubr.bf16.mxu0 0
        %722 = vmatmul.mubr.bf16.gmra.mrb[0].mxu0 %v625
        %v723 = vpop.f32.mrb[0].mxu0
        %v724 = vadd.f32 %v544, %v723
        %v725 = vpop.f32.mrb[0].mxu0
        %v726 = vpop.f32.mrb[0].mxu0
        %v727 = vadd.f32 %v544, %v726
        %v728 = vpop.f32.mrb[0].mxu0
        %729 = vmatprep.mubr.bf16.mxu0 0
        %730 = vmatmul.mubr.bf16.gmra.mrb[0].mxu0 %v628
        %v731 = vpop.f32.mrb[0].mxu0
        %v732 = vadd.f32 %v544, %v731
        %v733 = vpop.f32.mrb[0].mxu0
        %v734 = vpop.f32.mrb[0].mxu0
        %v735 = vadd.f32 %v544, %v734
        %v736 = vpop.f32.mrb[0].mxu0
        %737 = vmatprep.mubr.bf16.mxu0 0
        %738 = vmatmul.mubr.bf16.gmra.mrb[0].mxu0 %v631
        %v739 = vpop.f32.mrb[0].mxu0
        %v740 = vadd.f32 %v544, %v739
        %v741 = vpop.f32.mrb[0].mxu0
        %v742 = vpop.f32.mrb[0].mxu0
        %v743 = vadd.f32 %v544, %v742
        %v744 = vpop.f32.mrb[0].mxu0
        %745 = vdwg.mxu0
        %v746 = vlaneseq
        %v747 = vshrl.u32 %v746, 7
        %v748 = vadd.s32 %v747, 8
        %p749 = scmp.gt.s32.totalorder %s35, 0
        %s750 = scalar_select %p749, 1, 0
        %v751 = vstv %s750
        %vm752 = vcmp.eq.s32.totalorder %v751, 1
        %p753 = scmp.lt.s32.totalorder %s35, 1
        %s754 = scalar_select %p753, 1, 0
        %v755 = vstv %s754
        %vm756 = vcmp.eq.s32.totalorder %v755, 1
        %vm757 = vcmp.lt.s32.totalorder %v747, 16
        %vm758 = vcmp.lt.s32.totalorder %v748, 16
        %v759 = vsel %vm752, 1, 0
        %v760 = vsel %vm756, 1, 0
        %vm761 = vcmp.eq.s32.totalorder %v759, 1
        %vm762 = vcmp.eq.s32.totalorder %v760, 1
        %v763 = vsel %vm757, 1, 0
        %v764 = vsel %vm758, 1, 0
        %vm765 = vcmp.eq.s32.totalorder %v763, 1
        %vm766 = vcmp.eq.s32.totalorder %v764, 1
        %vm767 = vmand %vm761, %vm765
        %vm768 = vmand %vm761, %vm766
        %vm769 = vmand 1, %vm765
        %vm770 = vmand 1, %vm766
        %vm771 = vmand %vm762, %vm765
        %vm772 = vmand %vm762, %vm766
        %v773 = vsel %vm767, 1, 0
        %v774 = vsel %vm768, 1, 0
        %v775 = vsel %vm769, 1, 0
        %v776 = vsel %vm770, 1, 0
        %v777 = vsel %vm771, 1, 0
        %v778 = vsel %vm772, 1, 0
        %v779 = vcvt.s32.f32 %v773
        %v780 = vcvt.s32.f32 %v774
        %v781 = vcvt.s32.f32 %v775
        %v782 = vcvt.s32.f32 %v776
        %v783 = vcvt.s32.f32 %v777
        %v784 = vcvt.s32.f32 %v778
        %v785 = vmul.f32 %v668, %v779
        %v786 = vmul.f32 %v671, %v780
        %v787 = vmul.f32 %v676, %v781
        %v788 = vmul.f32 %v679, %v782
        %v789 = vmul.f32 %v684, %v781
        %v790 = vmul.f32 %v687, %v782
        %v791 = vmul.f32 %v692, %v781
        %v792 = vmul.f32 %v695, %v782
        %v793 = vmul.f32 %v700, %v781
        %v794 = vmul.f32 %v703, %v782
        %v795 = vmul.f32 %v708, %v781
        %v796 = vmul.f32 %v711, %v782
        %v797 = vmul.f32 %v716, %v781
        %v798 = vmul.f32 %v719, %v782
        %v799 = vmul.f32 %v724, %v781
        %v800 = vmul.f32 %v727, %v782
        %v801 = vmul.f32 %v732, %v781
        %v802 = vmul.f32 %v735, %v782
        %v803 = vmul.f32 %v740, %v783
        %v804 = vmul.f32 %v743, %v784
        %v805 = vrot.slane %v785, 7
        %v806 = vrot.slane %v787, 7
        %v807 = vrot.slane %v789, 7
        %v808 = vrot.slane %v791, 7
        %v809 = vrot.slane %v793, 7
        %v810 = vrot.slane %v795, 7
        %v811 = vrot.slane %v797, 7
        %v812 = vrot.slane %v799, 7
        %v813 = vrot.slane %v801, 7
        %v814 = vrot.slane %v803, 7
        %v815 = vrot.slane %v786, 7
        %v816 = vrot.slane %v788, 7
        %v817 = vrot.slane %v790, 7
        %v818 = vrot.slane %v792, 7
        %v819 = vrot.slane %v794, 7
        %v820 = vrot.slane %v796, 7
        %v821 = vrot.slane %v798, 7
        %v822 = vrot.slane %v800, 7
        %v823 = vrot.slane %v802, 7
        %v824 = vrot.slane %v804, 7
        %vm825 = vcmp.lt.s32.totalorder %v747, 1
        %v826 = vsel %vm825, %v805, %v815
        %v827 = vsel %vm825, %v806, %v816
        %v828 = vsel %vm825, %v807, %v817
        %v829 = vsel %vm825, %v808, %v818
        %v830 = vsel %vm825, %v809, %v819
        %v831 = vsel %vm825, %v810, %v820
        %v832 = vsel %vm825, %v811, %v821
        %v833 = vsel %vm825, %v812, %v822
        %v834 = vsel %vm825, %v813, %v823
        %v835 = vsel %vm825, %v814, %v824
        %v836 = vsel %vm825, %v815, %v805
        %v837 = vsel %vm825, %v816, %v806
        %v838 = vsel %vm825, %v817, %v807
        %v839 = vsel %vm825, %v818, %v808
        %v840 = vsel %vm825, %v819, %v809
        %v841 = vsel %vm825, %v820, %v810
        %v842 = vsel %vm825, %v821, %v811
        %v843 = vsel %vm825, %v822, %v812
        %v844 = vsel %vm825, %v823, %v813
        %v845 = vsel %vm825, %v824, %v814
        %vm846 = vcmp.ne.s32.totalorder %v747, 0
        %vm847 = vcmp.ne.s32.totalorder %v748, 0
        %v848 = vsel %vm846, 1, 0
        %v849 = vsel %vm847, 1, 0
        %v850 = vcvt.s32.f32 %v848
        %v851 = vcvt.s32.f32 %v849
        %v852 = vmul.f32 %v836, %v850
        %v853 = vmul.f32 %v826, %v851
        %v854 = vmul.f32 %v837, %v850
        %v855 = vmul.f32 %v827, %v851
        %v856 = vmul.f32 %v838, %v850
        %v857 = vmul.f32 %v828, %v851
        %v858 = vmul.f32 %v839, %v850
        %v859 = vmul.f32 %v829, %v851
        %v860 = vmul.f32 %v840, %v850
        %v861 = vmul.f32 %v830, %v851
        %v862 = vmul.f32 %v841, %v850
        %v863 = vmul.f32 %v831, %v851
        %v864 = vmul.f32 %v842, %v850
        %v865 = vmul.f32 %v832, %v851
        %v866 = vmul.f32 %v843, %v850
        %v867 = vmul.f32 %v833, %v851
        %v868 = vmul.f32 %v844, %v850
        %v869 = vmul.f32 %v834, %v851
        %v870 = vmul.f32 %v845, %v850
        %v871 = vmul.f32 %v835, %v851
        %v872 = vrot.slane %v785, 1
        %v873 = vrot.slane %v787, 1
        %v874 = vrot.slane %v789, 1
        %v875 = vrot.slane %v791, 1
        %v876 = vrot.slane %v793, 1
        %v877 = vrot.slane %v795, 1
        %v878 = vrot.slane %v797, 1
        %v879 = vrot.slane %v799, 1
        %v880 = vrot.slane %v801, 1
        %v881 = vrot.slane %v803, 1
        %v882 = vrot.slane %v786, 1
        %v883 = vrot.slane %v788, 1
        %v884 = vrot.slane %v790, 1
        %v885 = vrot.slane %v792, 1
        %v886 = vrot.slane %v794, 1
        %v887 = vrot.slane %v796, 1
        %v888 = vrot.slane %v798, 1
        %v889 = vrot.slane %v800, 1
        %v890 = vrot.slane %v802, 1
        %v891 = vrot.slane %v804, 1
        %vm892 = vcmp.lt.s32.totalorder %v747, 7
        %v893 = vsel %vm892, %v872, %v882
        %v894 = vsel %vm892, %v873, %v883
        %v895 = vsel %vm892, %v874, %v884
        %v896 = vsel %vm892, %v875, %v885
        %v897 = vsel %vm892, %v876, %v886
        %v898 = vsel %vm892, %v877, %v887
        %v899 = vsel %vm892, %v878, %v888
        %v900 = vsel %vm892, %v879, %v889
        %v901 = vsel %vm892, %v880, %v890
        %v902 = vsel %vm892, %v881, %v891
        %v903 = vsel %vm892, %v882, %v872
        %v904 = vsel %vm892, %v883, %v873
        %v905 = vsel %vm892, %v884, %v874
        %v906 = vsel %vm892, %v885, %v875
        %v907 = vsel %vm892, %v886, %v876
        %v908 = vsel %vm892, %v887, %v877
        %v909 = vsel %vm892, %v888, %v878
        %v910 = vsel %vm892, %v889, %v879
        %v911 = vsel %vm892, %v890, %v880
        %v912 = vsel %vm892, %v891, %v881
        %vm913 = vcmp.ne.s32.totalorder %v747, 15
        %vm914 = vcmp.ne.s32.totalorder %v748, 15
        %v915 = vsel %vm913, 1, 0
        %v916 = vsel %vm914, 1, 0
        %v917 = vcvt.s32.f32 %v915
        %v918 = vcvt.s32.f32 %v916
        %v919 = vmul.f32 %v893, %v917
        %v920 = vmul.f32 %v903, %v918
        %v921 = vmul.f32 %v894, %v917
        %v922 = vmul.f32 %v904, %v918
        %v923 = vmul.f32 %v895, %v917
        %v924 = vmul.f32 %v905, %v918
        %v925 = vmul.f32 %v896, %v917
        %v926 = vmul.f32 %v906, %v918
        %v927 = vmul.f32 %v897, %v917
        %v928 = vmul.f32 %v907, %v918
        %v929 = vmul.f32 %v898, %v917
        %v930 = vmul.f32 %v908, %v918
        %v931 = vmul.f32 %v899, %v917
        %v932 = vmul.f32 %v909, %v918
        %v933 = vmul.f32 %v900, %v917
        %v934 = vmul.f32 %v910, %v918
        %v935 = vmul.f32 %v901, %v917
        %v936 = vmul.f32 %v911, %v918
        %v937 = vmul.f32 %v902, %v917
        %v938 = vmul.f32 %v912, %v918
        %v939 = vpack.c.bf16 %v853, %v852
        %v940 = vpack.c.bf16 %v855, %v854
        %v941 = vpack.c.bf16 %v857, %v856
        %v942 = vpack.c.bf16 %v859, %v858
        %v943 = vpack.c.bf16 %v861, %v860
        %v944 = vpack.c.bf16 %v863, %v862
        %v945 = vpack.c.bf16 %v865, %v864
        %v946 = vpack.c.bf16 %v867, %v866
        %v947 = vpack.c.bf16 %v869, %v868
        %v948 = vpack.c.bf16 %v871, %v870
        %v949 = vpack.c.bf16 %v786, %v785
        %v950 = vpack.c.bf16 %v788, %v787
        %v951 = vpack.c.bf16 %v790, %v789
        %v952 = vpack.c.bf16 %v792, %v791
        %v953 = vpack.c.bf16 %v794, %v793
        %v954 = vpack.c.bf16 %v796, %v795
        %v955 = vpack.c.bf16 %v798, %v797
        %v956 = vpack.c.bf16 %v800, %v799
        %v957 = vpack.c.bf16 %v802, %v801
        %v958 = vpack.c.bf16 %v804, %v803
        %v959 = vpack.c.bf16 %v920, %v919
        %v960 = vpack.c.bf16 %v922, %v921
        %v961 = vpack.c.bf16 %v924, %v923
        %v962 = vpack.c.bf16 %v926, %v925
        %v963 = vpack.c.bf16 %v928, %v927
        %v964 = vpack.c.bf16 %v930, %v929
        %v965 = vpack.c.bf16 %v932, %v931
        %v966 = vpack.c.bf16 %v934, %v933
        %v967 = vpack.c.bf16 %v936, %v935
        %v968 = vpack.c.bf16 %v938, %v937
        %v969 = vld [vmem:[%s5] sm:$0x3]
        %s970 = scalar_lea.vmem %s5, 2
        %v971 = vld [vmem:[%s970] sm:$0x3]
        %vm972 = vcmask 31744
        %v974 = vsel %vm972, %v949, 0
        %v977 = vsel %vm972, %v950, 0
        %v980 = vsel %vm972, %v951, 0
        %v983 = vsel %vm972, %v952, 0
        %v986 = vsel %vm972, %v953, 0
        %v989 = vsel %vm972, %v954, 0
        %v992 = vsel %vm972, %v955, 0
        %v995 = vsel %vm972, %v956, 0
        %vm997 = vcmask 1041408
        %v999 = vsel %vm997, %v971, 0
        %1001 = vmatprep.subr.bf16.mxu0 0
        %1002 = vmatpush1.bf16.msra.mxu0 %v999
        %1003 = vmatprep.subr.bf16.mxu0 0
        %1004 = vmatpush1.bf16.msra.mxu0 0
        %1005 = vmatprep.subr.bf16.mxu0 0
        %1006 = vmatpush1.bf16.msra.mxu0 0
        %1007 = vmatprep.subr.bf16.mxu0 0
        %1008 = vmatpush1.bf16.msra.mxu0 0
        %1009 = vmatprep.subr.bf16.mxu0 0
        %1010 = vmatpush1.bf16.msra.mxu0 0
        %1011 = vmatprep.subr.bf16.mxu0 0
        %1012 = vmatpush1.bf16.msra.mxu0 0
        %1013 = vmatprep.subr.bf16.mxu0 0
        %1014 = vmatpush1.bf16.msra.mxu0 0
        %1015 = vmatprep.subr.bf16.mxu0 0
        %1016 = vmatpush1.bf16.msra.mxu0 0
        %1017 = vmatprep.subr.bf16.mxu0 0
        %1018 = vmatpush1.bf16.msra.mxu0 0
        %1019 = vmatprep.subr.bf16.mxu0 0
        %1020 = vmatpush1.bf16.msra.mxu0 0
        %1021 = vmatprep.subr.bf16.mxu0 0
        %1022 = vmatpush1.bf16.msra.mxu0 0
        %1023 = vmatprep.subr.bf16.mxu0 0
        %1024 = vmatpush1.bf16.msra.mxu0 0
        %1025 = vmatprep.subr.bf16.mxu0 0
        %1026 = vmatpush1.bf16.msra.mxu0 0
        %1027 = vmatprep.subr.bf16.mxu0 0
        %1028 = vmatpush1.bf16.msra.mxu0 0
        %1029 = vmatprep.subr.bf16.mxu0 0
        %1030 = vmatpush1.bf16.msra.mxu0 0
        %1031 = vmatprep.subr.bf16.mxu0 0
        %1032 = vmatpush1.bf16.msra.mxu0 0
        %1033 = vmatprep.mubr.bf16.mxu0 0
        %1034 = vmatmul.mubr.bf16.gmra.mrb[0].mxu0 %v974
        %v1035 = vpop.f32.mrb[0].mxu0
        %v1036 = vadd.f32 0.0, %v1035
        %v1037 = vpop.f32.mrb[0].mxu0
        %v1038 = vpop.f32.mrb[0].mxu0
        %v1039 = vadd.f32 0.0, %v1038
        %v1040 = vpop.f32.mrb[0].mxu0
        %1041 = vmatprep.mubr.bf16.mxu0 0
        %1042 = vmatmul.mubr.bf16.gmra.mrb[0].mxu0 %v977
        %v1043 = vpop.f32.mrb[0].mxu0
        %v1044 = vadd.f32 0.0, %v1043
        %v1045 = vpop.f32.mrb[0].mxu0
        %v1046 = vpop.f32.mrb[0].mxu0
        %v1047 = vadd.f32 0.0, %v1046
        %v1048 = vpop.f32.mrb[0].mxu0
        %1049 = vmatprep.mubr.bf16.mxu0 0
        %1050 = vmatmul.mubr.bf16.gmra.mrb[0].mxu0 %v980
        %v1051 = vpop.f32.mrb[0].mxu0
        %v1052 = vadd.f32 0.0, %v1051
        %v1053 = vpop.f32.mrb[0].mxu0
        %v1054 = vpop.f32.mrb[0].mxu0
        %v1055 = vadd.f32 0.0, %v1054
        %v1056 = vpop.f32.mrb[0].mxu0
        %1057 = vmatprep.mubr.bf16.mxu0 0
        %1058 = vmatmul.mubr.bf16.gmra.mrb[0].mxu0 %v983
        %v1059 = vpop.f32.mrb[0].mxu0
        %v1060 = vadd.f32 0.0, %v1059
        %v1061 = vpop.f32.mrb[0].mxu0
        %v1062 = vpop.f32.mrb[0].mxu0
        %v1063 = vadd.f32 0.0, %v1062
        %v1064 = vpop.f32.mrb[0].mxu0
        %1065 = vmatprep.mubr.bf16.mxu0 0
        %1066 = vmatmul.mubr.bf16.gmra.mrb[0].mxu0 %v986
        %v1067 = vpop.f32.mrb[0].mxu0
        %v1068 = vadd.f32 0.0, %v1067
        %v1069 = vpop.f32.mrb[0].mxu0
        %v1070 = vpop.f32.mrb[0].mxu0
        %v1071 = vadd.f32 0.0, %v1070
        %v1072 = vpop.f32.mrb[0].mxu0
        %1073 = vmatprep.mubr.bf16.mxu0 0
        %1074 = vmatmul.mubr.bf16.gmra.mrb[0].mxu0 %v989
        %v1075 = vpop.f32.mrb[0].mxu0
        %v1076 = vadd.f32 0.0, %v1075
        %v1077 = vpop.f32.mrb[0].mxu0
        %v1078 = vpop.f32.mrb[0].mxu0
        %v1079 = vadd.f32 0.0, %v1078
        %v1080 = vpop.f32.mrb[0].mxu0
        %1081 = vmatprep.mubr.bf16.mxu0 0
        %1082 = vmatmul.mubr.bf16.gmra.mrb[0].mxu0 %v992
        %v1083 = vpop.f32.mrb[0].mxu0
        %v1084 = vadd.f32 0.0, %v1083
        %v1085 = vpop.f32.mrb[0].mxu0
        %v1086 = vpop.f32.mrb[0].mxu0
        %v1087 = vadd.f32 0.0, %v1086
        %v1088 = vpop.f32.mrb[0].mxu0
        %1089 = vmatprep.mubr.bf16.mxu0 0
        %1090 = vmatmul.mubr.bf16.gmra.mrb[0].mxu0 %v995
        %v1091 = vpop.f32.mrb[0].mxu0
        %v1092 = vadd.f32 0.0, %v1091
        %v1093 = vpop.f32.mrb[0].mxu0
        %v1094 = vpop.f32.mrb[0].mxu0
        %v1095 = vadd.f32 0.0, %v1094
        %v1096 = vpop.f32.mrb[0].mxu0
        %1097 = vdwg.mxu0
        %v1099 = vsel %vm972, %v939, 0
        %v1102 = vsel %vm972, %v940, 0
        %v1105 = vsel %vm972, %v941, 0
        %v1108 = vsel %vm972, %v942, 0
        %v1111 = vsel %vm972, %v943, 0
        %v1114 = vsel %vm972, %v944, 0
        %v1117 = vsel %vm972, %v945, 0
        %v1120 = vsel %vm972, %v946, 0
        %v1123 = vsel %vm997, %v969, 0
        %1125 = vmatprep.subr.bf16.mxu0 0
        %1126 = vmatpush1.bf16.msra.mxu0 %v1123
        %1127 = vmatprep.subr.bf16.mxu0 0
        %1128 = vmatpush1.bf16.msra.mxu0 0
        %1129 = vmatprep.subr.bf16.mxu0 0
        %1130 = vmatpush1.bf16.msra.mxu0 0
        %1131 = vmatprep.subr.bf16.mxu0 0
        %1132 = vmatpush1.bf16.msra.mxu0 0
        %1133 = vmatprep.subr.bf16.mxu0 0
        %1134 = vmatpush1.bf16.msra.mxu0 0
        %1135 = vmatprep.subr.bf16.mxu0 0
        %1136 = vmatpush1.bf16.msra.mxu0 0
        %1137 = vmatprep.subr.bf16.mxu0 0
        %1138 = vmatpush1.bf16.msra.mxu0 0
        %1139 = vmatprep.subr.bf16.mxu0 0
        %1140 = vmatpush1.bf16.msra.mxu0 0
        %1141 = vmatprep.subr.bf16.mxu0 0
        %1142 = vmatpush1.bf16.msra.mxu0 0
        %1143 = vmatprep.subr.bf16.mxu0 0
        %1144 = vmatpush1.bf16.msra.mxu0 0
        %1145 = vmatprep.subr.bf16.mxu0 0
        %1146 = vmatpush1.bf16.msra.mxu0 0
        %1147 = vmatprep.subr.bf16.mxu0 0
        %1148 = vmatpush1.bf16.msra.mxu0 0
        %1149 = vmatprep.subr.bf16.mxu0 0
        %1150 = vmatpush1.bf16.msra.mxu0 0
        %1151 = vmatprep.subr.bf16.mxu0 0
        %1152 = vmatpush1.bf16.msra.mxu0 0
        %1153 = vmatprep.subr.bf16.mxu0 0
        %1154 = vmatpush1.bf16.msra.mxu0 0
        %1155 = vmatprep.subr.bf16.mxu0 0
        %1156 = vmatpush1.bf16.msra.mxu0 0
        %1157 = vmatprep.mubr.bf16.mxu0 0
        %1158 = vmatmul.mubr.bf16.gmra.mrb[0].mxu0 %v1099
        %v1159 = vpop.f32.mrb[0].mxu0
        %v1160 = vadd.f32 %v1036, %v1159
        %v1161 = vpop.f32.mrb[0].mxu0
        %v1162 = vpop.f32.mrb[0].mxu0
        %v1163 = vadd.f32 %v1039, %v1162
        %v1164 = vpop.f32.mrb[0].mxu0
        %1165 = vmatprep.mubr.bf16.mxu0 0
        %1166 = vmatmul.mubr.bf16.gmra.mrb[0].mxu0 %v1102
        %v1167 = vpop.f32.mrb[0].mxu0
        %v1168 = vadd.f32 %v1044, %v1167
        %v1169 = vpop.f32.mrb[0].mxu0
        %v1170 = vpop.f32.mrb[0].mxu0
        %v1171 = vadd.f32 %v1047, %v1170
        %v1172 = vpop.f32.mrb[0].mxu0
        %1173 = vmatprep.mubr.bf16.mxu0 0
        %1174 = vmatmul.mubr.bf16.gmra.mrb[0].mxu0 %v1105
        %v1175 = vpop.f32.mrb[0].mxu0
        %v1176 = vadd.f32 %v1052, %v1175
        %v1177 = vpop.f32.mrb[0].mxu0
        %v1178 = vpop.f32.mrb[0].mxu0
        %v1179 = vadd.f32 %v1055, %v1178
        %v1180 = vpop.f32.mrb[0].mxu0
        %1181 = vmatprep.mubr.bf16.mxu0 0
        %1182 = vmatmul.mubr.bf16.gmra.mrb[0].mxu0 %v1108
        %v1183 = vpop.f32.mrb[0].mxu0
        %v1184 = vadd.f32 %v1060, %v1183
        %v1185 = vpop.f32.mrb[0].mxu0
        %v1186 = vpop.f32.mrb[0].mxu0
        %v1187 = vadd.f32 %v1063, %v1186
        %v1188 = vpop.f32.mrb[0].mxu0
        %1189 = vmatprep.mubr.bf16.mxu0 0
        %1190 = vmatmul.mubr.bf16.gmra.mrb[0].mxu0 %v1111
        %v1191 = vpop.f32.mrb[0].mxu0
        %v1192 = vadd.f32 %v1068, %v1191
        %v1193 = vpop.f32.mrb[0].mxu0
        %v1194 = vpop.f32.mrb[0].mxu0
        %v1195 = vadd.f32 %v1071, %v1194
        %v1196 = vpop.f32.mrb[0].mxu0
        %1197 = vmatprep.mubr.bf16.mxu0 0
        %1198 = vmatmul.mubr.bf16.gmra.mrb[0].mxu0 %v1114
        %v1199 = vpop.f32.mrb[0].mxu0
        %v1200 = vadd.f32 %v1076, %v1199
        %v1201 = vpop.f32.mrb[0].mxu0
        %v1202 = vpop.f32.mrb[0].mxu0
        %v1203 = vadd.f32 %v1079, %v1202
        %v1204 = vpop.f32.mrb[0].mxu0
        %1205 = vmatprep.mubr.bf16.mxu0 0
        %1206 = vmatmul.mubr.bf16.gmra.mrb[0].mxu0 %v1117
        %v1207 = vpop.f32.mrb[0].mxu0
        %v1208 = vadd.f32 %v1084, %v1207
        %v1209 = vpop.f32.mrb[0].mxu0
        %v1210 = vpop.f32.mrb[0].mxu0
        %v1211 = vadd.f32 %v1087, %v1210
        %v1212 = vpop.f32.mrb[0].mxu0
        %1213 = vmatprep.mubr.bf16.mxu0 0
        %1214 = vmatmul.mubr.bf16.gmra.mrb[0].mxu0 %v1120
        %v1215 = vpop.f32.mrb[0].mxu0
        %v1216 = vadd.f32 %v1092, %v1215
        %v1217 = vpop.f32.mrb[0].mxu0
        %v1218 = vpop.f32.mrb[0].mxu0
        %v1219 = vadd.f32 %v1095, %v1218
        %v1220 = vpop.f32.mrb[0].mxu0
        %1221 = vdwg.mxu0
        %s1222 = scalar_lea.vmem %s5, 4
        %v1223 = vld [vmem:[%s1222] sm:$0x3]
        %v1225 = vsel %vm972, %v959, 0
        %v1228 = vsel %vm972, %v960, 0
        %v1231 = vsel %vm972, %v961, 0
        %v1234 = vsel %vm972, %v962, 0
        %v1237 = vsel %vm972, %v963, 0
        %v1240 = vsel %vm972, %v964, 0
        %v1243 = vsel %vm972, %v965, 0
        %v1246 = vsel %vm972, %v966, 0
        %v1249 = vsel %vm997, %v1223, 0
        %1251 = vmatprep.subr.bf16.mxu0 0
        %1252 = vmatpush1.bf16.msra.mxu0 %v1249
        %1253 = vmatprep.subr.bf16.mxu0 0
        %1254 = vmatpush1.bf16.msra.mxu0 0
        %1255 = vmatprep.subr.bf16.mxu0 0
        %1256 = vmatpush1.bf16.msra.mxu0 0
        %1257 = vmatprep.subr.bf16.mxu0 0
        %1258 = vmatpush1.bf16.msra.mxu0 0
        %1259 = vmatprep.subr.bf16.mxu0 0
        %1260 = vmatpush1.bf16.msra.mxu0 0
        %1261 = vmatprep.subr.bf16.mxu0 0
        %1262 = vmatpush1.bf16.msra.mxu0 0
        %1263 = vmatprep.subr.bf16.mxu0 0
        %1264 = vmatpush1.bf16.msra.mxu0 0
        %1265 = vmatprep.subr.bf16.mxu0 0
        %1266 = vmatpush1.bf16.msra.mxu0 0
        %1267 = vmatprep.subr.bf16.mxu0 0
        %1268 = vmatpush1.bf16.msra.mxu0 0
        %1269 = vmatprep.subr.bf16.mxu0 0
        %1270 = vmatpush1.bf16.msra.mxu0 0
        %1271 = vmatprep.subr.bf16.mxu0 0
        %1272 = vmatpush1.bf16.msra.mxu0 0
        %1273 = vmatprep.subr.bf16.mxu0 0
        %1274 = vmatpush1.bf16.msra.mxu0 0
        %1275 = vmatprep.subr.bf16.mxu0 0
        %1276 = vmatpush1.bf16.msra.mxu0 0
        %1277 = vmatprep.subr.bf16.mxu0 0
        %1278 = vmatpush1.bf16.msra.mxu0 0
        %1279 = vmatprep.subr.bf16.mxu0 0
        %1280 = vmatpush1.bf16.msra.mxu0 0
        %1281 = vmatprep.subr.bf16.mxu0 0
        %1282 = vmatpush1.bf16.msra.mxu0 0
        %1283 = vmatprep.mubr.bf16.mxu0 0
        %1284 = vmatmul.mubr.bf16.gmra.mrb[0].mxu0 %v1225
        %v1285 = vpop.f32.mrb[0].mxu0
        %v1286 = vadd.f32 0.0, %v1285
        %v1287 = vpop.f32.mrb[0].mxu0
        %v1288 = vpop.f32.mrb[0].mxu0
        %v1289 = vadd.f32 0.0, %v1288
        %v1290 = vpop.f32.mrb[0].mxu0
        %1291 = vmatprep.mubr.bf16.mxu0 0
        %1292 = vmatmul.mubr.bf16.gmra.mrb[0].mxu0 %v1228
        %v1293 = vpop.f32.mrb[0].mxu0
        %v1294 = vadd.f32 0.0, %v1293
        %v1295 = vpop.f32.mrb[0].mxu0
        %v1296 = vpop.f32.mrb[0].mxu0
        %v1297 = vadd.f32 0.0, %v1296
        %v1298 = vpop.f32.mrb[0].mxu0
        %1299 = vmatprep.mubr.bf16.mxu0 0
        %1300 = vmatmul.mubr.bf16.gmra.mrb[0].mxu0 %v1231
        %v1301 = vpop.f32.mrb[0].mxu0
        %v1302 = vadd.f32 0.0, %v1301
        %v1303 = vpop.f32.mrb[0].mxu0
        %v1304 = vpop.f32.mrb[0].mxu0
        %v1305 = vadd.f32 0.0, %v1304
        %v1306 = vpop.f32.mrb[0].mxu0
        %1307 = vmatprep.mubr.bf16.mxu0 0
        %1308 = vmatmul.mubr.bf16.gmra.mrb[0].mxu0 %v1234
        %v1309 = vpop.f32.mrb[0].mxu0
        %v1310 = vadd.f32 0.0, %v1309
        %v1311 = vpop.f32.mrb[0].mxu0
        %v1312 = vpop.f32.mrb[0].mxu0
        %v1313 = vadd.f32 0.0, %v1312
        %v1314 = vpop.f32.mrb[0].mxu0
        %1315 = vmatprep.mubr.bf16.mxu0 0
        %1316 = vmatmul.mubr.bf16.gmra.mrb[0].mxu0 %v1237
        %v1317 = vpop.f32.mrb[0].mxu0
        %v1318 = vadd.f32 0.0, %v1317
        %v1319 = vpop.f32.mrb[0].mxu0
        %v1320 = vpop.f32.mrb[0].mxu0
        %v1321 = vadd.f32 0.0, %v1320
        %v1322 = vpop.f32.mrb[0].mxu0
        %1323 = vmatprep.mubr.bf16.mxu0 0
        %1324 = vmatmul.mubr.bf16.gmra.mrb[0].mxu0 %v1240
        %v1325 = vpop.f32.mrb[0].mxu0
        %v1326 = vadd.f32 0.0, %v1325
        %v1327 = vpop.f32.mrb[0].mxu0
        %v1328 = vpop.f32.mrb[0].mxu0
        %v1329 = vadd.f32 0.0, %v1328
        %v1330 = vpop.f32.mrb[0].mxu0
        %1331 = vmatprep.mubr.bf16.mxu0 0
        %1332 = vmatmul.mubr.bf16.gmra.mrb[0].mxu0 %v1243
        %v1333 = vpop.f32.mrb[0].mxu0
        %v1334 = vadd.f32 0.0, %v1333
        %v1335 = vpop.f32.mrb[0].mxu0
        %v1336 = vpop.f32.mrb[0].mxu0
        %v1337 = vadd.f32 0.0, %v1336
        %v1338 = vpop.f32.mrb[0].mxu0
        %1339 = vmatprep.mubr.bf16.mxu0 0
        %1340 = vmatmul.mubr.bf16.gmra.mrb[0].mxu0 %v1246
        %v1341 = vpop.f32.mrb[0].mxu0
        %v1342 = vadd.f32 0.0, %v1341
        %v1343 = vpop.f32.mrb[0].mxu0
        %v1344 = vpop.f32.mrb[0].mxu0
        %v1345 = vadd.f32 0.0, %v1344
        %v1346 = vpop.f32.mrb[0].mxu0
        %1347 = vdwg.mxu0
        %v1348 = vadd.f32 %v1160, %v1286
        %v1349 = vadd.f32 %v1163, %v1289
        %v1350 = vadd.f32 %v1168, %v1294
        %v1351 = vadd.f32 %v1171, %v1297
        %v1352 = vadd.f32 %v1176, %v1302
        %v1353 = vadd.f32 %v1179, %v1305
        %v1354 = vadd.f32 %v1184, %v1310
        %v1355 = vadd.f32 %v1187, %v1313
        %v1356 = vadd.f32 %v1192, %v1318
        %v1357 = vadd.f32 %v1195, %v1321
        %v1358 = vadd.f32 %v1200, %v1326
        %v1359 = vadd.f32 %v1203, %v1329
        %v1360 = vadd.f32 %v1208, %v1334
        %v1361 = vadd.f32 %v1211, %v1337
        %v1362 = vadd.f32 %v1216, %v1342
        %v1363 = vadd.f32 %v1219, %v1345
        %s1364 = scalar_lea.vmem %s5, 6
        %v1365 = vld [vmem:[%s1364] sm:$0x3]
        %v1367 = vsel %vm972, %v947, 0
        %v1370 = vsel %vm997, %v1365, 0
        %1372 = vmatprep.subr.bf16.mxu0 0
        %1373 = vmatpush1.bf16.msra.mxu0 %v1370
        %1374 = vmatprep.subr.bf16.mxu0 0
        %1375 = vmatpush1.bf16.msra.mxu0 0
        %1376 = vmatprep.subr.bf16.mxu0 0
        %1377 = vmatpush1.bf16.msra.mxu0 0
        %1378 = vmatprep.subr.bf16.mxu0 0
        %1379 = vmatpush1.bf16.msra.mxu0 0
        %1380 = vmatprep.subr.bf16.mxu0 0
        %1381 = vmatpush1.bf16.msra.mxu0 0
        %1382 = vmatprep.subr.bf16.mxu0 0
        %1383 = vmatpush1.bf16.msra.mxu0 0
        %1384 = vmatprep.subr.bf16.mxu0 0
        %1385 = vmatpush1.bf16.msra.mxu0 0
        %1386 = vmatprep.subr.bf16.mxu0 0
        %1387 = vmatpush1.bf16.msra.mxu0 0
        %1388 = vmatprep.subr.bf16.mxu0 0
        %1389 = vmatpush1.bf16.msra.mxu0 0
        %1390 = vmatprep.subr.bf16.mxu0 0
        %1391 = vmatpush1.bf16.msra.mxu0 0
        %1392 = vmatprep.subr.bf16.mxu0 0
        %1393 = vmatpush1.bf16.msra.mxu0 0
        %1394 = vmatprep.subr.bf16.mxu0 0
        %1395 = vmatpush1.bf16.msra.mxu0 0
        %1396 = vmatprep.subr.bf16.mxu0 0
        %1397 = vmatpush1.bf16.msra.mxu0 0
        %1398 = vmatprep.subr.bf16.mxu0 0
        %1399 = vmatpush1.bf16.msra.mxu0 0
        %1400 = vmatprep.subr.bf16.mxu0 0
        %1401 = vmatpush1.bf16.msra.mxu0 0
        %1402 = vmatprep.subr.bf16.mxu0 0
        %1403 = vmatpush1.bf16.msra.mxu0 0
        %1404 = vmatprep.mubr.bf16.mxu0 0
        %1405 = vmatmul.mubr.bf16.gmra.mrb[0].mxu0 %v1102
        %v1406 = vpop.f32.mrb[0].mxu0
        %v1407 = vadd.f32 0.0, %v1406
        %v1408 = vpop.f32.mrb[0].mxu0
        %v1409 = vpop.f32.mrb[0].mxu0
        %v1410 = vadd.f32 0.0, %v1409
        %v1411 = vpop.f32.mrb[0].mxu0
        %1412 = vmatprep.mubr.bf16.mxu0 0
        %1413 = vmatmul.mubr.bf16.gmra.mrb[0].mxu0 %v1105
        %v1414 = vpop.f32.mrb[0].mxu0
        %v1415 = vadd.f32 0.0, %v1414
        %v1416 = vpop.f32.mrb[0].mxu0
        %v1417 = vpop.f32.mrb[0].mxu0
        %v1418 = vadd.f32 0.0, %v1417
        %v1419 = vpop.f32.mrb[0].mxu0
        %1420 = vmatprep.mubr.bf16.mxu0 0
        %1421 = vmatmul.mubr.bf16.gmra.mrb[0].mxu0 %v1108
        %v1422 = vpop.f32.mrb[0].mxu0
        %v1423 = vadd.f32 0.0, %v1422
        %v1424 = vpop.f32.mrb[0].mxu0
        %v1425 = vpop.f32.mrb[0].mxu0
        %v1426 = vadd.f32 0.0, %v1425
        %v1427 = vpop.f32.mrb[0].mxu0
        %1428 = vmatprep.mubr.bf16.mxu0 0
        %1429 = vmatmul.mubr.bf16.gmra.mrb[0].mxu0 %v1111
        %v1430 = vpop.f32.mrb[0].mxu0
        %v1431 = vadd.f32 0.0, %v1430
        %v1432 = vpop.f32.mrb[0].mxu0
        %v1433 = vpop.f32.mrb[0].mxu0
        %v1434 = vadd.f32 0.0, %v1433
        %v1435 = vpop.f32.mrb[0].mxu0
        %1436 = vmatprep.mubr.bf16.mxu0 0
        %1437 = vmatmul.mubr.bf16.gmra.mrb[0].mxu0 %v1114
        %v1438 = vpop.f32.mrb[0].mxu0
        %v1439 = vadd.f32 0.0, %v1438
        %v1440 = vpop.f32.mrb[0].mxu0
        %v1441 = vpop.f32.mrb[0].mxu0
        %v1442 = vadd.f32 0.0, %v1441
        %v1443 = vpop.f32.mrb[0].mxu0
        %1444 = vmatprep.mubr.bf16.mxu0 0
        %1445 = vmatmul.mubr.bf16.gmra.mrb[0].mxu0 %v1117
        %v1446 = vpop.f32.mrb[0].mxu0
        %v1447 = vadd.f32 0.0, %v1446
        %v1448 = vpop.f32.mrb[0].mxu0
        %v1449 = vpop.f32.mrb[0].mxu0
        %v1450 = vadd.f32 0.0, %v1449
        %v1451 = vpop.f32.mrb[0].mxu0
        %1452 = vmatprep.mubr.bf16.mxu0 0
        %1453 = vmatmul.mubr.bf16.gmra.mrb[0].mxu0 %v1120
        %v1454 = vpop.f32.mrb[0].mxu0
        %v1455 = vadd.f32 0.0, %v1454
        %v1456 = vpop.f32.mrb[0].mxu0
        %v1457 = vpop.f32.mrb[0].mxu0
        %v1458 = vadd.f32 0.0, %v1457
        %v1459 = vpop.f32.mrb[0].mxu0
        %1460 = vmatprep.mubr.bf16.mxu0 0
        %1461 = vmatmul.mubr.bf16.gmra.mrb[0].mxu0 %v1367
        %v1462 = vpop.f32.mrb[0].mxu0
        %v1463 = vadd.f32 0.0, %v1462
        %v1464 = vpop.f32.mrb[0].mxu0
        %v1465 = vpop.f32.mrb[0].mxu0
        %v1466 = vadd.f32 0.0, %v1465
        %v1467 = vpop.f32.mrb[0].mxu0
        %1468 = vdwg.mxu0
        %v1469 = vadd.f32 %v1348, %v1407
        %v1470 = vadd.f32 %v1349, %v1410
        %v1471 = vadd.f32 %v1350, %v1415
        %v1472 = vadd.f32 %v1351, %v1418
        %v1473 = vadd.f32 %v1352, %v1423
        %v1474 = vadd.f32 %v1353, %v1426
        %v1475 = vadd.f32 %v1354, %v1431
        %v1476 = vadd.f32 %v1355, %v1434
        %v1477 = vadd.f32 %v1356, %v1439
        %v1478 = vadd.f32 %v1357, %v1442
        %v1479 = vadd.f32 %v1358, %v1447
        %v1480 = vadd.f32 %v1359, %v1450
        %v1481 = vadd.f32 %v1360, %v1455
        %v1482 = vadd.f32 %v1361, %v1458
        %v1483 = vadd.f32 %v1362, %v1463
        %v1484 = vadd.f32 %v1363, %v1466
        %s1485 = scalar_lea.vmem %s5, 8
        %v1486 = vld [vmem:[%s1485] sm:$0x3]
        %v1488 = vsel %vm972, %v957, 0
        %v1491 = vsel %vm997, %v1486, 0
        %1493 = vmatprep.subr.bf16.mxu0 0
        %1494 = vmatpush1.bf16.msra.mxu0 %v1491
        %1495 = vmatprep.subr.bf16.mxu0 0
        %1496 = vmatpush1.bf16.msra.mxu0 0
        %1497 = vmatprep.subr.bf16.mxu0 0
        %1498 = vmatpush1.bf16.msra.mxu0 0
        %1499 = vmatprep.subr.bf16.mxu0 0
        %1500 = vmatpush1.bf16.msra.mxu0 0
        %1501 = vmatprep.subr.bf16.mxu0 0
        %1502 = vmatpush1.bf16.msra.mxu0 0
        %1503 = vmatprep.subr.bf16.mxu0 0
        %1504 = vmatpush1.bf16.msra.mxu0 0
        %1505 = vmatprep.subr.bf16.mxu0 0
        %1506 = vmatpush1.bf16.msra.mxu0 0
        %1507 = vmatprep.subr.bf16.mxu0 0
        %1508 = vmatpush1.bf16.msra.mxu0 0
        %1509 = vmatprep.subr.bf16.mxu0 0
        %1510 = vmatpush1.bf16.msra.mxu0 0
        %1511 = vmatprep.subr.bf16.mxu0 0
        %1512 = vmatpush1.bf16.msra.mxu0 0
        %1513 = vmatprep.subr.bf16.mxu0 0
        %1514 = vmatpush1.bf16.msra.mxu0 0
        %1515 = vmatprep.subr.bf16.mxu0 0
        %1516 = vmatpush1.bf16.msra.mxu0 0
        %1517 = vmatprep.subr.bf16.mxu0 0
        %1518 = vmatpush1.bf16.msra.mxu0 0
        %1519 = vmatprep.subr.bf16.mxu0 0
        %1520 = vmatpush1.bf16.msra.mxu0 0
        %1521 = vmatprep.subr.bf16.mxu0 0
        %1522 = vmatpush1.bf16.msra.mxu0 0
        %1523 = vmatprep.subr.bf16.mxu0 0
        %1524 = vmatpush1.bf16.msra.mxu0 0
        %1525 = vmatprep.mubr.bf16.mxu0 0
        %1526 = vmatmul.mubr.bf16.gmra.mrb[0].mxu0 %v977
        %v1527 = vpop.f32.mrb[0].mxu0
        %v1528 = vadd.f32 0.0, %v1527
        %v1529 = vpop.f32.mrb[0].mxu0
        %v1530 = vpop.f32.mrb[0].mxu0
        %v1531 = vadd.f32 0.0, %v1530
        %v1532 = vpop.f32.mrb[0].mxu0
        %1533 = vmatprep.mubr.bf16.mxu0 0
        %1534 = vmatmul.mubr.bf16.gmra.mrb[0].mxu0 %v980
        %v1535 = vpop.f32.mrb[0].mxu0
        %v1536 = vadd.f32 0.0, %v1535
        %v1537 = vpop.f32.mrb[0].mxu0
        %v1538 = vpop.f32.mrb[0].mxu0
        %v1539 = vadd.f32 0.0, %v1538
        %v1540 = vpop.f32.mrb[0].mxu0
        %1541 = vmatprep.mubr.bf16.mxu0 0
        %1542 = vmatmul.mubr.bf16.gmra.mrb[0].mxu0 %v983
        %v1543 = vpop.f32.mrb[0].mxu0
        %v1544 = vadd.f32 0.0, %v1543
        %v1545 = vpop.f32.mrb[0].mxu0
        %v1546 = vpop.f32.mrb[0].mxu0
        %v1547 = vadd.f32 0.0, %v1546
        %v1548 = vpop.f32.mrb[0].mxu0
        %1549 = vmatprep.mubr.bf16.mxu0 0
        %1550 = vmatmul.mubr.bf16.gmra.mrb[0].mxu0 %v986
        %v1551 = vpop.f32.mrb[0].mxu0
        %v1552 = vadd.f32 0.0, %v1551
        %v1553 = vpop.f32.mrb[0].mxu0
        %v1554 = vpop.f32.mrb[0].mxu0
        %v1555 = vadd.f32 0.0, %v1554
        %v1556 = vpop.f32.mrb[0].mxu0
        %1557 = vmatprep.mubr.bf16.mxu0 0
        %1558 = vmatmul.mubr.bf16.gmra.mrb[0].mxu0 %v989
        %v1559 = vpop.f32.mrb[0].mxu0
        %v1560 = vadd.f32 0.0, %v1559
        %v1561 = vpop.f32.mrb[0].mxu0
        %v1562 = vpop.f32.mrb[0].mxu0
        %v1563 = vadd.f32 0.0, %v1562
        %v1564 = vpop.f32.mrb[0].mxu0
        %1565 = vmatprep.mubr.bf16.mxu0 0
        %1566 = vmatmul.mubr.bf16.gmra.mrb[0].mxu0 %v992
        %v1567 = vpop.f32.mrb[0].mxu0
        %v1568 = vadd.f32 0.0, %v1567
        %v1569 = vpop.f32.mrb[0].mxu0
        %v1570 = vpop.f32.mrb[0].mxu0
        %v1571 = vadd.f32 0.0, %v1570
        %v1572 = vpop.f32.mrb[0].mxu0
        %1573 = vmatprep.mubr.bf16.mxu0 0
        %1574 = vmatmul.mubr.bf16.gmra.mrb[0].mxu0 %v995
        %v1575 = vpop.f32.mrb[0].mxu0
        %v1576 = vadd.f32 0.0, %v1575
        %v1577 = vpop.f32.mrb[0].mxu0
        %v1578 = vpop.f32.mrb[0].mxu0
        %v1579 = vadd.f32 0.0, %v1578
        %v1580 = vpop.f32.mrb[0].mxu0
        %1581 = vmatprep.mubr.bf16.mxu0 0
        %1582 = vmatmul.mubr.bf16.gmra.mrb[0].mxu0 %v1488
        %v1583 = vpop.f32.mrb[0].mxu0
        %v1584 = vadd.f32 0.0, %v1583
        %v1585 = vpop.f32.mrb[0].mxu0
        %v1586 = vpop.f32.mrb[0].mxu0
        %v1587 = vadd.f32 0.0, %v1586
        %v1588 = vpop.f32.mrb[0].mxu0
        %1589 = vdwg.mxu0
        %v1590 = vadd.f32 %v1469, %v1528
        %v1591 = vadd.f32 %v1470, %v1531
        %v1592 = vadd.f32 %v1471, %v1536
        %v1593 = vadd.f32 %v1472, %v1539
        %v1594 = vadd.f32 %v1473, %v1544
        %v1595 = vadd.f32 %v1474, %v1547
        %v1596 = vadd.f32 %v1475, %v1552
        %v1597 = vadd.f32 %v1476, %v1555
        %v1598 = vadd.f32 %v1477, %v1560
        %v1599 = vadd.f32 %v1478, %v1563
        %v1600 = vadd.f32 %v1479, %v1568
        %v1601 = vadd.f32 %v1480, %v1571
        %v1602 = vadd.f32 %v1481, %v1576
        %v1603 = vadd.f32 %v1482, %v1579
        %v1604 = vadd.f32 %v1483, %v1584
        %v1605 = vadd.f32 %v1484, %v1587
        %s1606 = scalar_lea.vmem %s5, 10
        %v1607 = vld [vmem:[%s1606] sm:$0x3]
        %v1609 = vsel %vm972, %v967, 0
        %v1612 = vsel %vm997, %v1607, 0
        %1614 = vmatprep.subr.bf16.mxu0 0
        %1615 = vmatpush1.bf16.msra.mxu0 %v1612
        %1616 = vmatprep.subr.bf16.mxu0 0
        %1617 = vmatpush1.bf16.msra.mxu0 0
        %1618 = vmatprep.subr.bf16.mxu0 0
        %1619 = vmatpush1.bf16.msra.mxu0 0
        %1620 = vmatprep.subr.bf16.mxu0 0
        %1621 = vmatpush1.bf16.msra.mxu0 0
        %1622 = vmatprep.subr.bf16.mxu0 0
        %1623 = vmatpush1.bf16.msra.mxu0 0
        %1624 = vmatprep.subr.bf16.mxu0 0
        %1625 = vmatpush1.bf16.msra.mxu0 0
        %1626 = vmatprep.subr.bf16.mxu0 0
        %1627 = vmatpush1.bf16.msra.mxu0 0
        %1628 = vmatprep.subr.bf16.mxu0 0
        %1629 = vmatpush1.bf16.msra.mxu0 0
        %1630 = vmatprep.subr.bf16.mxu0 0
        %1631 = vmatpush1.bf16.msra.mxu0 0
        %1632 = vmatprep.subr.bf16.mxu0 0
        %1633 = vmatpush1.bf16.msra.mxu0 0
        %1634 = vmatprep.subr.bf16.mxu0 0
        %1635 = vmatpush1.bf16.msra.mxu0 0
        %1636 = vmatprep.subr.bf16.mxu0 0
        %1637 = vmatpush1.bf16.msra.mxu0 0
        %1638 = vmatprep.subr.bf16.mxu0 0
        %1639 = vmatpush1.bf16.msra.mxu0 0
        %1640 = vmatprep.subr.bf16.mxu0 0
        %1641 = vmatpush1.bf16.msra.mxu0 0
        %1642 = vmatprep.subr.bf16.mxu0 0
        %1643 = vmatpush1.bf16.msra.mxu0 0
        %1644 = vmatprep.subr.bf16.mxu0 0
        %1645 = vmatpush1.bf16.msra.mxu0 0
        %1646 = vmatprep.mubr.bf16.mxu0 0
        %1647 = vmatmul.mubr.bf16.gmra.mrb[0].mxu0 %v1228
        %v1648 = vpop.f32.mrb[0].mxu0
        %v1649 = vadd.f32 0.0, %v1648
        %v1650 = vpop.f32.mrb[0].mxu0
        %v1651 = vpop.f32.mrb[0].mxu0
        %v1652 = vadd.f32 0.0, %v1651
        %v1653 = vpop.f32.mrb[0].mxu0
        %1654 = vmatprep.mubr.bf16.mxu0 0
        %1655 = vmatmul.mubr.bf16.gmra.mrb[0].mxu0 %v1231
        %v1656 = vpop.f32.mrb[0].mxu0
        %v1657 = vadd.f32 0.0, %v1656
        %v1658 = vpop.f32.mrb[0].mxu0
        %v1659 = vpop.f32.mrb[0].mxu0
        %v1660 = vadd.f32 0.0, %v1659
        %v1661 = vpop.f32.mrb[0].mxu0
        %1662 = vmatprep.mubr.bf16.mxu0 0
        %1663 = vmatmul.mubr.bf16.gmra.mrb[0].mxu0 %v1234
        %v1664 = vpop.f32.mrb[0].mxu0
        %v1665 = vadd.f32 0.0, %v1664
        %v1666 = vpop.f32.mrb[0].mxu0
        %v1667 = vpop.f32.mrb[0].mxu0
        %v1668 = vadd.f32 0.0, %v1667
        %v1669 = vpop.f32.mrb[0].mxu0
        %1670 = vmatprep.mubr.bf16.mxu0 0
        %1671 = vmatmul.mubr.bf16.gmra.mrb[0].mxu0 %v1237
        %v1672 = vpop.f32.mrb[0].mxu0
        %v1673 = vadd.f32 0.0, %v1672
        %v1674 = vpop.f32.mrb[0].mxu0
        %v1675 = vpop.f32.mrb[0].mxu0
        %v1676 = vadd.f32 0.0, %v1675
        %v1677 = vpop.f32.mrb[0].mxu0
        %1678 = vmatprep.mubr.bf16.mxu0 0
        %1679 = vmatmul.mubr.bf16.gmra.mrb[0].mxu0 %v1240
        %v1680 = vpop.f32.mrb[0].mxu0
        %v1681 = vadd.f32 0.0, %v1680
        %v1682 = vpop.f32.mrb[0].mxu0
        %v1683 = vpop.f32.mrb[0].mxu0
        %v1684 = vadd.f32 0.0, %v1683
        %v1685 = vpop.f32.mrb[0].mxu0
        %1686 = vmatprep.mubr.bf16.mxu0 0
        %1687 = vmatmul.mubr.bf16.gmra.mrb[0].mxu0 %v1243
        %v1688 = vpop.f32.mrb[0].mxu0
        %v1689 = vadd.f32 0.0, %v1688
        %v1690 = vpop.f32.mrb[0].mxu0
        %v1691 = vpop.f32.mrb[0].mxu0
        %v1692 = vadd.f32 0.0, %v1691
        %v1693 = vpop.f32.mrb[0].mxu0
        %1694 = vmatprep.mubr.bf16.mxu0 0
        %1695 = vmatmul.mubr.bf16.gmra.mrb[0].mxu0 %v1246
        %v1696 = vpop.f32.mrb[0].mxu0
        %v1697 = vadd.f32 0.0, %v1696
        %v1698 = vpop.f32.mrb[0].mxu0
        %v1699 = vpop.f32.mrb[0].mxu0
        %v1700 = vadd.f32 0.0, %v1699
        %v1701 = vpop.f32.mrb[0].mxu0
        %1702 = vmatprep.mubr.bf16.mxu0 0
        %1703 = vmatmul.mubr.bf16.gmra.mrb[0].mxu0 %v1609
        %v1704 = vpop.f32.mrb[0].mxu0
        %v1705 = vadd.f32 0.0, %v1704
        %v1706 = vpop.f32.mrb[0].mxu0
        %v1707 = vpop.f32.mrb[0].mxu0
        %v1708 = vadd.f32 0.0, %v1707
        %v1709 = vpop.f32.mrb[0].mxu0
        %1710 = vdwg.mxu0
        %v1711 = vadd.f32 %v1590, %v1649
        %v1712 = vadd.f32 %v1591, %v1652
        %v1713 = vadd.f32 %v1592, %v1657
        %v1714 = vadd.f32 %v1593, %v1660
        %v1715 = vadd.f32 %v1594, %v1665
        %v1716 = vadd.f32 %v1595, %v1668
        %v1717 = vadd.f32 %v1596, %v1673
        %v1718 = vadd.f32 %v1597, %v1676
        %v1719 = vadd.f32 %v1598, %v1681
        %v1720 = vadd.f32 %v1599, %v1684
        %v1721 = vadd.f32 %v1600, %v1689
        %v1722 = vadd.f32 %v1601, %v1692
        %v1723 = vadd.f32 %v1602, %v1697
        %v1724 = vadd.f32 %v1603, %v1700
        %v1725 = vadd.f32 %v1604, %v1705
        %v1726 = vadd.f32 %v1605, %v1708
        %s1727 = scalar_lea.vmem %s5, 12
        %v1728 = vld [vmem:[%s1727] sm:$0x3]
        %v1730 = vsel %vm972, %v948, 0
        %v1733 = vsel %vm997, %v1728, 0
        %1735 = vmatprep.subr.bf16.mxu0 0
        %1736 = vmatpush1.bf16.msra.mxu0 %v1733
        %1737 = vmatprep.subr.bf16.mxu0 0
        %1738 = vmatpush1.bf16.msra.mxu0 0
        %1739 = vmatprep.subr.bf16.mxu0 0
        %1740 = vmatpush1.bf16.msra.mxu0 0
        %1741 = vmatprep.subr.bf16.mxu0 0
        %1742 = vmatpush1.bf16.msra.mxu0 0
        %1743 = vmatprep.subr.bf16.mxu0 0
        %1744 = vmatpush1.bf16.msra.mxu0 0
        %1745 = vmatprep.subr.bf16.mxu0 0
        %1746 = vmatpush1.bf16.msra.mxu0 0
        %1747 = vmatprep.subr.bf16.mxu0 0
        %1748 = vmatpush1.bf16.msra.mxu0 0
        %1749 = vmatprep.subr.bf16.mxu0 0
        %1750 = vmatpush1.bf16.msra.mxu0 0
        %1751 = vmatprep.subr.bf16.mxu0 0
        %1752 = vmatpush1.bf16.msra.mxu0 0
        %1753 = vmatprep.subr.bf16.mxu0 0
        %1754 = vmatpush1.bf16.msra.mxu0 0
        %1755 = vmatprep.subr.bf16.mxu0 0
        %1756 = vmatpush1.bf16.msra.mxu0 0
        %1757 = vmatprep.subr.bf16.mxu0 0
        %1758 = vmatpush1.bf16.msra.mxu0 0
        %1759 = vmatprep.subr.bf16.mxu0 0
        %1760 = vmatpush1.bf16.msra.mxu0 0
        %1761 = vmatprep.subr.bf16.mxu0 0
        %1762 = vmatpush1.bf16.msra.mxu0 0
        %1763 = vmatprep.subr.bf16.mxu0 0
        %1764 = vmatpush1.bf16.msra.mxu0 0
        %1765 = vmatprep.subr.bf16.mxu0 0
        %1766 = vmatpush1.bf16.msra.mxu0 0
        %1767 = vmatprep.mubr.bf16.mxu0 0
        %1768 = vmatmul.mubr.bf16.gmra.mrb[0].mxu0 %v1105
        %v1769 = vpop.f32.mrb[0].mxu0
        %v1770 = vadd.f32 0.0, %v1769
        %v1771 = vpop.f32.mrb[0].mxu0
        %v1772 = vpop.f32.mrb[0].mxu0
        %v1773 = vadd.f32 0.0, %v1772
        %v1774 = vpop.f32.mrb[0].mxu0
        %1775 = vmatprep.mubr.bf16.mxu0 0
        %1776 = vmatmul.mubr.bf16.gmra.mrb[0].mxu0 %v1108
        %v1777 = vpop.f32.mrb[0].mxu0
        %v1778 = vadd.f32 0.0, %v1777
        %v1779 = vpop.f32.mrb[0].mxu0
        %v1780 = vpop.f32.mrb[0].mxu0
        %v1781 = vadd.f32 0.0, %v1780
        %v1782 = vpop.f32.mrb[0].mxu0
        %1783 = vmatprep.mubr.bf16.mxu0 0
        %1784 = vmatmul.mubr.bf16.gmra.mrb[0].mxu0 %v1111
        %v1785 = vpop.f32.mrb[0].mxu0
        %v1786 = vadd.f32 0.0, %v1785
        %v1787 = vpop.f32.mrb[0].mxu0
        %v1788 = vpop.f32.mrb[0].mxu0
        %v1789 = vadd.f32 0.0, %v1788
        %v1790 = vpop.f32.mrb[0].mxu0
        %1791 = vmatprep.mubr.bf16.mxu0 0
        %1792 = vmatmul.mubr.bf16.gmra.mrb[0].mxu0 %v1114
        %v1793 = vpop.f32.mrb[0].mxu0
        %v1794 = vadd.f32 0.0, %v1793
        %v1795 = vpop.f32.mrb[0].mxu0
        %v1796 = vpop.f32.mrb[0].mxu0
        %v1797 = vadd.f32 0.0, %v1796
        %v1798 = vpop.f32.mrb[0].mxu0
        %1799 = vmatprep.mubr.bf16.mxu0 0
        %1800 = vmatmul.mubr.bf16.gmra.mrb[0].mxu0 %v1117
        %v1801 = vpop.f32.mrb[0].mxu0
        %v1802 = vadd.f32 0.0, %v1801
        %v1803 = vpop.f32.mrb[0].mxu0
        %v1804 = vpop.f32.mrb[0].mxu0
        %v1805 = vadd.f32 0.0, %v1804
        %v1806 = vpop.f32.mrb[0].mxu0
        %1807 = vmatprep.mubr.bf16.mxu0 0
        %1808 = vmatmul.mubr.bf16.gmra.mrb[0].mxu0 %v1120
        %v1809 = vpop.f32.mrb[0].mxu0
        %v1810 = vadd.f32 0.0, %v1809
        %v1811 = vpop.f32.mrb[0].mxu0
        %v1812 = vpop.f32.mrb[0].mxu0
        %v1813 = vadd.f32 0.0, %v1812
        %v1814 = vpop.f32.mrb[0].mxu0
        %1815 = vmatprep.mubr.bf16.mxu0 0
        %1816 = vmatmul.mubr.bf16.gmra.mrb[0].mxu0 %v1367
        %v1817 = vpop.f32.mrb[0].mxu0
        %v1818 = vadd.f32 0.0, %v1817
        %v1819 = vpop.f32.mrb[0].mxu0
        %v1820 = vpop.f32.mrb[0].mxu0
        %v1821 = vadd.f32 0.0, %v1820
        %v1822 = vpop.f32.mrb[0].mxu0
        %1823 = vmatprep.mubr.bf16.mxu0 0
        %1824 = vmatmul.mubr.bf16.gmra.mrb[0].mxu0 %v1730
        %v1825 = vpop.f32.mrb[0].mxu0
        %v1826 = vadd.f32 0.0, %v1825
        %v1827 = vpop.f32.mrb[0].mxu0
        %v1828 = vpop.f32.mrb[0].mxu0
        %v1829 = vadd.f32 0.0, %v1828
        %v1830 = vpop.f32.mrb[0].mxu0
        %1831 = vdwg.mxu0
        %v1832 = vadd.f32 %v1711, %v1770
        %v1833 = vadd.f32 %v1712, %v1773
        %v1834 = vadd.f32 %v1713, %v1778
        %v1835 = vadd.f32 %v1714, %v1781
        %v1836 = vadd.f32 %v1715, %v1786
        %v1837 = vadd.f32 %v1716, %v1789
        %v1838 = vadd.f32 %v1717, %v1794
        %v1839 = vadd.f32 %v1718, %v1797
        %v1840 = vadd.f32 %v1719, %v1802
        %v1841 = vadd.f32 %v1720, %v1805
        %v1842 = vadd.f32 %v1721, %v1810
        %v1843 = vadd.f32 %v1722, %v1813
        %v1844 = vadd.f32 %v1723, %v1818
        %v1845 = vadd.f32 %v1724, %v1821
        %v1846 = vadd.f32 %v1725, %v1826
        %v1847 = vadd.f32 %v1726, %v1829
        %s1848 = scalar_lea.vmem %s5, 14
        %v1849 = vld [vmem:[%s1848] sm:$0x3]
        %v1851 = vsel %vm972, %v958, 0
        %v1854 = vsel %vm997, %v1849, 0
        %1856 = vmatprep.subr.bf16.mxu0 0
        %1857 = vmatpush1.bf16.msra.mxu0 %v1854
        %1858 = vmatprep.subr.bf16.mxu0 0
        %1859 = vmatpush1.bf16.msra.mxu0 0
        %1860 = vmatprep.subr.bf16.mxu0 0
        %1861 = vmatpush1.bf16.msra.mxu0 0
        %1862 = vmatprep.subr.bf16.mxu0 0
        %1863 = vmatpush1.bf16.msra.mxu0 0
        %1864 = vmatprep.subr.bf16.mxu0 0
        %1865 = vmatpush1.bf16.msra.mxu0 0
        %1866 = vmatprep.subr.bf16.mxu0 0
        %1867 = vmatpush1.bf16.msra.mxu0 0
        %1868 = vmatprep.subr.bf16.mxu0 0
        %1869 = vmatpush1.bf16.msra.mxu0 0
        %1870 = vmatprep.subr.bf16.mxu0 0
        %1871 = vmatpush1.bf16.msra.mxu0 0
        %1872 = vmatprep.subr.bf16.mxu0 0
        %1873 = vmatpush1.bf16.msra.mxu0 0
        %1874 = vmatprep.subr.bf16.mxu0 0
        %1875 = vmatpush1.bf16.msra.mxu0 0
        %1876 = vmatprep.subr.bf16.mxu0 0
        %1877 = vmatpush1.bf16.msra.mxu0 0
        %1878 = vmatprep.subr.bf16.mxu0 0
        %1879 = vmatpush1.bf16.msra.mxu0 0
        %1880 = vmatprep.subr.bf16.mxu0 0
        %1881 = vmatpush1.bf16.msra.mxu0 0
        %1882 = vmatprep.subr.bf16.mxu0 0
        %1883 = vmatpush1.bf16.msra.mxu0 0
        %1884 = vmatprep.subr.bf16.mxu0 0
        %1885 = vmatpush1.bf16.msra.mxu0 0
        %1886 = vmatprep.subr.bf16.mxu0 0
        %1887 = vmatpush1.bf16.msra.mxu0 0
        %1888 = vmatprep.mubr.bf16.mxu0 0
        %1889 = vmatmul.mubr.bf16.gmra.mrb[0].mxu0 %v980
        %v1890 = vpop.f32.mrb[0].mxu0
        %v1891 = vadd.f32 0.0, %v1890
        %v1892 = vpop.f32.mrb[0].mxu0
        %v1893 = vpop.f32.mrb[0].mxu0
        %v1894 = vadd.f32 0.0, %v1893
        %v1895 = vpop.f32.mrb[0].mxu0
        %1896 = vmatprep.mubr.bf16.mxu0 0
        %1897 = vmatmul.mubr.bf16.gmra.mrb[0].mxu0 %v983
        %v1898 = vpop.f32.mrb[0].mxu0
        %v1899 = vadd.f32 0.0, %v1898
        %v1900 = vpop.f32.mrb[0].mxu0
        %v1901 = vpop.f32.mrb[0].mxu0
        %v1902 = vadd.f32 0.0, %v1901
        %v1903 = vpop.f32.mrb[0].mxu0
        %1904 = vmatprep.mubr.bf16.mxu0 0
        %1905 = vmatmul.mubr.bf16.gmra.mrb[0].mxu0 %v986
        %v1906 = vpop.f32.mrb[0].mxu0
        %v1907 = vadd.f32 0.0, %v1906
        %v1908 = vpop.f32.mrb[0].mxu0
        %v1909 = vpop.f32.mrb[0].mxu0
        %v1910 = vadd.f32 0.0, %v1909
        %v1911 = vpop.f32.mrb[0].mxu0
        %1912 = vmatprep.mubr.bf16.mxu0 0
        %1913 = vmatmul.mubr.bf16.gmra.mrb[0].mxu0 %v989
        %v1914 = vpop.f32.mrb[0].mxu0
        %v1915 = vadd.f32 0.0, %v1914
        %v1916 = vpop.f32.mrb[0].mxu0
        %v1917 = vpop.f32.mrb[0].mxu0
        %v1918 = vadd.f32 0.0, %v1917
        %v1919 = vpop.f32.mrb[0].mxu0
        %1920 = vmatprep.mubr.bf16.mxu0 0
        %1921 = vmatmul.mubr.bf16.gmra.mrb[0].mxu0 %v992
        %v1922 = vpop.f32.mrb[0].mxu0
        %v1923 = vadd.f32 0.0, %v1922
        %v1924 = vpop.f32.mrb[0].mxu0
        %v1925 = vpop.f32.mrb[0].mxu0
        %v1926 = vadd.f32 0.0, %v1925
        %v1927 = vpop.f32.mrb[0].mxu0
        %1928 = vmatprep.mubr.bf16.mxu0 0
        %1929 = vmatmul.mubr.bf16.gmra.mrb[0].mxu0 %v995
        %v1930 = vpop.f32.mrb[0].mxu0
        %v1931 = vadd.f32 0.0, %v1930
        %v1932 = vpop.f32.mrb[0].mxu0
        %v1933 = vpop.f32.mrb[0].mxu0
        %v1934 = vadd.f32 0.0, %v1933
        %v1935 = vpop.f32.mrb[0].mxu0
        %1936 = vmatprep.mubr.bf16.mxu0 0
        %1937 = vmatmul.mubr.bf16.gmra.mrb[0].mxu0 %v1488
        %v1938 = vpop.f32.mrb[0].mxu0
        %v1939 = vadd.f32 0.0, %v1938
        %v1940 = vpop.f32.mrb[0].mxu0
        %v1941 = vpop.f32.mrb[0].mxu0
        %v1942 = vadd.f32 0.0, %v1941
        %v1943 = vpop.f32.mrb[0].mxu0
        %1944 = vmatprep.mubr.bf16.mxu0 0
        %1945 = vmatmul.mubr.bf16.gmra.mrb[0].mxu0 %v1851
        %v1946 = vpop.f32.mrb[0].mxu0
        %v1947 = vadd.f32 0.0, %v1946
        %v1948 = vpop.f32.mrb[0].mxu0
        %v1949 = vpop.f32.mrb[0].mxu0
        %v1950 = vadd.f32 0.0, %v1949
        %v1951 = vpop.f32.mrb[0].mxu0
        %1952 = vdwg.mxu0
        %v1953 = vadd.f32 %v1832, %v1891
        %v1954 = vadd.f32 %v1833, %v1894
        %v1955 = vadd.f32 %v1834, %v1899
        %v1956 = vadd.f32 %v1835, %v1902
        %v1957 = vadd.f32 %v1836, %v1907
        %v1958 = vadd.f32 %v1837, %v1910
        %v1959 = vadd.f32 %v1838, %v1915
        %v1960 = vadd.f32 %v1839, %v1918
        %v1961 = vadd.f32 %v1840, %v1923
        %v1962 = vadd.f32 %v1841, %v1926
        %v1963 = vadd.f32 %v1842, %v1931
        %v1964 = vadd.f32 %v1843, %v1934
        %v1965 = vadd.f32 %v1844, %v1939
        %v1966 = vadd.f32 %v1845, %v1942
        %v1967 = vadd.f32 %v1846, %v1947
        %v1968 = vadd.f32 %v1847, %v1950
        %s1969 = scalar_lea.vmem %s5, 16
        %v1970 = vld [vmem:[%s1969] sm:$0x3]
        %v1972 = vsel %vm972, %v968, 0
        %v1975 = vsel %vm997, %v1970, 0
        %1977 = vmatprep.subr.bf16.mxu0 0
        %1978 = vmatpush1.bf16.msra.mxu0 %v1975
        %1979 = vmatprep.subr.bf16.mxu0 0
        %1980 = vmatpush1.bf16.msra.mxu0 0
        %1981 = vmatprep.subr.bf16.mxu0 0
        %1982 = vmatpush1.bf16.msra.mxu0 0
        %1983 = vmatprep.subr.bf16.mxu0 0
        %1984 = vmatpush1.bf16.msra.mxu0 0
        %1985 = vmatprep.subr.bf16.mxu0 0
        %1986 = vmatpush1.bf16.msra.mxu0 0
        %1987 = vmatprep.subr.bf16.mxu0 0
        %1988 = vmatpush1.bf16.msra.mxu0 0
        %1989 = vmatprep.subr.bf16.mxu0 0
        %1990 = vmatpush1.bf16.msra.mxu0 0
        %1991 = vmatprep.subr.bf16.mxu0 0
        %1992 = vmatpush1.bf16.msra.mxu0 0
        %1993 = vmatprep.subr.bf16.mxu0 0
        %1994 = vmatpush1.bf16.msra.mxu0 0
        %1995 = vmatprep.subr.bf16.mxu0 0
        %1996 = vmatpush1.bf16.msra.mxu0 0
        %1997 = vmatprep.subr.bf16.mxu0 0
        %1998 = vmatpush1.bf16.msra.mxu0 0
        %1999 = vmatprep.subr.bf16.mxu0 0
        %2000 = vmatpush1.bf16.msra.mxu0 0
        %2001 = vmatprep.subr.bf16.mxu0 0
        %2002 = vmatpush1.bf16.msra.mxu0 0
        %2003 = vmatprep.subr.bf16.mxu0 0
        %2004 = vmatpush1.bf16.msra.mxu0 0
        %2005 = vmatprep.subr.bf16.mxu0 0
        %2006 = vmatpush1.bf16.msra.mxu0 0
        %2007 = vmatprep.subr.bf16.mxu0 0
        %2008 = vmatpush1.bf16.msra.mxu0 0
        %2009 = vmatprep.mubr.bf16.mxu0 0
        %2010 = vmatmul.mubr.bf16.gmra.mrb[0].mxu0 %v1231
        %v2011 = vpop.f32.mrb[0].mxu0
        %v2012 = vadd.f32 0.0, %v2011
        %v2013 = vpop.f32.mrb[0].mxu0
        %v2014 = vpop.f32.mrb[0].mxu0
        %v2015 = vadd.f32 0.0, %v2014
        %v2016 = vpop.f32.mrb[0].mxu0
        %2017 = vmatprep.mubr.bf16.mxu0 0
        %2018 = vmatmul.mubr.bf16.gmra.mrb[0].mxu0 %v1234
        %v2019 = vpop.f32.mrb[0].mxu0
        %v2020 = vadd.f32 0.0, %v2019
        %v2021 = vpop.f32.mrb[0].mxu0
        %v2022 = vpop.f32.mrb[0].mxu0
        %v2023 = vadd.f32 0.0, %v2022
        %v2024 = vpop.f32.mrb[0].mxu0
        %2025 = vmatprep.mubr.bf16.mxu0 0
        %2026 = vmatmul.mubr.bf16.gmra.mrb[0].mxu0 %v1237
        %v2027 = vpop.f32.mrb[0].mxu0
        %v2028 = vadd.f32 0.0, %v2027
        %v2029 = vpop.f32.mrb[0].mxu0
        %v2030 = vpop.f32.mrb[0].mxu0
        %v2031 = vadd.f32 0.0, %v2030
        %v2032 = vpop.f32.mrb[0].mxu0
        %2033 = vmatprep.mubr.bf16.mxu0 0
        %2034 = vmatmul.mubr.bf16.gmra.mrb[0].mxu0 %v1240
        %v2035 = vpop.f32.mrb[0].mxu0
        %v2036 = vadd.f32 0.0, %v2035
        %v2037 = vpop.f32.mrb[0].mxu0
        %v2038 = vpop.f32.mrb[0].mxu0
        %v2039 = vadd.f32 0.0, %v2038
        %v2040 = vpop.f32.mrb[0].mxu0
        %2041 = vmatprep.mubr.bf16.mxu0 0
        %2042 = vmatmul.mubr.bf16.gmra.mrb[0].mxu0 %v1243
        %v2043 = vpop.f32.mrb[0].mxu0
        %v2044 = vadd.f32 0.0, %v2043
        %v2045 = vpop.f32.mrb[0].mxu0
        %v2046 = vpop.f32.mrb[0].mxu0
        %v2047 = vadd.f32 0.0, %v2046
        %v2048 = vpop.f32.mrb[0].mxu0
        %2049 = vmatprep.mubr.bf16.mxu0 0
        %2050 = vmatmul.mubr.bf16.gmra.mrb[0].mxu0 %v1246
        %v2051 = vpop.f32.mrb[0].mxu0
        %v2052 = vadd.f32 0.0, %v2051
        %v2053 = vpop.f32.mrb[0].mxu0
        %v2054 = vpop.f32.mrb[0].mxu0
        %v2055 = vadd.f32 0.0, %v2054
        %v2056 = vpop.f32.mrb[0].mxu0
        %2057 = vmatprep.mubr.bf16.mxu0 0
        %2058 = vmatmul.mubr.bf16.gmra.mrb[0].mxu0 %v1609
        %v2059 = vpop.f32.mrb[0].mxu0
        %v2060 = vadd.f32 0.0, %v2059
        %v2061 = vpop.f32.mrb[0].mxu0
        %v2062 = vpop.f32.mrb[0].mxu0
        %v2063 = vadd.f32 0.0, %v2062
        %v2064 = vpop.f32.mrb[0].mxu0
        %2065 = vmatprep.mubr.bf16.mxu0 0
        %2066 = vmatmul.mubr.bf16.gmra.mrb[0].mxu0 %v1972
        %v2067 = vpop.f32.mrb[0].mxu0
        %v2068 = vadd.f32 0.0, %v2067
        %v2069 = vpop.f32.mrb[0].mxu0
        %v2070 = vpop.f32.mrb[0].mxu0
        %v2071 = vadd.f32 0.0, %v2070
        %v2072 = vpop.f32.mrb[0].mxu0
        %2073 = vdwg.mxu0
        %v2074 = vadd.f32 %v1953, %v2012
        %v2075 = vadd.f32 %v1954, %v2015
        %v2076 = vadd.f32 %v1955, %v2020
        %v2077 = vadd.f32 %v1956, %v2023
        %v2078 = vadd.f32 %v1957, %v2028
        %v2079 = vadd.f32 %v1958, %v2031
        %v2080 = vadd.f32 %v1959, %v2036
        %v2081 = vadd.f32 %v1960, %v2039
        %v2082 = vadd.f32 %v1961, %v2044
        %v2083 = vadd.f32 %v1962, %v2047
        %v2084 = vadd.f32 %v1963, %v2052
        %v2085 = vadd.f32 %v1964, %v2055
        %v2086 = vadd.f32 %v1965, %v2060
        %v2087 = vadd.f32 %v1966, %v2063
        %v2088 = vadd.f32 %v1967, %v2068
        %v2089 = vadd.f32 %v1968, %v2071
        %v2090 = vld [vmem:[%s6] sm:$0x1]
        %v2092 = vlaneseq
        %v2093 = vshrl.u32 %v2092, 7
        %v2094 = vsub.s32 0, %v2093
        %v2095 = vrot.slane %v2090, %v2094
        %v2097 = vadd.f32 %v2074, %v2095
        %v2098 = vadd.f32 %v2075, %v2095
        %v2099 = vadd.f32 %v2076, %v2095
        %v2100 = vadd.f32 %v2077, %v2095
        %v2101 = vadd.f32 %v2078, %v2095
        %v2102 = vadd.f32 %v2079, %v2095
        %v2103 = vadd.f32 %v2080, %v2095
        %v2104 = vadd.f32 %v2081, %v2095
        %v2105 = vadd.f32 %v2082, %v2095
        %v2106 = vadd.f32 %v2083, %v2095
        %v2107 = vadd.f32 %v2084, %v2095
        %v2108 = vadd.f32 %v2085, %v2095
        %v2109 = vadd.f32 %v2086, %v2095
        %v2110 = vadd.f32 %v2087, %v2095
        %v2111 = vadd.f32 %v2088, %v2095
        %v2112 = vadd.f32 %v2089, %v2095
        %vm2113 = vcmp.gt.f32.partialorder %v2097, 0.0
        %vm2114 = vcmp.gt.f32.partialorder %v2098, 0.0
        %vm2115 = vcmp.gt.f32.partialorder %v2099, 0.0
        %vm2116 = vcmp.gt.f32.partialorder %v2100, 0.0
        %vm2117 = vcmp.gt.f32.partialorder %v2101, 0.0
        %vm2118 = vcmp.gt.f32.partialorder %v2102, 0.0
        %vm2119 = vcmp.gt.f32.partialorder %v2103, 0.0
        %vm2120 = vcmp.gt.f32.partialorder %v2104, 0.0
        %vm2121 = vcmp.gt.f32.partialorder %v2105, 0.0
        %vm2122 = vcmp.gt.f32.partialorder %v2106, 0.0
        %vm2123 = vcmp.gt.f32.partialorder %v2107, 0.0
        %vm2124 = vcmp.gt.f32.partialorder %v2108, 0.0
        %vm2125 = vcmp.gt.f32.partialorder %v2109, 0.0
        %vm2126 = vcmp.gt.f32.partialorder %v2110, 0.0
        %vm2127 = vcmp.gt.f32.partialorder %v2111, 0.0
        %vm2128 = vcmp.gt.f32.partialorder %v2112, 0.0
        %v2129 = vld [vmem:[%s7] sm:$0x1]
        %v2131 = vlaneseq
        %v2132 = vshrl.u32 %v2131, 7
        %v2133 = vsub.s32 0, %v2132
        %v2134 = vrot.slane %v2129, %v2133
        %v2136 = vmul.f32 %v2134, %v2097
        %v2137 = vmul.f32 %v2134, %v2098
        %v2138 = vmul.f32 %v2134, %v2099
        %v2139 = vmul.f32 %v2134, %v2100
        %v2140 = vmul.f32 %v2134, %v2101
        %v2141 = vmul.f32 %v2134, %v2102
        %v2142 = vmul.f32 %v2134, %v2103
        %v2143 = vmul.f32 %v2134, %v2104
        %v2144 = vmul.f32 %v2134, %v2105
        %v2145 = vmul.f32 %v2134, %v2106
        %v2146 = vmul.f32 %v2134, %v2107
        %v2147 = vmul.f32 %v2134, %v2108
        %v2148 = vmul.f32 %v2134, %v2109
        %v2149 = vmul.f32 %v2134, %v2110
        %v2150 = vmul.f32 %v2134, %v2111
        %v2151 = vmul.f32 %v2134, %v2112
        %v2152 = vsel %vm2113, %v2097, %v2136
        %v2153 = vsel %vm2114, %v2098, %v2137
        %v2154 = vsel %vm2115, %v2099, %v2138
        %v2155 = vsel %vm2116, %v2100, %v2139
        %v2156 = vsel %vm2117, %v2101, %v2140
        %v2157 = vsel %vm2118, %v2102, %v2141
        %v2158 = vsel %vm2119, %v2103, %v2142
        %v2159 = vsel %vm2120, %v2104, %v2143
        %v2160 = vsel %vm2121, %v2105, %v2144
        %v2161 = vsel %vm2122, %v2106, %v2145
        %v2162 = vsel %vm2123, %v2107, %v2146
        %v2163 = vsel %vm2124, %v2108, %v2147
        %v2164 = vsel %vm2125, %v2109, %v2148
        %v2165 = vsel %vm2126, %v2110, %v2149
        %v2166 = vsel %vm2127, %v2111, %v2150
        %v2167 = vsel %vm2128, %v2112, %v2151
        %v2168 = vpack.c.bf16 %v2153, %v2152
        %v2169 = vpack.c.bf16 %v2155, %v2154
        %v2170 = vpack.c.bf16 %v2157, %v2156
        %v2171 = vpack.c.bf16 %v2159, %v2158
        %v2172 = vpack.c.bf16 %v2161, %v2160
        %v2173 = vpack.c.bf16 %v2163, %v2162
        %v2174 = vpack.c.bf16 %v2165, %v2164
        %v2175 = vpack.c.bf16 %v2167, %v2166
        %v2176 = vld [vmem:[%s8] sm:$0x3]
        %v2177 = vld [vmem:[%s9] sm:$0x1]
        %v2179 = vlaneseq
        %v2180 = vshrl.u32 %v2179, 7
        %v2181 = vsub.s32 0, %v2180
        %v2182 = vrot.slane %v2177, %v2181
        %v2185 = vsel %vm972, %v2168, 0
        %v2188 = vsel %vm972, %v2169, 0
        %v2191 = vsel %vm972, %v2170, 0
        %v2194 = vsel %vm972, %v2171, 0
        %v2197 = vsel %vm972, %v2172, 0
        %v2200 = vsel %vm972, %v2173, 0
        %v2203 = vsel %vm972, %v2174, 0
        %v2206 = vsel %vm972, %v2175, 0
        %v2209 = vsel %vm997, %v2176, 0
        %2211 = vmatprep.subr.bf16.mxu0 0
        %2212 = vmatpush1.bf16.msra.mxu0 %v2209
        %2213 = vmatprep.subr.bf16.mxu0 0
        %2214 = vmatpush1.bf16.msra.mxu0 0
        %2215 = vmatprep.subr.bf16.mxu0 0
        %2216 = vmatpush1.bf16.msra.mxu0 0
        %2217 = vmatprep.subr.bf16.mxu0 0
        %2218 = vmatpush1.bf16.msra.mxu0 0
        %2219 = vmatprep.subr.bf16.mxu0 0
        %2220 = vmatpush1.bf16.msra.mxu0 0
        %2221 = vmatprep.subr.bf16.mxu0 0
        %2222 = vmatpush1.bf16.msra.mxu0 0
        %2223 = vmatprep.subr.bf16.mxu0 0
        %2224 = vmatpush1.bf16.msra.mxu0 0
        %2225 = vmatprep.subr.bf16.mxu0 0
        %2226 = vmatpush1.bf16.msra.mxu0 0
        %2227 = vmatprep.subr.bf16.mxu0 0
        %2228 = vmatpush1.bf16.msra.mxu0 0
        %2229 = vmatprep.subr.bf16.mxu0 0
        %2230 = vmatpush1.bf16.msra.mxu0 0
        %2231 = vmatprep.subr.bf16.mxu0 0
        %2232 = vmatpush1.bf16.msra.mxu0 0
        %2233 = vmatprep.subr.bf16.mxu0 0
        %2234 = vmatpush1.bf16.msra.mxu0 0
        %2235 = vmatprep.subr.bf16.mxu0 0
        %2236 = vmatpush1.bf16.msra.mxu0 0
        %2237 = vmatprep.subr.bf16.mxu0 0
        %2238 = vmatpush1.bf16.msra.mxu0 0
        %2239 = vmatprep.subr.bf16.mxu0 0
        %2240 = vmatpush1.bf16.msra.mxu0 0
        %2241 = vmatprep.subr.bf16.mxu0 0
        %2242 = vmatpush1.bf16.msra.mxu0 0
        %2243 = vmatprep.mubr.bf16.mxu0 0
        %2244 = vmatmul.mubr.bf16.gmra.mrb[0].mxu0 %v2185
        %v2245 = vpop.f32.mrb[0].mxu0
        %v2246 = vadd.f32 %v2182, %v2245
        %v2247 = vpop.f32.mrb[0].mxu0
        %v2248 = vpop.f32.mrb[0].mxu0
        %v2249 = vadd.f32 %v2182, %v2248
        %v2250 = vpop.f32.mrb[0].mxu0
        %2251 = vmatprep.mubr.bf16.mxu0 0
        %2252 = vmatmul.mubr.bf16.gmra.mrb[0].mxu0 %v2188
        %v2253 = vpop.f32.mrb[0].mxu0
        %v2254 = vadd.f32 %v2182, %v2253
        %v2255 = vpop.f32.mrb[0].mxu0
        %v2256 = vpop.f32.mrb[0].mxu0
        %v2257 = vadd.f32 %v2182, %v2256
        %v2258 = vpop.f32.mrb[0].mxu0
        %2259 = vmatprep.mubr.bf16.mxu0 0
        %2260 = vmatmul.mubr.bf16.gmra.mrb[0].mxu0 %v2191
        %v2261 = vpop.f32.mrb[0].mxu0
        %v2262 = vadd.f32 %v2182, %v2261
        %v2263 = vpop.f32.mrb[0].mxu0
        %v2264 = vpop.f32.mrb[0].mxu0
        %v2265 = vadd.f32 %v2182, %v2264
        %v2266 = vpop.f32.mrb[0].mxu0
        %2267 = vmatprep.mubr.bf16.mxu0 0
        %2268 = vmatmul.mubr.bf16.gmra.mrb[0].mxu0 %v2194
        %v2269 = vpop.f32.mrb[0].mxu0
        %v2270 = vadd.f32 %v2182, %v2269
        %v2271 = vpop.f32.mrb[0].mxu0
        %v2272 = vpop.f32.mrb[0].mxu0
        %v2273 = vadd.f32 %v2182, %v2272
        %v2274 = vpop.f32.mrb[0].mxu0
        %2275 = vmatprep.mubr.bf16.mxu0 0
        %2276 = vmatmul.mubr.bf16.gmra.mrb[0].mxu0 %v2197
        %v2277 = vpop.f32.mrb[0].mxu0
        %v2278 = vadd.f32 %v2182, %v2277
        %v2279 = vpop.f32.mrb[0].mxu0
        %v2280 = vpop.f32.mrb[0].mxu0
        %v2281 = vadd.f32 %v2182, %v2280
        %v2282 = vpop.f32.mrb[0].mxu0
        %2283 = vmatprep.mubr.bf16.mxu0 0
        %2284 = vmatmul.mubr.bf16.gmra.mrb[0].mxu0 %v2200
        %v2285 = vpop.f32.mrb[0].mxu0
        %v2286 = vadd.f32 %v2182, %v2285
        %v2287 = vpop.f32.mrb[0].mxu0
        %v2288 = vpop.f32.mrb[0].mxu0
        %v2289 = vadd.f32 %v2182, %v2288
        %v2290 = vpop.f32.mrb[0].mxu0
        %2291 = vmatprep.mubr.bf16.mxu0 0
        %2292 = vmatmul.mubr.bf16.gmra.mrb[0].mxu0 %v2203
        %v2293 = vpop.f32.mrb[0].mxu0
        %v2294 = vadd.f32 %v2182, %v2293
        %v2295 = vpop.f32.mrb[0].mxu0
        %v2296 = vpop.f32.mrb[0].mxu0
        %v2297 = vadd.f32 %v2182, %v2296
        %v2298 = vpop.f32.mrb[0].mxu0
        %2299 = vmatprep.mubr.bf16.mxu0 0
        %2300 = vmatmul.mubr.bf16.gmra.mrb[0].mxu0 %v2206
        %v2301 = vpop.f32.mrb[0].mxu0
        %v2302 = vadd.f32 %v2182, %v2301
        %v2303 = vpop.f32.mrb[0].mxu0
        %v2304 = vpop.f32.mrb[0].mxu0
        %v2305 = vadd.f32 %v2182, %v2304
        %v2306 = vpop.f32.mrb[0].mxu0
        %2307 = vdwg.mxu0
        %v2308 = vunpack.c.l.bf16 %v519
        %v2309 = vunpack.c.l.bf16 %v520
        %v2310 = vunpack.c.l.bf16 %v521
        %v2311 = vunpack.c.l.bf16 %v522
        %v2312 = vunpack.c.l.bf16 %v523
        %v2313 = vunpack.c.l.bf16 %v524
        %v2314 = vunpack.c.l.bf16 %v525
        %v2315 = vunpack.c.l.bf16 %v526
        %v2316 = vunpack.c.l.bf16 %v527
        %v2317 = vunpack.c.l.bf16 %v528
        %v2318 = vunpack.c.l.bf16 %v529
        %v2319 = vunpack.c.l.bf16 %v530
        %v2320 = vunpack.c.l.bf16 %v531
        %v2321 = vunpack.c.l.bf16 %v532
        %v2322 = vunpack.c.l.bf16 %v533
        %v2323 = vunpack.c.l.bf16 %v534
        %v2324 = vadd.f32 %v2246, %v2308
        %v2325 = vadd.f32 %v2249, %v2309
        %v2326 = vadd.f32 %v2254, %v2310
        %v2327 = vadd.f32 %v2257, %v2311
        %v2328 = vadd.f32 %v2262, %v2312
        %v2329 = vadd.f32 %v2265, %v2313
        %v2330 = vadd.f32 %v2270, %v2314
        %v2331 = vadd.f32 %v2273, %v2315
        %v2332 = vadd.f32 %v2278, %v2316
        %v2333 = vadd.f32 %v2281, %v2317
        %v2334 = vadd.f32 %v2286, %v2318
        %v2335 = vadd.f32 %v2289, %v2319
        %v2336 = vadd.f32 %v2294, %v2320
        %v2337 = vadd.f32 %v2297, %v2321
        %v2338 = vadd.f32 %v2302, %v2322
        %v2339 = vadd.f32 %v2305, %v2323
        %v2340 = vpack.c.bf16 %v2325, %v2324
        %v2341 = vpack.c.bf16 %v2327, %v2326
        %v2342 = vpack.c.bf16 %v2329, %v2328
        %v2343 = vpack.c.bf16 %v2331, %v2330
        %v2344 = vpack.c.bf16 %v2333, %v2332
        %v2345 = vpack.c.bf16 %v2335, %v2334
        %v2346 = vpack.c.bf16 %v2337, %v2336
        %v2347 = vpack.c.bf16 %v2339, %v2338
        %v2356 = vunpack.c.l.b16 %v2340
        %v2357 = vunpack.c.h.b16 %v2340
        %v2358 = vunpack.c.l.b16 %v2341
        %v2359 = vunpack.c.h.b16 %v2341
        %v2360 = vunpack.c.l.b16 %v2342
        %v2361 = vunpack.c.h.b16 %v2342
        %v2362 = vunpack.c.l.b16 %v2343
        %v2363 = vunpack.c.h.b16 %v2343
        %v2364 = vunpack.c.l.b16 %v2344
        %v2365 = vunpack.c.h.b16 %v2344
        %v2366 = vunpack.c.l.b16 %v2345
        %v2367 = vunpack.c.h.b16 %v2345
        %v2368 = vunpack.c.l.b16 %v2346
        %v2369 = vunpack.c.h.b16 %v2346
        %v2370 = vunpack.c.l.b16 %v2347
        %v2371 = vunpack.c.h.b16 %v2347
        %v2372 = vpack.c.b16 %v2356, %v2356
        %v2373 = vpack.c.b16 %v2357, %v2357
        %v2374 = vpack.c.b16 %v2358, %v2358
        %v2375 = vpack.c.b16 %v2359, %v2359
        %v2376 = vpack.c.b16 %v2360, %v2360
        %v2377 = vpack.c.b16 %v2361, %v2361
        %v2378 = vpack.c.b16 %v2362, %v2362
        %v2379 = vpack.c.b16 %v2363, %v2363
        %v2380 = vpack.c.b16 %v2364, %v2364
        %v2381 = vpack.c.b16 %v2365, %v2365
        %v2382 = vpack.c.b16 %v2366, %v2366
        %v2383 = vpack.c.b16 %v2367, %v2367
        %v2384 = vpack.c.b16 %v2368, %v2368
        %v2385 = vpack.c.b16 %v2369, %v2369
        %v2386 = vpack.c.b16 %v2370, %v2370
        %v2387 = vpack.c.b16 %v2371, %v2371
        %vm2404 = vcmask 125952
        %2405 = vst.msk [vmem:[%s505] sm:$0xf] %vm2404, %v2372
        %2406 = vst.msk [vmem:[%s505 + $0x4] sm:$0xf] %vm2404, %v2373
        %2407 = vst.msk [vmem:[%s505 + $0x8] sm:$0xf] %vm2404, %v2374
        %2408 = vst.msk [vmem:[%s505 + $0xc] sm:$0xf] %vm2404, %v2375
        %2409 = vst.msk [vmem:[%s505 + $0x10] sm:$0xf] %vm2404, %v2376
        %2410 = vst.msk [vmem:[%s505 + $0x14] sm:$0xf] %vm2404, %v2377
        %2411 = vst.msk [vmem:[%s505 + $0x18] sm:$0xf] %vm2404, %v2378
        %2412 = vst.msk [vmem:[%s505 + $0x1c] sm:$0xf] %vm2404, %v2379
        %2413 = vst.msk [vmem:[%s505 + $0x20] sm:$0xf] %vm2404, %v2380
        %2414 = vst.msk [vmem:[%s505 + $0x24] sm:$0xf] %vm2404, %v2381
        %2415 = vst.msk [vmem:[%s505 + $0x28] sm:$0xf] %vm2404, %v2382
        %2416 = vst.msk [vmem:[%s505 + $0x2c] sm:$0xf] %vm2404, %v2383
        %2417 = vst.msk [vmem:[%s505 + $0x30] sm:$0xf] %vm2404, %v2384
        %2418 = vst.msk [vmem:[%s505 + $0x34] sm:$0xf] %vm2404, %v2385
        %2419 = vst.msk [vmem:[%s505 + $0x38] sm:$0xf] %vm2404, %v2386
        %2420 = vst.msk [vmem:[%s505 + $0x3c] sm:$0xf] %vm2404, %v2387
        %s2421 = sand.u32 %s299, 1
        %s2422 = scalar_lea.sflag [#allocation4], %s2421
        %s2423 = sand.u32 %s299, 1
        %s2424 = smul.addr %s2423, 64
        %s2425 = scalar_lea.vmem [#allocation8], %s2424
        // Predicated region
        $region73: #{ibasic_block_first.1} parent=59 // pred_check
          %p2426 = pneg %p309
        $region74: #{ibasic_block_first.1} parent=59 // pred_check_branch
          %2428 = sbr.rel (%p2426) target = $region76
        $region75: #{ibasic_block_first.1} parent=59 // pred_region
          %s2429 = smul.u32 8, %s35
          %s2431 = ssub.s32 1024, 1024
          %2432 = vsyncadd %s2422, %s2431
          %s2433 = smul.addr %s2429, 2
          %s2434 = smul.addr %s34, 32
          %s2435 = sadd.s32 %s2433, %s2434
          %s2436 = smul.addr %s2435, 64
          %s2437 = scalar_lea.hbm %s10, %s2436
          %s2438 = sshll.u32 %s2425, 4
          %s2439 = int_to_ptr.vmem [resolvable:$true] %s2438
          %2444 = dma.vmem_to_hbm [thread:$0]  %s2439, 1024, %s2437, %s2422, 64, 64, 4
        $region76: #{ibasic_block_first.1} parent=59 // pred_fallthru
          _
      $region60: #{ibasic_block_first.1} parent=5 // pred_fallthru
        _
      %p2445 = scmp.le.s32.totalorder 2, %s25
      // Predicated region
      $region77: #{ibasic_block_first.1} parent=5 // pred_check
        %p2446 = pneg %p2445
      $region78: #{ibasic_block_first.1} parent=5 // pred_check_branch
        %2448 = sbr.rel (%p2446) target = $region80
      $region79: #{ibasic_block_first.1} parent=5 // pred_region
        %s2449 = ssub.s32 %s25, 2
        // Predicated region
        $region81: #{ibasic_block_first.1} parent=79 // pred_check
          %p2450 = pneg %p315
        $region82: #{ibasic_block_first.1} parent=79 // pred_check_branch
          %2452 = sbr.rel (%p2450) target = $region84
        $region83: #{ibasic_block_first.1} parent=79 // pred_region
          %s2453 = sand.u32 %s300, 1
          %s2454 = scalar_lea.sflag [#allocation4], %s2453
          %s2455 = sand.u32 %s300, 1
          %s2456 = smul.addr %s2455, 64
          %s2457 = scalar_lea.vmem [#allocation8], %s2456
          %2458 = dma.done %s2454, 1024
        $region84: #{ibasic_block_first.1} parent=79 // pred_fallthru
          _
      $region80: #{ibasic_block_first.1} parent=5 // pred_fallthru
        _
    $region6: #{ibasic_block_first.1} parent=1 // loop_footer
      %s29 = sadd.s32 1, %s25
    $region7: #{ibasic_block_first.1} parent=1 // loop_footer_branch
      %24 = sbr.rel target = $region3
    $region8: #{ibasic_block_first.1} parent=1 // loop_exit
      _
    %2459 = vsyncpa [#allocation3], 1
    %s2460 = scalar_lea.sflag [#allocation3], 1
    %2461 = vsyncpa %s2460, 1
    %2462 = vsyncpa [#allocation6], 1
    %s2463 = scalar_lea.sflag [#allocation6], 1
    %2464 = vsyncpa %s2463, 1
    %2465 = vsyncpa [#allocation4], 1
    %s2466 = scalar_lea.sflag [#allocation4], 1
    %2467 = vsyncpa %s2466, 1

</llo_original>
